<compile_context>
chip_gen: v5e
topology: v5e:2x2
jax: 0.10.0
libtpu: 0.0.40
codegen_flags: <defaults>
</compile_context>

<pallas_src>
import math

import jax
import jax.numpy as jnp
from jax import lax
from jax.experimental import pallas as pl
from jax.experimental.pallas import tpu as pltpu

# ---------------- problem sizes (small, consistent with the module) ----------
B = 2          # batch
T = 8          # time (n_grains / frames)
Z_DIM = 16     # z_dim
H_DIM = 32     # h_dim   (512 in the real module)
N_BAND = 64    # n_band -> filter_size (noise_synth='filterbank')
EPS_LN = 1e-5
LEAKY_SLOPE = 0.01
LOG10 = math.log(10.0)


# ---------------- in-kernel helpers ------------------------------------------
def _leaky_relu(x):
    return jnp.where(x >= 0, x, LEAKY_SLOPE * x)


def _layernorm(x, gamma, beta):
    mu = jnp.mean(x, axis=-1, keepdims=True)
    var = jnp.mean((x - mu) ** 2, axis=-1, keepdims=True)
    return (x - mu) * lax.rsqrt(var + EPS_LN) * gamma + beta


def _mlp_block(x, w, b, g, be):
    # Linear -> LayerNorm -> LeakyReLU   (one block of mlp(...))
    h = jnp.dot(x, w, preferred_element_type=jnp.float32) + b
    return _leaky_relu(_layernorm(h, g, be))


def _mod_sigmoid(x):
    # TODO(synk): mod_sigmoid is not defined in the reference file; using the
    # standard DDSP definition 2 * sigmoid(x)**log(10) + 1e-7, computed as
    # 2 * exp(log(10) * log_sigmoid(x)) + 1e-7.
    log_sig = jnp.minimum(x, 0.0) - jnp.log(1.0 + jnp.exp(-jnp.abs(x)))
    return 2.0 * jnp.exp(LOG10 * log_sig) + 1e-7


# ---------------- the Pallas kernel -------------------------------------------
def decoder_kernel(
    z_ref,
    # in_mlps_1 / 2 / 3
    w1, b1, g1, be1,
    w2, b2, g2, be2,
    w3, b3, g3, be3,
    # GRU (gate-split, lane-aligned)
    wih_r, wih_z, wih_n,
    whh_r, whh_z, whh_n,
    br, bz, bin_, bhn,
    # out_mlp (3 blocks)
    ow1, ob1, og1, obe1,
    ow2, ob2, og2, obe2,
    ow3, ob3, og3, obe3,
    # amplitudes layer
    wa, ba,
    # outputs
    amp_ref, state_ref,
    # scratch
    hid_scr,
):
    TBv = z_ref.shape[0]           # T * B (time-major rows)
    Bv = state_ref.shape[0]        # batch
    Tv = TBv // Bv

    x = z_ref[...]                                           # (T*B, z_dim)

    # ---- input MLP stack (full batch*time rows in one matmul each) -----------
    h = _mlp_block(x, w1[...], b1[...], g1[...], be1[...])
    h = _mlp_block(h, w2[...], b2[...], g2[...], be2[...])
    h = _mlp_block(h, w3[...], b3[...], g3[...], be3[...])   # (T*B, H)

    # ---- GRU (batch_first, single layer, h0 = zeros) --------------------------
    # Precompute input-gate contributions for all timesteps (full-row matmuls).
    xr = jnp.dot(h, wih_r[...], preferred_element_type=jnp.float32) + br[...]
    xz = jnp.dot(h, wih_z[...], preferred_element_type=jnp.float32) + bz[...]
    xn = jnp.dot(h, wih_n[...], preferred_element_type=jnp.float32) + bin_[...]

    whr = whh_r[...]
    whz = whh_z[...]
    whn = whh_n[...]
    bhn_v = bhn[...]

    H = whr.shape[0]
    h_t = jnp.zeros((Bv, H), jnp.float32)

    # Fully unrolled recurrence (Tv is static): static slices, SSA carries.
    for t in range(Tv):
        lo = t * Bv
        r = jax.nn.sigmoid(
            xr[lo:lo + Bv, :]
            + jnp.dot(h_t, whr, preferred_element_type=jnp.float32))
        zg = jax.nn.sigmoid(
            xz[lo:lo + Bv, :]
            + jnp.dot(h_t, whz, preferred_element_type=jnp.float32))
        n = jnp.tanh(
            xn[lo:lo + Bv, :]
            + r * (jnp.dot(h_t, whn, preferred_element_type=jnp.float32) + bhn_v))
        h_t = (1.0 - zg) * n + zg * h_t
        hid_scr[lo:lo + Bv, :] = h_t                          # static-offset store

    state_ref[...] = h_t                                      # (B, H)

    # ---- output MLP stack + amplitudes layer (full batch*time rows) -----------
    y = hid_scr[...]                                          # (T*B, H)
    y = _mlp_block(y, ow1[...], ob1[...], og1[...], obe1[...])
    y = _mlp_block(y, ow2[...], ob2[...], og2[...], obe2[...])
    y = _mlp_block(y, ow3[...], ob3[...], og3[...], obe3[...])

    amps = jnp.dot(y, wa[...], preferred_element_type=jnp.float32) + ba[...]
    amp_ref[...] = _mod_sigmoid(amps)                         # lane-dense (T*B, F)


# ---------------- wrapper ------------------------------------------------------
def spectral_decoder_v3(z, params):
    """z: (B, T, z_dim) float32. Returns (amplitudes (B, F, T), gru_state (1, B, H))."""
    Bv, Tv, Zd = z.shape
    H = H_DIM
    F = N_BAND

    (w1, b1, g1, be1, w2, b2, g2, be2, w3, b3, g3, be3,
     wih, bih, whh, bhh,
     ow1, ob1, og1, obe1, ow2, ob2, og2, obe2, ow3, ob3, og3, obe3,
     wa, ba) = params

    # Split GRU weights per gate (r, z, n) -> lane-aligned (H, H) matrices.
    # Fold the hh biases of the r/z gates into the ih biases (mathematically
    # identical); the n gate keeps b_in and b_hn separate (PyTorch semantics).
    wih_r, wih_z, wih_n = wih[:, :H], wih[:, H:2 * H], wih[:, 2 * H:]
    whh_r, whh_z, whh_n = whh[:, :H], whh[:, H:2 * H], whh[:, 2 * H:]
    br = bih[:, :H] + bhh[:, :H]
    bz = bih[:, H:2 * H] + bhh[:, H:2 * H]
    bin_ = bih[:, 2 * H:]
    bhn = bhh[:, 2 * H:]

    kparams = (w1, b1, g1, be1, w2, b2, g2, be2, w3, b3, g3, be3,
               wih_r, wih_z, wih_n, whh_r, whh_z, whh_n, br, bz, bin_, bhn,
               ow1, ob1, og1, obe1, ow2, ob2, og2, obe2, ow3, ob3, og3, obe3,
               wa, ba)

    # Time-major flatten: row t*B + b, so each GRU timestep is a contiguous,
    # statically-indexed block of B rows inside the kernel.
    z_tm = jnp.swapaxes(z, 0, 1).reshape(Tv * Bv, Zd)

    # Single invocation, no grid: every operand is a whole-array VMEM block.
    amps_tm, state = pl.pallas_call(
        decoder_kernel,
        out_shape=(
            jax.ShapeDtypeStruct((Tv * Bv, F), jnp.float32),
            jax.ShapeDtypeStruct((Bv, H), jnp.float32),
        ),
        scratch_shapes=[pltpu.VMEM((Tv * Bv, H), jnp.float32)],  # GRU hidden states
    )(z_tm, *kparams)

    # (T*B, F) -> (B, F, T)   == amplitudes_layer(...).permute(0, 2, 1)
    amps = jnp.transpose(amps_tm.reshape(Tv, Bv, F), (1, 2, 0))
    gru_state = state[None, :, :]                            # (1, B, H) like torch GRU
    return amps, gru_state


# ---------------- deterministic parameter construction -------------------------
def make_params(key):
    keys = iter(jax.random.split(key, 64))

    def lin(in_d, out_d, scale=0.2):
        w = scale * jax.random.normal(next(keys), (in_d, out_d), jnp.float32)
        b = scale * jax.random.normal(next(keys), (1, out_d), jnp.float32)
        return w, b

    def ln(d):
        g = 1.0 + 0.1 * jax.random.normal(next(keys), (1, d), jnp.float32)
        be = 0.1 * jax.random.normal(next(keys), (1, d), jnp.float32)
        return g, be

    params = []
    # in_mlps_1 (z_dim -> H), in_mlps_2/3 (H -> H)
    for in_d in (Z_DIM, H_DIM, H_DIM):
        w, b = lin(in_d, H_DIM)
        g, be = ln(H_DIM)
        params += [w, b, g, be]
    # GRU: weight_ih (H, 3H), bias_ih (1, 3H), weight_hh (H, 3H), bias_hh (1, 3H)
    wih, bih = lin(H_DIM, 3 * H_DIM)
    whh, bhh = lin(H_DIM, 3 * H_DIM)
    params += [wih, bih, whh, bhh]
    # out_mlp: 3 blocks (H -> H)
    for _ in range(3):
        w, b = lin(H_DIM, H_DIM)
        g, be = ln(H_DIM)
        params += [w, b, g, be]
    # amplitudes layer (H -> filter_size)
    wa, ba = lin(H_DIM, N_BAND)
    params += [wa, ba]
    return params


# ---------------- pure-JAX reference (for sanity check) ------------------------
def ref_forward(z, params):
    (w1, b1, g1, be1, w2, b2, g2, be2, w3, b3, g3, be3,
     wih, bih, whh, bhh,
     ow1, ob1, og1, obe1, ow2, ob2, og2, obe2, ow3, ob3, og3, obe3,
     wa, ba) = params
    H = H_DIM

    def mlp_b(x, w, b, g, be):
        h = x @ w + b
        mu = h.mean(-1, keepdims=True)
        var = ((h - mu) ** 2).mean(-1, keepdims=True)
        h = (h - mu) / jnp.sqrt(var + EPS_LN) * g + be
        return jnp.where(h >= 0, h, LEAKY_SLOPE * h)

    h = mlp_b(z, w1, b1, g1, be1)
    h = mlp_b(h, w2, b2, g2, be2)
    h = mlp_b(h, w3, b3, g3, be3)

    def step(hprev, xt):                         # hprev (B,H), xt (B,H)
        xg = xt @ wih + bih
        hg = hprev @ whh + bhh
        r = jax.nn.sigmoid(xg[:, :H] + hg[:, :H])
        zg = jax.nn.sigmoid(xg[:, H:2 * H] + hg[:, H:2 * H])
        n = jnp.tanh(xg[:, 2 * H:] + r * hg[:, 2 * H:])
        hn = (1.0 - zg) * n + zg * hprev
        return hn, hn

    h0 = jnp.zeros((z.shape[0], H), jnp.float32)
    h_last, ys = lax.scan(step, h0, jnp.swapaxes(h, 0, 1))
    y = jnp.swapaxes(ys, 0, 1)                   # (B, T, H)

    y = mlp_b(y, ow1, ob1, og1, obe1)
    y = mlp_b(y, ow2, ob2, og2, obe2)
    y = mlp_b(y, ow3, ob3, og3, obe3)
    amps = jnp.transpose(y @ wa + ba, (0, 2, 1))  # (B, F, T)
    amps = 2.0 * jnp.power(jax.nn.sigmoid(amps), LOG10) + 1e-7
    return amps, h_last[None]


# ---------------- main ----------------------------------------------------------
if __name__ == "__main__":
    key = jax.random.PRNGKey(0)
    k_z, k_p = jax.random.split(key)
    z = jax.random.normal(k_z, (B, T, Z_DIM), jnp.float32)
    params = make_params(k_p)

    amps, gru_state = spectral_decoder_v3(z, params)
    amps = jax.block_until_ready(amps)
    gru_state = jax.block_until_ready(gru_state)

    assert amps.shape == (B, N_BAND, T)
    assert gru_state.shape == (1, B, H_DIM)

    amps_ref, state_ref = ref_forward(z, params)
    assert jnp.allclose(amps, amps_ref, rtol=1e-4, atol=1e-5), "amplitudes mismatch"
    assert jnp.allclose(gru_state, state_ref, rtol=1e-4, atol=1e-5), "gru_state mismatch"

    print("KERNEL_OK")
</pallas_src>

<mosaic_0001>
module attributes {stable_mosaic.version = 11 : i64} {
  func.func @decoder_kernel(%arg0: memref<16x16xf32, #tpu.memory_space<vmem>>, %arg1: memref<16x32xf32, #tpu.memory_space<vmem>>, %arg2: memref<1x32xf32, #tpu.memory_space<vmem>>, %arg3: memref<1x32xf32, #tpu.memory_space<vmem>>, %arg4: memref<1x32xf32, #tpu.memory_space<vmem>>, %arg5: memref<32x32xf32, #tpu.memory_space<vmem>>, %arg6: memref<1x32xf32, #tpu.memory_space<vmem>>, %arg7: memref<1x32xf32, #tpu.memory_space<vmem>>, %arg8: memref<1x32xf32, #tpu.memory_space<vmem>>, %arg9: memref<32x32xf32, #tpu.memory_space<vmem>>, %arg10: memref<1x32xf32, #tpu.memory_space<vmem>>, %arg11: memref<1x32xf32, #tpu.memory_space<vmem>>, %arg12: memref<1x32xf32, #tpu.memory_space<vmem>>, %arg13: memref<32x32xf32, #tpu.memory_space<vmem>>, %arg14: memref<32x32xf32, #tpu.memory_space<vmem>>, %arg15: memref<32x32xf32, #tpu.memory_space<vmem>>, %arg16: memref<32x32xf32, #tpu.memory_space<vmem>>, %arg17: memref<32x32xf32, #tpu.memory_space<vmem>>, %arg18: memref<32x32xf32, #tpu.memory_space<vmem>>, %arg19: memref<1x32xf32, #tpu.memory_space<vmem>>, %arg20: memref<1x32xf32, #tpu.memory_space<vmem>>, %arg21: memref<1x32xf32, #tpu.memory_space<vmem>>, %arg22: memref<1x32xf32, #tpu.memory_space<vmem>>, %arg23: memref<32x32xf32, #tpu.memory_space<vmem>>, %arg24: memref<1x32xf32, #tpu.memory_space<vmem>>, %arg25: memref<1x32xf32, #tpu.memory_space<vmem>>, %arg26: memref<1x32xf32, #tpu.memory_space<vmem>>, %arg27: memref<32x32xf32, #tpu.memory_space<vmem>>, %arg28: memref<1x32xf32, #tpu.memory_space<vmem>>, %arg29: memref<1x32xf32, #tpu.memory_space<vmem>>, %arg30: memref<1x32xf32, #tpu.memory_space<vmem>>, %arg31: memref<32x32xf32, #tpu.memory_space<vmem>>, %arg32: memref<1x32xf32, #tpu.memory_space<vmem>>, %arg33: memref<1x32xf32, #tpu.memory_space<vmem>>, %arg34: memref<1x32xf32, #tpu.memory_space<vmem>>, %arg35: memref<32x64xf32, #tpu.memory_space<vmem>>, %arg36: memref<1x64xf32, #tpu.memory_space<vmem>>, %arg37: memref<16x64xf32, #tpu.memory_space<vmem>>, %arg38: memref<2x32xf32, #tpu.memory_space<vmem>>, %arg39: memref<16x32xf32, #tpu.memory_space<vmem>>) attributes {dimension_semantics = [], scalar_prefetch = 0 : i64, scratch_operands = 1 : i64, tpu.core_type = #tpu.core_type<tc>} {
    %c0 = arith.constant 0 : index
    %c0_0 = arith.constant 0 : index
    %0 = vector.load %arg0[%c0, %c0_0] : memref<16x16xf32, #tpu.memory_space<vmem>>, vector<16x16xf32>
    %c0_1 = arith.constant 0 : index
    %c0_2 = arith.constant 0 : index
    %1 = vector.load %arg1[%c0_1, %c0_2] : memref<16x32xf32, #tpu.memory_space<vmem>>, vector<16x32xf32>
    %c0_3 = arith.constant 0 : index
    %c0_4 = arith.constant 0 : index
    %2 = vector.load %arg2[%c0_3, %c0_4] : memref<1x32xf32, #tpu.memory_space<vmem>>, vector<1x32xf32>
    %c0_5 = arith.constant 0 : index
    %c0_6 = arith.constant 0 : index
    %3 = vector.load %arg3[%c0_5, %c0_6] : memref<1x32xf32, #tpu.memory_space<vmem>>, vector<1x32xf32>
    %c0_7 = arith.constant 0 : index
    %c0_8 = arith.constant 0 : index
    %4 = vector.load %arg4[%c0_7, %c0_8] : memref<1x32xf32, #tpu.memory_space<vmem>>, vector<1x32xf32>
    %cst = arith.constant dense<0.000000e+00> : vector<16x32xf32>
    %5 = tpu.matmul %0, %1, %cst {dimension_numbers = #tpu.dot_dimension_numbers<[1], [0], [0], [1], [0, 0, 1, 1], [], []>} : vector<16x16xf32>, vector<16x32xf32>, vector<16x32xf32> -> vector<16x32xf32>
    %6 = vector.broadcast %2 : vector<1x32xf32> to vector<16x32xf32>
    %7 = arith.addf %5, %6 : vector<16x32xf32>
    %cst_9 = arith.constant dense<0.000000e+00> : vector<16xf32>
    %8 = vector.multi_reduction <add>, %7, %cst_9 [1] : vector<16x32xf32> to vector<16xf32>
    %9 = vector.shape_cast %8 : vector<16xf32> to vector<16x1xf32>
    %cst_10 = arith.constant 3.200000e+01 : f32
    %10 = vector.broadcast %cst_10 : f32 to vector<16x1xf32>
    %11 = arith.divf %9, %10 : vector<16x1xf32>
    %12 = vector.broadcast %11 : vector<16x1xf32> to vector<16x32xf32>
    %13 = arith.subf %7, %12 : vector<16x32xf32>
    %14 = arith.mulf %13, %13 : vector<16x32xf32>
    %cst_11 = arith.constant dense<0.000000e+00> : vector<16xf32>
    %15 = vector.multi_reduction <add>, %14, %cst_11 [1] : vector<16x32xf32> to vector<16xf32>
    %16 = vector.shape_cast %15 : vector<16xf32> to vector<16x1xf32>
    %cst_12 = arith.constant 3.200000e+01 : f32
    %17 = vector.broadcast %cst_12 : f32 to vector<16x1xf32>
    %18 = arith.divf %16, %17 : vector<16x1xf32>
    %19 = vector.broadcast %11 : vector<16x1xf32> to vector<16x32xf32>
    %20 = arith.subf %7, %19 : vector<16x32xf32>
    %cst_13 = arith.constant 9.99999974E-6 : f32
    %21 = vector.broadcast %cst_13 : f32 to vector<16x1xf32>
    %22 = arith.addf %18, %21 : vector<16x1xf32>
    %23 = math.rsqrt %22 : vector<16x1xf32>
    %24 = vector.broadcast %23 : vector<16x1xf32> to vector<16x32xf32>
    %25 = arith.mulf %20, %24 : vector<16x32xf32>
    %26 = vector.broadcast %3 : vector<1x32xf32> to vector<16x32xf32>
    %27 = arith.mulf %25, %26 : vector<16x32xf32>
    %28 = vector.broadcast %4 : vector<1x32xf32> to vector<16x32xf32>
    %29 = arith.addf %27, %28 : vector<16x32xf32>
    %cst_14 = arith.constant 0.000000e+00 : f32
    %30 = vector.broadcast %cst_14 : f32 to vector<16x32xf32>
    %31 = arith.cmpf oge, %29, %30 : vector<16x32xf32>
    %cst_15 = arith.constant 0.00999999977 : f32
    %32 = vector.broadcast %cst_15 : f32 to vector<16x32xf32>
    %33 = arith.mulf %32, %29 : vector<16x32xf32>
    %34 = arith.select %31, %29, %33 : vector<16x32xi1>, vector<16x32xf32>
    %c0_16 = arith.constant 0 : index
    %c0_17 = arith.constant 0 : index
    %35 = vector.load %arg5[%c0_16, %c0_17] : memref<32x32xf32, #tpu.memory_space<vmem>>, vector<32x32xf32>
    %c0_18 = arith.constant 0 : index
    %c0_19 = arith.constant 0 : index
    %36 = vector.load %arg6[%c0_18, %c0_19] : memref<1x32xf32, #tpu.memory_space<vmem>>, vector<1x32xf32>
    %c0_20 = arith.constant 0 : index
    %c0_21 = arith.constant 0 : index
    %37 = vector.load %arg7[%c0_20, %c0_21] : memref<1x32xf32, #tpu.memory_space<vmem>>, vector<1x32xf32>
    %c0_22 = arith.constant 0 : index
    %c0_23 = arith.constant 0 : index
    %38 = vector.load %arg8[%c0_22, %c0_23] : memref<1x32xf32, #tpu.memory_space<vmem>>, vector<1x32xf32>
    %cst_24 = arith.constant dense<0.000000e+00> : vector<16x32xf32>
    %39 = tpu.matmul %34, %35, %cst_24 {dimension_numbers = #tpu.dot_dimension_numbers<[1], [0], [0], [1], [0, 0, 1, 1], [], []>} : vector<16x32xf32>, vector<32x32xf32>, vector<16x32xf32> -> vector<16x32xf32>
    %40 = vector.broadcast %36 : vector<1x32xf32> to vector<16x32xf32>
    %41 = arith.addf %39, %40 : vector<16x32xf32>
    %cst_25 = arith.constant dense<0.000000e+00> : vector<16xf32>
    %42 = vector.multi_reduction <add>, %41, %cst_25 [1] : vector<16x32xf32> to vector<16xf32>
    %43 = vector.shape_cast %42 : vector<16xf32> to vector<16x1xf32>
    %cst_26 = arith.constant 3.200000e+01 : f32
    %44 = vector.broadcast %cst_26 : f32 to vector<16x1xf32>
    %45 = arith.divf %43, %44 : vector<16x1xf32>
    %46 = vector.broadcast %45 : vector<16x1xf32> to vector<16x32xf32>
    %47 = arith.subf %41, %46 : vector<16x32xf32>
    %48 = arith.mulf %47, %47 : vector<16x32xf32>
    %cst_27 = arith.constant dense<0.000000e+00> : vector<16xf32>
    %49 = vector.multi_reduction <add>, %48, %cst_27 [1] : vector<16x32xf32> to vector<16xf32>
    %50 = vector.shape_cast %49 : vector<16xf32> to vector<16x1xf32>
    %cst_28 = arith.constant 3.200000e+01 : f32
    %51 = vector.broadcast %cst_28 : f32 to vector<16x1xf32>
    %52 = arith.divf %50, %51 : vector<16x1xf32>
    %53 = vector.broadcast %45 : vector<16x1xf32> to vector<16x32xf32>
    %54 = arith.subf %41, %53 : vector<16x32xf32>
    %cst_29 = arith.constant 9.99999974E-6 : f32
    %55 = vector.broadcast %cst_29 : f32 to vector<16x1xf32>
    %56 = arith.addf %52, %55 : vector<16x1xf32>
    %57 = math.rsqrt %56 : vector<16x1xf32>
    %58 = vector.broadcast %57 : vector<16x1xf32> to vector<16x32xf32>
    %59 = arith.mulf %54, %58 : vector<16x32xf32>
    %60 = vector.broadcast %37 : vector<1x32xf32> to vector<16x32xf32>
    %61 = arith.mulf %59, %60 : vector<16x32xf32>
    %62 = vector.broadcast %38 : vector<1x32xf32> to vector<16x32xf32>
    %63 = arith.addf %61, %62 : vector<16x32xf32>
    %cst_30 = arith.constant 0.000000e+00 : f32
    %64 = vector.broadcast %cst_30 : f32 to vector<16x32xf32>
    %65 = arith.cmpf oge, %63, %64 : vector<16x32xf32>
    %cst_31 = arith.constant 0.00999999977 : f32
    %66 = vector.broadcast %cst_31 : f32 to vector<16x32xf32>
    %67 = arith.mulf %66, %63 : vector<16x32xf32>
    %68 = arith.select %65, %63, %67 : vector<16x32xi1>, vector<16x32xf32>
    %c0_32 = arith.constant 0 : index
    %c0_33 = arith.constant 0 : index
    %69 = vector.load %arg9[%c0_32, %c0_33] : memref<32x32xf32, #tpu.memory_space<vmem>>, vector<32x32xf32>
    %c0_34 = arith.constant 0 : index
    %c0_35 = arith.constant 0 : index
    %70 = vector.load %arg10[%c0_34, %c0_35] : memref<1x32xf32, #tpu.memory_space<vmem>>, vector<1x32xf32>
    %c0_36 = arith.constant 0 : index
    %c0_37 = arith.constant 0 : index
    %71 = vector.load %arg11[%c0_36, %c0_37] : memref<1x32xf32, #tpu.memory_space<vmem>>, vector<1x32xf32>
    %c0_38 = arith.constant 0 : index
    %c0_39 = arith.constant 0 : index
    %72 = vector.load %arg12[%c0_38, %c0_39] : memref<1x32xf32, #tpu.memory_space<vmem>>, vector<1x32xf32>
    %cst_40 = arith.constant dense<0.000000e+00> : vector<16x32xf32>
    %73 = tpu.matmul %68, %69, %cst_40 {dimension_numbers = #tpu.dot_dimension_numbers<[1], [0], [0], [1], [0, 0, 1, 1], [], []>} : vector<16x32xf32>, vector<32x32xf32>, vector<16x32xf32> -> vector<16x32xf32>
    %74 = vector.broadcast %70 : vector<1x32xf32> to vector<16x32xf32>
    %75 = arith.addf %73, %74 : vector<16x32xf32>
    %cst_41 = arith.constant dense<0.000000e+00> : vector<16xf32>
    %76 = vector.multi_reduction <add>, %75, %cst_41 [1] : vector<16x32xf32> to vector<16xf32>
    %77 = vector.shape_cast %76 : vector<16xf32> to vector<16x1xf32>
    %cst_42 = arith.constant 3.200000e+01 : f32
    %78 = vector.broadcast %cst_42 : f32 to vector<16x1xf32>
    %79 = arith.divf %77, %78 : vector<16x1xf32>
    %80 = vector.broadcast %79 : vector<16x1xf32> to vector<16x32xf32>
    %81 = arith.subf %75, %80 : vector<16x32xf32>
    %82 = arith.mulf %81, %81 : vector<16x32xf32>
    %cst_43 = arith.constant dense<0.000000e+00> : vector<16xf32>
    %83 = vector.multi_reduction <add>, %82, %cst_43 [1] : vector<16x32xf32> to vector<16xf32>
    %84 = vector.shape_cast %83 : vector<16xf32> to vector<16x1xf32>
    %cst_44 = arith.constant 3.200000e+01 : f32
    %85 = vector.broadcast %cst_44 : f32 to vector<16x1xf32>
    %86 = arith.divf %84, %85 : vector<16x1xf32>
    %87 = vector.broadcast %79 : vector<16x1xf32> to vector<16x32xf32>
    %88 = arith.subf %75, %87 : vector<16x32xf32>
    %cst_45 = arith.constant 9.99999974E-6 : f32
    %89 = vector.broadcast %cst_45 : f32 to vector<16x1xf32>
    %90 = arith.addf %86, %89 : vector<16x1xf32>
    %91 = math.rsqrt %90 : vector<16x1xf32>
    %92 = vector.broadcast %91 : vector<16x1xf32> to vector<16x32xf32>
    %93 = arith.mulf %88, %92 : vector<16x32xf32>
    %94 = vector.broadcast %71 : vector<1x32xf32> to vector<16x32xf32>
    %95 = arith.mulf %93, %94 : vector<16x32xf32>
    %96 = vector.broadcast %72 : vector<1x32xf32> to vector<16x32xf32>
    %97 = arith.addf %95, %96 : vector<16x32xf32>
    %cst_46 = arith.constant 0.000000e+00 : f32
    %98 = vector.broadcast %cst_46 : f32 to vector<16x32xf32>
    %99 = arith.cmpf oge, %97, %98 : vector<16x32xf32>
    %cst_47 = arith.constant 0.00999999977 : f32
    %100 = vector.broadcast %cst_47 : f32 to vector<16x32xf32>
    %101 = arith.mulf %100, %97 : vector<16x32xf32>
    %102 = arith.select %99, %97, %101 : vector<16x32xi1>, vector<16x32xf32>
    %c0_48 = arith.constant 0 : index
    %c0_49 = arith.constant 0 : index
    %103 = vector.load %arg13[%c0_48, %c0_49] : memref<32x32xf32, #tpu.memory_space<vmem>>, vector<32x32xf32>
    %cst_50 = arith.constant dense<0.000000e+00> : vector<16x32xf32>
    %104 = tpu.matmul %102, %103, %cst_50 {dimension_numbers = #tpu.dot_dimension_numbers<[1], [0], [0], [1], [0, 0, 1, 1], [], []>} : vector<16x32xf32>, vector<32x32xf32>, vector<16x32xf32> -> vector<16x32xf32>
    %c0_51 = arith.constant 0 : index
    %c0_52 = arith.constant 0 : index
    %105 = vector.load %arg19[%c0_51, %c0_52] : memref<1x32xf32, #tpu.memory_space<vmem>>, vector<1x32xf32>
    %106 = vector.broadcast %105 : vector<1x32xf32> to vector<16x32xf32>
    %107 = arith.addf %104, %106 : vector<16x32xf32>
    %c0_53 = arith.constant 0 : index
    %c0_54 = arith.constant 0 : index
    %108 = vector.load %arg14[%c0_53, %c0_54] : memref<32x32xf32, #tpu.memory_space<vmem>>, vector<32x32xf32>
    %cst_55 = arith.constant dense<0.000000e+00> : vector<16x32xf32>
    %109 = tpu.matmul %102, %108, %cst_55 {dimension_numbers = #tpu.dot_dimension_numbers<[1], [0], [0], [1], [0, 0, 1, 1], [], []>} : vector<16x32xf32>, vector<32x32xf32>, vector<16x32xf32> -> vector<16x32xf32>
    %c0_56 = arith.constant 0 : index
    %c0_57 = arith.constant 0 : index
    %110 = vector.load %arg20[%c0_56, %c0_57] : memref<1x32xf32, #tpu.memory_space<vmem>>, vector<1x32xf32>
    %111 = vector.broadcast %110 : vector<1x32xf32> to vector<16x32xf32>
    %112 = arith.addf %109, %111 : vector<16x32xf32>
    %c0_58 = arith.constant 0 : index
    %c0_59 = arith.constant 0 : index
    %113 = vector.load %arg15[%c0_58, %c0_59] : memref<32x32xf32, #tpu.memory_space<vmem>>, vector<32x32xf32>
    %cst_60 = arith.constant dense<0.000000e+00> : vector<16x32xf32>
    %114 = tpu.matmul %102, %113, %cst_60 {dimension_numbers = #tpu.dot_dimension_numbers<[1], [0], [0], [1], [0, 0, 1, 1], [], []>} : vector<16x32xf32>, vector<32x32xf32>, vector<16x32xf32> -> vector<16x32xf32>
    %c0_61 = arith.constant 0 : index
    %c0_62 = arith.constant 0 : index
    %115 = vector.load %arg21[%c0_61, %c0_62] : memref<1x32xf32, #tpu.memory_space<vmem>>, vector<1x32xf32>
    %116 = vector.broadcast %115 : vector<1x32xf32> to vector<16x32xf32>
    %117 = arith.addf %114, %116 : vector<16x32xf32>
    %c0_63 = arith.constant 0 : index
    %c0_64 = arith.constant 0 : index
    %118 = vector.load %arg16[%c0_63, %c0_64] : memref<32x32xf32, #tpu.memory_space<vmem>>, vector<32x32xf32>
    %c0_65 = arith.constant 0 : index
    %c0_66 = arith.constant 0 : index
    %119 = vector.load %arg17[%c0_65, %c0_66] : memref<32x32xf32, #tpu.memory_space<vmem>>, vector<32x32xf32>
    %c0_67 = arith.constant 0 : index
    %c0_68 = arith.constant 0 : index
    %120 = vector.load %arg18[%c0_67, %c0_68] : memref<32x32xf32, #tpu.memory_space<vmem>>, vector<32x32xf32>
    %c0_69 = arith.constant 0 : index
    %c0_70 = arith.constant 0 : index
    %121 = vector.load %arg22[%c0_69, %c0_70] : memref<1x32xf32, #tpu.memory_space<vmem>>, vector<1x32xf32>
    %cst_71 = arith.constant 0.000000e+00 : f32
    %122 = vector.broadcast %cst_71 : f32 to vector<2x32xf32>
    %123 = vector.extract_strided_slice %107 {offsets = [0, 0], sizes = [2, 32], strides = [1, 1]} : vector<16x32xf32> to vector<2x32xf32>
    %cst_72 = arith.constant dense<0.000000e+00> : vector<2x32xf32>
    %124 = tpu.matmul %122, %118, %cst_72 {dimension_numbers = #tpu.dot_dimension_numbers<[1], [0], [0], [1], [0, 0, 1, 1], [], []>} : vector<2x32xf32>, vector<32x32xf32>, vector<2x32xf32> -> vector<2x32xf32>
    %125 = arith.addf %123, %124 : vector<2x32xf32>
    %126 = arith.negf %125 : vector<2x32xf32>
    %127 = math.exp %126 : vector<2x32xf32>
    %cst_73 = arith.constant 1.000000e+00 : f32
    %128 = vector.broadcast %cst_73 : f32 to vector<2x32xf32>
    %129 = arith.addf %128, %127 : vector<2x32xf32>
    %130 = arith.divf %128, %129 : vector<2x32xf32>
    %131 = vector.extract_strided_slice %112 {offsets = [0, 0], sizes = [2, 32], strides = [1, 1]} : vector<16x32xf32> to vector<2x32xf32>
    %cst_74 = arith.constant dense<0.000000e+00> : vector<2x32xf32>
    %132 = tpu.matmul %122, %119, %cst_74 {dimension_numbers = #tpu.dot_dimension_numbers<[1], [0], [0], [1], [0, 0, 1, 1], [], []>} : vector<2x32xf32>, vector<32x32xf32>, vector<2x32xf32> -> vector<2x32xf32>
    %133 = arith.addf %131, %132 : vector<2x32xf32>
    %134 = arith.negf %133 : vector<2x32xf32>
    %135 = math.exp %134 : vector<2x32xf32>
    %cst_75 = arith.constant 1.000000e+00 : f32
    %136 = vector.broadcast %cst_75 : f32 to vector<2x32xf32>
    %137 = arith.addf %136, %135 : vector<2x32xf32>
    %138 = arith.divf %136, %137 : vector<2x32xf32>
    %139 = vector.extract_strided_slice %117 {offsets = [0, 0], sizes = [2, 32], strides = [1, 1]} : vector<16x32xf32> to vector<2x32xf32>
    %cst_76 = arith.constant dense<0.000000e+00> : vector<2x32xf32>
    %140 = tpu.matmul %122, %120, %cst_76 {dimension_numbers = #tpu.dot_dimension_numbers<[1], [0], [0], [1], [0, 0, 1, 1], [], []>} : vector<2x32xf32>, vector<32x32xf32>, vector<2x32xf32> -> vector<2x32xf32>
    %141 = vector.broadcast %121 : vector<1x32xf32> to vector<2x32xf32>
    %142 = arith.addf %140, %141 : vector<2x32xf32>
    %143 = arith.mulf %130, %142 : vector<2x32xf32>
    %144 = arith.addf %139, %143 : vector<2x32xf32>
    %145 = math.tanh %144 : vector<2x32xf32>
    %cst_77 = arith.constant 1.000000e+00 : f32
    %146 = vector.broadcast %cst_77 : f32 to vector<2x32xf32>
    %147 = arith.subf %146, %138 : vector<2x32xf32>
    %148 = arith.mulf %147, %145 : vector<2x32xf32>
    %149 = arith.mulf %138, %122 : vector<2x32xf32>
    %150 = arith.addf %148, %149 : vector<2x32xf32>
    %c0_78 = arith.constant 0 : index
    %c0_79 = arith.constant 0 : index
    %151 = vector.load %arg39[%c0_78, %c0_79] : memref<16x32xf32, #tpu.memory_space<vmem>>, vector<2x32xf32>
    tpu.vector_store %arg39[%c0_78, %c0_79], %150 {strides = array<i32>} : memref<16x32xf32, #tpu.memory_space<vmem>>, vector<2x32xf32>,
    %152 = vector.extract_strided_slice %107 {offsets = [2, 0], sizes = [2, 32], strides = [1, 1]} : vector<16x32xf32> to vector<2x32xf32>
    %cst_80 = arith.constant dense<0.000000e+00> : vector<2x32xf32>
    %153 = tpu.matmul %150, %118, %cst_80 {dimension_numbers = #tpu.dot_dimension_numbers<[1], [0], [0], [1], [0, 0, 1, 1], [], []>} : vector<2x32xf32>, vector<32x32xf32>, vector<2x32xf32> -> vector<2x32xf32>
    %154 = arith.addf %152, %153 : vector<2x32xf32>
    %155 = arith.negf %154 : vector<2x32xf32>
    %156 = math.exp %155 : vector<2x32xf32>
    %cst_81 = arith.constant 1.000000e+00 : f32
    %157 = vector.broadcast %cst_81 : f32 to vector<2x32xf32>
    %158 = arith.addf %157, %156 : vector<2x32xf32>
    %159 = arith.divf %157, %158 : vector<2x32xf32>
    %160 = vector.extract_strided_slice %112 {offsets = [2, 0], sizes = [2, 32], strides = [1, 1]} : vector<16x32xf32> to vector<2x32xf32>
    %cst_82 = arith.constant dense<0.000000e+00> : vector<2x32xf32>
    %161 = tpu.matmul %150, %119, %cst_82 {dimension_numbers = #tpu.dot_dimension_numbers<[1], [0], [0], [1], [0, 0, 1, 1], [], []>} : vector<2x32xf32>, vector<32x32xf32>, vector<2x32xf32> -> vector<2x32xf32>
    %162 = arith.addf %160, %161 : vector<2x32xf32>
    %163 = arith.negf %162 : vector<2x32xf32>
    %164 = math.exp %163 : vector<2x32xf32>
    %cst_83 = arith.constant 1.000000e+00 : f32
    %165 = vector.broadcast %cst_83 : f32 to vector<2x32xf32>
    %166 = arith.addf %165, %164 : vector<2x32xf32>
    %167 = arith.divf %165, %166 : vector<2x32xf32>
    %168 = vector.extract_strided_slice %117 {offsets = [2, 0], sizes = [2, 32], strides = [1, 1]} : vector<16x32xf32> to vector<2x32xf32>
    %cst_84 = arith.constant dense<0.000000e+00> : vector<2x32xf32>
    %169 = tpu.matmul %150, %120, %cst_84 {dimension_numbers = #tpu.dot_dimension_numbers<[1], [0], [0], [1], [0, 0, 1, 1], [], []>} : vector<2x32xf32>, vector<32x32xf32>, vector<2x32xf32> -> vector<2x32xf32>
    %170 = vector.broadcast %121 : vector<1x32xf32> to vector<2x32xf32>
    %171 = arith.addf %169, %170 : vector<2x32xf32>
    %172 = arith.mulf %159, %171 : vector<2x32xf32>
    %173 = arith.addf %168, %172 : vector<2x32xf32>
    %174 = math.tanh %173 : vector<2x32xf32>
    %cst_85 = arith.constant 1.000000e+00 : f32
    %175 = vector.broadcast %cst_85 : f32 to vector<2x32xf32>
    %176 = arith.subf %175, %167 : vector<2x32xf32>
    %177 = arith.mulf %176, %174 : vector<2x32xf32>
    %178 = arith.mulf %167, %150 : vector<2x32xf32>
    %179 = arith.addf %177, %178 : vector<2x32xf32>
    %c2 = arith.constant 2 : index
    %c0_86 = arith.constant 0 : index
    %180 = vector.load %arg39[%c2, %c0_86] : memref<16x32xf32, #tpu.memory_space<vmem>>, vector<2x32xf32>
    tpu.vector_store %arg39[%c2, %c0_86], %179 {strides = array<i32>} : memref<16x32xf32, #tpu.memory_space<vmem>>, vector<2x32xf32>,
    %181 = vector.extract_strided_slice %107 {offsets = [4, 0], sizes = [2, 32], strides = [1, 1]} : vector<16x32xf32> to vector<2x32xf32>
    %cst_87 = arith.constant dense<0.000000e+00> : vector<2x32xf32>
    %182 = tpu.matmul %179, %118, %cst_87 {dimension_numbers = #tpu.dot_dimension_numbers<[1], [0], [0], [1], [0, 0, 1, 1], [], []>} : vector<2x32xf32>, vector<32x32xf32>, vector<2x32xf32> -> vector<2x32xf32>
    %183 = arith.addf %181, %182 : vector<2x32xf32>
    %184 = arith.negf %183 : vector<2x32xf32>
    %185 = math.exp %184 : vector<2x32xf32>
    %cst_88 = arith.constant 1.000000e+00 : f32
    %186 = vector.broadcast %cst_88 : f32 to vector<2x32xf32>
    %187 = arith.addf %186, %185 : vector<2x32xf32>
    %188 = arith.divf %186, %187 : vector<2x32xf32>
    %189 = vector.extract_strided_slice %112 {offsets = [4, 0], sizes = [2, 32], strides = [1, 1]} : vector<16x32xf32> to vector<2x32xf32>
    %cst_89 = arith.constant dense<0.000000e+00> : vector<2x32xf32>
    %190 = tpu.matmul %179, %119, %cst_89 {dimension_numbers = #tpu.dot_dimension_numbers<[1], [0], [0], [1], [0, 0, 1, 1], [], []>} : vector<2x32xf32>, vector<32x32xf32>, vector<2x32xf32> -> vector<2x32xf32>
    %191 = arith.addf %189, %190 : vector<2x32xf32>
    %192 = arith.negf %191 : vector<2x32xf32>
    %193 = math.exp %192 : vector<2x32xf32>
    %cst_90 = arith.constant 1.000000e+00 : f32
    %194 = vector.broadcast %cst_90 : f32 to vector<2x32xf32>
    %195 = arith.addf %194, %193 : vector<2x32xf32>
    %196 = arith.divf %194, %195 : vector<2x32xf32>
    %197 = vector.extract_strided_slice %117 {offsets = [4, 0], sizes = [2, 32], strides = [1, 1]} : vector<16x32xf32> to vector<2x32xf32>
    %cst_91 = arith.constant dense<0.000000e+00> : vector<2x32xf32>
    %198 = tpu.matmul %179, %120, %cst_91 {dimension_numbers = #tpu.dot_dimension_numbers<[1], [0], [0], [1], [0, 0, 1, 1], [], []>} : vector<2x32xf32>, vector<32x32xf32>, vector<2x32xf32> -> vector<2x32xf32>
    %199 = vector.broadcast %121 : vector<1x32xf32> to vector<2x32xf32>
    %200 = arith.addf %198, %199 : vector<2x32xf32>
    %201 = arith.mulf %188, %200 : vector<2x32xf32>
    %202 = arith.addf %197, %201 : vector<2x32xf32>
    %203 = math.tanh %202 : vector<2x32xf32>
    %cst_92 = arith.constant 1.000000e+00 : f32
    %204 = vector.broadcast %cst_92 : f32 to vector<2x32xf32>
    %205 = arith.subf %204, %196 : vector<2x32xf32>
    %206 = arith.mulf %205, %203 : vector<2x32xf32>
    %207 = arith.mulf %196, %179 : vector<2x32xf32>
    %208 = arith.addf %206, %207 : vector<2x32xf32>
    %c4 = arith.constant 4 : index
    %c0_93 = arith.constant 0 : index
    %209 = vector.load %arg39[%c4, %c0_93] : memref<16x32xf32, #tpu.memory_space<vmem>>, vector<2x32xf32>
    tpu.vector_store %arg39[%c4, %c0_93], %208 {strides = array<i32>} : memref<16x32xf32, #tpu.memory_space<vmem>>, vector<2x32xf32>,
    %210 = vector.extract_strided_slice %107 {offsets = [6, 0], sizes = [2, 32], strides = [1, 1]} : vector<16x32xf32> to vector<2x32xf32>
    %cst_94 = arith.constant dense<0.000000e+00> : vector<2x32xf32>
    %211 = tpu.matmul %208, %118, %cst_94 {dimension_numbers = #tpu.dot_dimension_numbers<[1], [0], [0], [1], [0, 0, 1, 1], [], []>} : vector<2x32xf32>, vector<32x32xf32>, vector<2x32xf32> -> vector<2x32xf32>
    %212 = arith.addf %210, %211 : vector<2x32xf32>
    %213 = arith.negf %212 : vector<2x32xf32>
    %214 = math.exp %213 : vector<2x32xf32>
    %cst_95 = arith.constant 1.000000e+00 : f32
    %215 = vector.broadcast %cst_95 : f32 to vector<2x32xf32>
    %216 = arith.addf %215, %214 : vector<2x32xf32>
    %217 = arith.divf %215, %216 : vector<2x32xf32>
    %218 = vector.extract_strided_slice %112 {offsets = [6, 0], sizes = [2, 32], strides = [1, 1]} : vector<16x32xf32> to vector<2x32xf32>
    %cst_96 = arith.constant dense<0.000000e+00> : vector<2x32xf32>
    %219 = tpu.matmul %208, %119, %cst_96 {dimension_numbers = #tpu.dot_dimension_numbers<[1], [0], [0], [1], [0, 0, 1, 1], [], []>} : vector<2x32xf32>, vector<32x32xf32>, vector<2x32xf32> -> vector<2x32xf32>
    %220 = arith.addf %218, %219 : vector<2x32xf32>
    %221 = arith.negf %220 : vector<2x32xf32>
    %222 = math.exp %221 : vector<2x32xf32>
    %cst_97 = arith.constant 1.000000e+00 : f32
    %223 = vector.broadcast %cst_97 : f32 to vector<2x32xf32>
    %224 = arith.addf %223, %222 : vector<2x32xf32>
    %225 = arith.divf %223, %224 : vector<2x32xf32>
    %226 = vector.extract_strided_slice %117 {offsets = [6, 0], sizes = [2, 32], strides = [1, 1]} : vector<16x32xf32> to vector<2x32xf32>
    %cst_98 = arith.constant dense<0.000000e+00> : vector<2x32xf32>
    %227 = tpu.matmul %208, %120, %cst_98 {dimension_numbers = #tpu.dot_dimension_numbers<[1], [0], [0], [1], [0, 0, 1, 1], [], []>} : vector<2x32xf32>, vector<32x32xf32>, vector<2x32xf32> -> vector<2x32xf32>
    %228 = vector.broadcast %121 : vector<1x32xf32> to vector<2x32xf32>
    %229 = arith.addf %227, %228 : vector<2x32xf32>
    %230 = arith.mulf %217, %229 : vector<2x32xf32>
    %231 = arith.addf %226, %230 : vector<2x32xf32>
    %232 = math.tanh %231 : vector<2x32xf32>
    %cst_99 = arith.constant 1.000000e+00 : f32
    %233 = vector.broadcast %cst_99 : f32 to vector<2x32xf32>
    %234 = arith.subf %233, %225 : vector<2x32xf32>
    %235 = arith.mulf %234, %232 : vector<2x32xf32>
    %236 = arith.mulf %225, %208 : vector<2x32xf32>
    %237 = arith.addf %235, %236 : vector<2x32xf32>
    %c6 = arith.constant 6 : index
    %c0_100 = arith.constant 0 : index
    %238 = vector.load %arg39[%c6, %c0_100] : memref<16x32xf32, #tpu.memory_space<vmem>>, vector<2x32xf32>
    tpu.vector_store %arg39[%c6, %c0_100], %237 {strides = array<i32>} : memref<16x32xf32, #tpu.memory_space<vmem>>, vector<2x32xf32>,
    %239 = vector.extract_strided_slice %107 {offsets = [8, 0], sizes = [2, 32], strides = [1, 1]} : vector<16x32xf32> to vector<2x32xf32>
    %cst_101 = arith.constant dense<0.000000e+00> : vector<2x32xf32>
    %240 = tpu.matmul %237, %118, %cst_101 {dimension_numbers = #tpu.dot_dimension_numbers<[1], [0], [0], [1], [0, 0, 1, 1], [], []>} : vector<2x32xf32>, vector<32x32xf32>, vector<2x32xf32> -> vector<2x32xf32>
    %241 = arith.addf %239, %240 : vector<2x32xf32>
    %242 = arith.negf %241 : vector<2x32xf32>
    %243 = math.exp %242 : vector<2x32xf32>
    %cst_102 = arith.constant 1.000000e+00 : f32
    %244 = vector.broadcast %cst_102 : f32 to vector<2x32xf32>
    %245 = arith.addf %244, %243 : vector<2x32xf32>
    %246 = arith.divf %244, %245 : vector<2x32xf32>
    %247 = vector.extract_strided_slice %112 {offsets = [8, 0], sizes = [2, 32], strides = [1, 1]} : vector<16x32xf32> to vector<2x32xf32>
    %cst_103 = arith.constant dense<0.000000e+00> : vector<2x32xf32>
    %248 = tpu.matmul %237, %119, %cst_103 {dimension_numbers = #tpu.dot_dimension_numbers<[1], [0], [0], [1], [0, 0, 1, 1], [], []>} : vector<2x32xf32>, vector<32x32xf32>, vector<2x32xf32> -> vector<2x32xf32>
    %249 = arith.addf %247, %248 : vector<2x32xf32>
    %250 = arith.negf %249 : vector<2x32xf32>
    %251 = math.exp %250 : vector<2x32xf32>
    %cst_104 = arith.constant 1.000000e+00 : f32
    %252 = vector.broadcast %cst_104 : f32 to vector<2x32xf32>
    %253 = arith.addf %252, %251 : vector<2x32xf32>
    %254 = arith.divf %252, %253 : vector<2x32xf32>
    %255 = vector.extract_strided_slice %117 {offsets = [8, 0], sizes = [2, 32], strides = [1, 1]} : vector<16x32xf32> to vector<2x32xf32>
    %cst_105 = arith.constant dense<0.000000e+00> : vector<2x32xf32>
    %256 = tpu.matmul %237, %120, %cst_105 {dimension_numbers = #tpu.dot_dimension_numbers<[1], [0], [0], [1], [0, 0, 1, 1], [], []>} : vector<2x32xf32>, vector<32x32xf32>, vector<2x32xf32> -> vector<2x32xf32>
    %257 = vector.broadcast %121 : vector<1x32xf32> to vector<2x32xf32>
    %258 = arith.addf %256, %257 : vector<2x32xf32>
    %259 = arith.mulf %246, %258 : vector<2x32xf32>
    %260 = arith.addf %255, %259 : vector<2x32xf32>
    %261 = math.tanh %260 : vector<2x32xf32>
    %cst_106 = arith.constant 1.000000e+00 : f32
    %262 = vector.broadcast %cst_106 : f32 to vector<2x32xf32>
    %263 = arith.subf %262, %254 : vector<2x32xf32>
    %264 = arith.mulf %263, %261 : vector<2x32xf32>
    %265 = arith.mulf %254, %237 : vector<2x32xf32>
    %266 = arith.addf %264, %265 : vector<2x32xf32>
    %c8 = arith.constant 8 : index
    %c0_107 = arith.constant 0 : index
    %267 = vector.load %arg39[%c8, %c0_107] : memref<16x32xf32, #tpu.memory_space<vmem>>, vector<2x32xf32>
    tpu.vector_store %arg39[%c8, %c0_107], %266 {strides = array<i32>} : memref<16x32xf32, #tpu.memory_space<vmem>>, vector<2x32xf32>,
    %268 = vector.extract_strided_slice %107 {offsets = [10, 0], sizes = [2, 32], strides = [1, 1]} : vector<16x32xf32> to vector<2x32xf32>
    %cst_108 = arith.constant dense<0.000000e+00> : vector<2x32xf32>
    %269 = tpu.matmul %266, %118, %cst_108 {dimension_numbers = #tpu.dot_dimension_numbers<[1], [0], [0], [1], [0, 0, 1, 1], [], []>} : vector<2x32xf32>, vector<32x32xf32>, vector<2x32xf32> -> vector<2x32xf32>
    %270 = arith.addf %268, %269 : vector<2x32xf32>
    %271 = arith.negf %270 : vector<2x32xf32>
    %272 = math.exp %271 : vector<2x32xf32>
    %cst_109 = arith.constant 1.000000e+00 : f32
    %273 = vector.broadcast %cst_109 : f32 to vector<2x32xf32>
    %274 = arith.addf %273, %272 : vector<2x32xf32>
    %275 = arith.divf %273, %274 : vector<2x32xf32>
    %276 = vector.extract_strided_slice %112 {offsets = [10, 0], sizes = [2, 32], strides = [1, 1]} : vector<16x32xf32> to vector<2x32xf32>
    %cst_110 = arith.constant dense<0.000000e+00> : vector<2x32xf32>
    %277 = tpu.matmul %266, %119, %cst_110 {dimension_numbers = #tpu.dot_dimension_numbers<[1], [0], [0], [1], [0, 0, 1, 1], [], []>} : vector<2x32xf32>, vector<32x32xf32>, vector<2x32xf32> -> vector<2x32xf32>
    %278 = arith.addf %276, %277 : vector<2x32xf32>
    %279 = arith.negf %278 : vector<2x32xf32>
    %280 = math.exp %279 : vector<2x32xf32>
    %cst_111 = arith.constant 1.000000e+00 : f32
    %281 = vector.broadcast %cst_111 : f32 to vector<2x32xf32>
    %282 = arith.addf %281, %280 : vector<2x32xf32>
    %283 = arith.divf %281, %282 : vector<2x32xf32>
    %284 = vector.extract_strided_slice %117 {offsets = [10, 0], sizes = [2, 32], strides = [1, 1]} : vector<16x32xf32> to vector<2x32xf32>
    %cst_112 = arith.constant dense<0.000000e+00> : vector<2x32xf32>
    %285 = tpu.matmul %266, %120, %cst_112 {dimension_numbers = #tpu.dot_dimension_numbers<[1], [0], [0], [1], [0, 0, 1, 1], [], []>} : vector<2x32xf32>, vector<32x32xf32>, vector<2x32xf32> -> vector<2x32xf32>
    %286 = vector.broadcast %121 : vector<1x32xf32> to vector<2x32xf32>
    %287 = arith.addf %285, %286 : vector<2x32xf32>
    %288 = arith.mulf %275, %287 : vector<2x32xf32>
    %289 = arith.addf %284, %288 : vector<2x32xf32>
    %290 = math.tanh %289 : vector<2x32xf32>
    %cst_113 = arith.constant 1.000000e+00 : f32
    %291 = vector.broadcast %cst_113 : f32 to vector<2x32xf32>
    %292 = arith.subf %291, %283 : vector<2x32xf32>
    %293 = arith.mulf %292, %290 : vector<2x32xf32>
    %294 = arith.mulf %283, %266 : vector<2x32xf32>
    %295 = arith.addf %293, %294 : vector<2x32xf32>
    %c10 = arith.constant 10 : index
    %c0_114 = arith.constant 0 : index
    %296 = vector.load %arg39[%c10, %c0_114] : memref<16x32xf32, #tpu.memory_space<vmem>>, vector<2x32xf32>
    tpu.vector_store %arg39[%c10, %c0_114], %295 {strides = array<i32>} : memref<16x32xf32, #tpu.memory_space<vmem>>, vector<2x32xf32>,
    %297 = vector.extract_strided_slice %107 {offsets = [12, 0], sizes = [2, 32], strides = [1, 1]} : vector<16x32xf32> to vector<2x32xf32>
    %cst_115 = arith.constant dense<0.000000e+00> : vector<2x32xf32>
    %298 = tpu.matmul %295, %118, %cst_115 {dimension_numbers = #tpu.dot_dimension_numbers<[1], [0], [0], [1], [0, 0, 1, 1], [], []>} : vector<2x32xf32>, vector<32x32xf32>, vector<2x32xf32> -> vector<2x32xf32>
    %299 = arith.addf %297, %298 : vector<2x32xf32>
    %300 = arith.negf %299 : vector<2x32xf32>
    %301 = math.exp %300 : vector<2x32xf32>
    %cst_116 = arith.constant 1.000000e+00 : f32
    %302 = vector.broadcast %cst_116 : f32 to vector<2x32xf32>
    %303 = arith.addf %302, %301 : vector<2x32xf32>
    %304 = arith.divf %302, %303 : vector<2x32xf32>
    %305 = vector.extract_strided_slice %112 {offsets = [12, 0], sizes = [2, 32], strides = [1, 1]} : vector<16x32xf32> to vector<2x32xf32>
    %cst_117 = arith.constant dense<0.000000e+00> : vector<2x32xf32>
    %306 = tpu.matmul %295, %119, %cst_117 {dimension_numbers = #tpu.dot_dimension_numbers<[1], [0], [0], [1], [0, 0, 1, 1], [], []>} : vector<2x32xf32>, vector<32x32xf32>, vector<2x32xf32> -> vector<2x32xf32>
    %307 = arith.addf %305, %306 : vector<2x32xf32>
    %308 = arith.negf %307 : vector<2x32xf32>
    %309 = math.exp %308 : vector<2x32xf32>
    %cst_118 = arith.constant 1.000000e+00 : f32
    %310 = vector.broadcast %cst_118 : f32 to vector<2x32xf32>
    %311 = arith.addf %310, %309 : vector<2x32xf32>
    %312 = arith.divf %310, %311 : vector<2x32xf32>
    %313 = vector.extract_strided_slice %117 {offsets = [12, 0], sizes = [2, 32], strides = [1, 1]} : vector<16x32xf32> to vector<2x32xf32>
    %cst_119 = arith.constant dense<0.000000e+00> : vector<2x32xf32>
    %314 = tpu.matmul %295, %120, %cst_119 {dimension_numbers = #tpu.dot_dimension_numbers<[1], [0], [0], [1], [0, 0, 1, 1], [], []>} : vector<2x32xf32>, vector<32x32xf32>, vector<2x32xf32> -> vector<2x32xf32>
    %315 = vector.broadcast %121 : vector<1x32xf32> to vector<2x32xf32>
    %316 = arith.addf %314, %315 : vector<2x32xf32>
    %317 = arith.mulf %304, %316 : vector<2x32xf32>
    %318 = arith.addf %313, %317 : vector<2x32xf32>
    %319 = math.tanh %318 : vector<2x32xf32>
    %cst_120 = arith.constant 1.000000e+00 : f32
    %320 = vector.broadcast %cst_120 : f32 to vector<2x32xf32>
    %321 = arith.subf %320, %312 : vector<2x32xf32>
    %322 = arith.mulf %321, %319 : vector<2x32xf32>
    %323 = arith.mulf %312, %295 : vector<2x32xf32>
    %324 = arith.addf %322, %323 : vector<2x32xf32>
    %c12 = arith.constant 12 : index
    %c0_121 = arith.constant 0 : index
    %325 = vector.load %arg39[%c12, %c0_121] : memref<16x32xf32, #tpu.memory_space<vmem>>, vector<2x32xf32>
    tpu.vector_store %arg39[%c12, %c0_121], %324 {strides = array<i32>} : memref<16x32xf32, #tpu.memory_space<vmem>>, vector<2x32xf32>,
    %326 = vector.extract_strided_slice %107 {offsets = [14, 0], sizes = [2, 32], strides = [1, 1]} : vector<16x32xf32> to vector<2x32xf32>
    %cst_122 = arith.constant dense<0.000000e+00> : vector<2x32xf32>
    %327 = tpu.matmul %324, %118, %cst_122 {dimension_numbers = #tpu.dot_dimension_numbers<[1], [0], [0], [1], [0, 0, 1, 1], [], []>} : vector<2x32xf32>, vector<32x32xf32>, vector<2x32xf32> -> vector<2x32xf32>
    %328 = arith.addf %326, %327 : vector<2x32xf32>
    %329 = arith.negf %328 : vector<2x32xf32>
    %330 = math.exp %329 : vector<2x32xf32>
    %cst_123 = arith.constant 1.000000e+00 : f32
    %331 = vector.broadcast %cst_123 : f32 to vector<2x32xf32>
    %332 = arith.addf %331, %330 : vector<2x32xf32>
    %333 = arith.divf %331, %332 : vector<2x32xf32>
    %334 = vector.extract_strided_slice %112 {offsets = [14, 0], sizes = [2, 32], strides = [1, 1]} : vector<16x32xf32> to vector<2x32xf32>
    %cst_124 = arith.constant dense<0.000000e+00> : vector<2x32xf32>
    %335 = tpu.matmul %324, %119, %cst_124 {dimension_numbers = #tpu.dot_dimension_numbers<[1], [0], [0], [1], [0, 0, 1, 1], [], []>} : vector<2x32xf32>, vector<32x32xf32>, vector<2x32xf32> -> vector<2x32xf32>
    %336 = arith.addf %334, %335 : vector<2x32xf32>
    %337 = arith.negf %336 : vector<2x32xf32>
    %338 = math.exp %337 : vector<2x32xf32>
    %cst_125 = arith.constant 1.000000e+00 : f32
    %339 = vector.broadcast %cst_125 : f32 to vector<2x32xf32>
    %340 = arith.addf %339, %338 : vector<2x32xf32>
    %341 = arith.divf %339, %340 : vector<2x32xf32>
    %342 = vector.extract_strided_slice %117 {offsets = [14, 0], sizes = [2, 32], strides = [1, 1]} : vector<16x32xf32> to vector<2x32xf32>
    %cst_126 = arith.constant dense<0.000000e+00> : vector<2x32xf32>
    %343 = tpu.matmul %324, %120, %cst_126 {dimension_numbers = #tpu.dot_dimension_numbers<[1], [0], [0], [1], [0, 0, 1, 1], [], []>} : vector<2x32xf32>, vector<32x32xf32>, vector<2x32xf32> -> vector<2x32xf32>
    %344 = vector.broadcast %121 : vector<1x32xf32> to vector<2x32xf32>
    %345 = arith.addf %343, %344 : vector<2x32xf32>
    %346 = arith.mulf %333, %345 : vector<2x32xf32>
    %347 = arith.addf %342, %346 : vector<2x32xf32>
    %348 = math.tanh %347 : vector<2x32xf32>
    %cst_127 = arith.constant 1.000000e+00 : f32
    %349 = vector.broadcast %cst_127 : f32 to vector<2x32xf32>
    %350 = arith.subf %349, %341 : vector<2x32xf32>
    %351 = arith.mulf %350, %348 : vector<2x32xf32>
    %352 = arith.mulf %341, %324 : vector<2x32xf32>
    %353 = arith.addf %351, %352 : vector<2x32xf32>
    %c14 = arith.constant 14 : index
    %c0_128 = arith.constant 0 : index
    %354 = vector.load %arg39[%c14, %c0_128] : memref<16x32xf32, #tpu.memory_space<vmem>>, vector<2x32xf32>
    tpu.vector_store %arg39[%c14, %c0_128], %353 {strides = array<i32>} : memref<16x32xf32, #tpu.memory_space<vmem>>, vector<2x32xf32>,
    %c0_129 = arith.constant 0 : index
    %c0_130 = arith.constant 0 : index
    %355 = vector.load %arg38[%c0_129, %c0_130] : memref<2x32xf32, #tpu.memory_space<vmem>>, vector<2x32xf32>
    tpu.vector_store %arg38[%c0_129, %c0_130], %353 {strides = array<i32>} : memref<2x32xf32, #tpu.memory_space<vmem>>, vector<2x32xf32>,
    %c0_131 = arith.constant 0 : index
    %c0_132 = arith.constant 0 : index
    %356 = vector.load %arg39[%c0_131, %c0_132] : memref<16x32xf32, #tpu.memory_space<vmem>>, vector<16x32xf32>
    %c0_133 = arith.constant 0 : index
    %c0_134 = arith.constant 0 : index
    %357 = vector.load %arg23[%c0_133, %c0_134] : memref<32x32xf32, #tpu.memory_space<vmem>>, vector<32x32xf32>
    %c0_135 = arith.constant 0 : index
    %c0_136 = arith.constant 0 : index
    %358 = vector.load %arg24[%c0_135, %c0_136] : memref<1x32xf32, #tpu.memory_space<vmem>>, vector<1x32xf32>
    %c0_137 = arith.constant 0 : index
    %c0_138 = arith.constant 0 : index
    %359 = vector.load %arg25[%c0_137, %c0_138] : memref<1x32xf32, #tpu.memory_space<vmem>>, vector<1x32xf32>
    %c0_139 = arith.constant 0 : index
    %c0_140 = arith.constant 0 : index
    %360 = vector.load %arg26[%c0_139, %c0_140] : memref<1x32xf32, #tpu.memory_space<vmem>>, vector<1x32xf32>
    %cst_141 = arith.constant dense<0.000000e+00> : vector<16x32xf32>
    %361 = tpu.matmul %356, %357, %cst_141 {dimension_numbers = #tpu.dot_dimension_numbers<[1], [0], [0], [1], [0, 0, 1, 1], [], []>} : vector<16x32xf32>, vector<32x32xf32>, vector<16x32xf32> -> vector<16x32xf32>
    %362 = vector.broadcast %358 : vector<1x32xf32> to vector<16x32xf32>
    %363 = arith.addf %361, %362 : vector<16x32xf32>
    %cst_142 = arith.constant dense<0.000000e+00> : vector<16xf32>
    %364 = vector.multi_reduction <add>, %363, %cst_142 [1] : vector<16x32xf32> to vector<16xf32>
    %365 = vector.shape_cast %364 : vector<16xf32> to vector<16x1xf32>
    %cst_143 = arith.constant 3.200000e+01 : f32
    %366 = vector.broadcast %cst_143 : f32 to vector<16x1xf32>
    %367 = arith.divf %365, %366 : vector<16x1xf32>
    %368 = vector.broadcast %367 : vector<16x1xf32> to vector<16x32xf32>
    %369 = arith.subf %363, %368 : vector<16x32xf32>
    %370 = arith.mulf %369, %369 : vector<16x32xf32>
    %cst_144 = arith.constant dense<0.000000e+00> : vector<16xf32>
    %371 = vector.multi_reduction <add>, %370, %cst_144 [1] : vector<16x32xf32> to vector<16xf32>
    %372 = vector.shape_cast %371 : vector<16xf32> to vector<16x1xf32>
    %cst_145 = arith.constant 3.200000e+01 : f32
    %373 = vector.broadcast %cst_145 : f32 to vector<16x1xf32>
    %374 = arith.divf %372, %373 : vector<16x1xf32>
    %375 = vector.broadcast %367 : vector<16x1xf32> to vector<16x32xf32>
    %376 = arith.subf %363, %375 : vector<16x32xf32>
    %cst_146 = arith.constant 9.99999974E-6 : f32
    %377 = vector.broadcast %cst_146 : f32 to vector<16x1xf32>
    %378 = arith.addf %374, %377 : vector<16x1xf32>
    %379 = math.rsqrt %378 : vector<16x1xf32>
    %380 = vector.broadcast %379 : vector<16x1xf32> to vector<16x32xf32>
    %381 = arith.mulf %376, %380 : vector<16x32xf32>
    %382 = vector.broadcast %359 : vector<1x32xf32> to vector<16x32xf32>
    %383 = arith.mulf %381, %382 : vector<16x32xf32>
    %384 = vector.broadcast %360 : vector<1x32xf32> to vector<16x32xf32>
    %385 = arith.addf %383, %384 : vector<16x32xf32>
    %cst_147 = arith.constant 0.000000e+00 : f32
    %386 = vector.broadcast %cst_147 : f32 to vector<16x32xf32>
    %387 = arith.cmpf oge, %385, %386 : vector<16x32xf32>
    %cst_148 = arith.constant 0.00999999977 : f32
    %388 = vector.broadcast %cst_148 : f32 to vector<16x32xf32>
    %389 = arith.mulf %388, %385 : vector<16x32xf32>
    %390 = arith.select %387, %385, %389 : vector<16x32xi1>, vector<16x32xf32>
    %c0_149 = arith.constant 0 : index
    %c0_150 = arith.constant 0 : index
    %391 = vector.load %arg27[%c0_149, %c0_150] : memref<32x32xf32, #tpu.memory_space<vmem>>, vector<32x32xf32>
    %c0_151 = arith.constant 0 : index
    %c0_152 = arith.constant 0 : index
    %392 = vector.load %arg28[%c0_151, %c0_152] : memref<1x32xf32, #tpu.memory_space<vmem>>, vector<1x32xf32>
    %c0_153 = arith.constant 0 : index
    %c0_154 = arith.constant 0 : index
    %393 = vector.load %arg29[%c0_153, %c0_154] : memref<1x32xf32, #tpu.memory_space<vmem>>, vector<1x32xf32>
    %c0_155 = arith.constant 0 : index
    %c0_156 = arith.constant 0 : index
    %394 = vector.load %arg30[%c0_155, %c0_156] : memref<1x32xf32, #tpu.memory_space<vmem>>, vector<1x32xf32>
    %cst_157 = arith.constant dense<0.000000e+00> : vector<16x32xf32>
    %395 = tpu.matmul %390, %391, %cst_157 {dimension_numbers = #tpu.dot_dimension_numbers<[1], [0], [0], [1], [0, 0, 1, 1], [], []>} : vector<16x32xf32>, vector<32x32xf32>, vector<16x32xf32> -> vector<16x32xf32>
    %396 = vector.broadcast %392 : vector<1x32xf32> to vector<16x32xf32>
    %397 = arith.addf %395, %396 : vector<16x32xf32>
    %cst_158 = arith.constant dense<0.000000e+00> : vector<16xf32>
    %398 = vector.multi_reduction <add>, %397, %cst_158 [1] : vector<16x32xf32> to vector<16xf32>
    %399 = vector.shape_cast %398 : vector<16xf32> to vector<16x1xf32>
    %cst_159 = arith.constant 3.200000e+01 : f32
    %400 = vector.broadcast %cst_159 : f32 to vector<16x1xf32>
    %401 = arith.divf %399, %400 : vector<16x1xf32>
    %402 = vector.broadcast %401 : vector<16x1xf32> to vector<16x32xf32>
    %403 = arith.subf %397, %402 : vector<16x32xf32>
    %404 = arith.mulf %403, %403 : vector<16x32xf32>
    %cst_160 = arith.constant dense<0.000000e+00> : vector<16xf32>
    %405 = vector.multi_reduction <add>, %404, %cst_160 [1] : vector<16x32xf32> to vector<16xf32>
    %406 = vector.shape_cast %405 : vector<16xf32> to vector<16x1xf32>
    %cst_161 = arith.constant 3.200000e+01 : f32
    %407 = vector.broadcast %cst_161 : f32 to vector<16x1xf32>
    %408 = arith.divf %406, %407 : vector<16x1xf32>
    %409 = vector.broadcast %401 : vector<16x1xf32> to vector<16x32xf32>
    %410 = arith.subf %397, %409 : vector<16x32xf32>
    %cst_162 = arith.constant 9.99999974E-6 : f32
    %411 = vector.broadcast %cst_162 : f32 to vector<16x1xf32>
    %412 = arith.addf %408, %411 : vector<16x1xf32>
    %413 = math.rsqrt %412 : vector<16x1xf32>
    %414 = vector.broadcast %413 : vector<16x1xf32> to vector<16x32xf32>
    %415 = arith.mulf %410, %414 : vector<16x32xf32>
    %416 = vector.broadcast %393 : vector<1x32xf32> to vector<16x32xf32>
    %417 = arith.mulf %415, %416 : vector<16x32xf32>
    %418 = vector.broadcast %394 : vector<1x32xf32> to vector<16x32xf32>
    %419 = arith.addf %417, %418 : vector<16x32xf32>
    %cst_163 = arith.constant 0.000000e+00 : f32
    %420 = vector.broadcast %cst_163 : f32 to vector<16x32xf32>
    %421 = arith.cmpf oge, %419, %420 : vector<16x32xf32>
    %cst_164 = arith.constant 0.00999999977 : f32
    %422 = vector.broadcast %cst_164 : f32 to vector<16x32xf32>
    %423 = arith.mulf %422, %419 : vector<16x32xf32>
    %424 = arith.select %421, %419, %423 : vector<16x32xi1>, vector<16x32xf32>
    %c0_165 = arith.constant 0 : index
    %c0_166 = arith.constant 0 : index
    %425 = vector.load %arg31[%c0_165, %c0_166] : memref<32x32xf32, #tpu.memory_space<vmem>>, vector<32x32xf32>
    %c0_167 = arith.constant 0 : index
    %c0_168 = arith.constant 0 : index
    %426 = vector.load %arg32[%c0_167, %c0_168] : memref<1x32xf32, #tpu.memory_space<vmem>>, vector<1x32xf32>
    %c0_169 = arith.constant 0 : index
    %c0_170 = arith.constant 0 : index
    %427 = vector.load %arg33[%c0_169, %c0_170] : memref<1x32xf32, #tpu.memory_space<vmem>>, vector<1x32xf32>
    %c0_171 = arith.constant 0 : index
    %c0_172 = arith.constant 0 : index
    %428 = vector.load %arg34[%c0_171, %c0_172] : memref<1x32xf32, #tpu.memory_space<vmem>>, vector<1x32xf32>
    %cst_173 = arith.constant dense<0.000000e+00> : vector<16x32xf32>
    %429 = tpu.matmul %424, %425, %cst_173 {dimension_numbers = #tpu.dot_dimension_numbers<[1], [0], [0], [1], [0, 0, 1, 1], [], []>} : vector<16x32xf32>, vector<32x32xf32>, vector<16x32xf32> -> vector<16x32xf32>
    %430 = vector.broadcast %426 : vector<1x32xf32> to vector<16x32xf32>
    %431 = arith.addf %429, %430 : vector<16x32xf32>
    %cst_174 = arith.constant dense<0.000000e+00> : vector<16xf32>
    %432 = vector.multi_reduction <add>, %431, %cst_174 [1] : vector<16x32xf32> to vector<16xf32>
    %433 = vector.shape_cast %432 : vector<16xf32> to vector<16x1xf32>
    %cst_175 = arith.constant 3.200000e+01 : f32
    %434 = vector.broadcast %cst_175 : f32 to vector<16x1xf32>
    %435 = arith.divf %433, %434 : vector<16x1xf32>
    %436 = vector.broadcast %435 : vector<16x1xf32> to vector<16x32xf32>
    %437 = arith.subf %431, %436 : vector<16x32xf32>
    %438 = arith.mulf %437, %437 : vector<16x32xf32>
    %cst_176 = arith.constant dense<0.000000e+00> : vector<16xf32>
    %439 = vector.multi_reduction <add>, %438, %cst_176 [1] : vector<16x32xf32> to vector<16xf32>
    %440 = vector.shape_cast %439 : vector<16xf32> to vector<16x1xf32>
    %cst_177 = arith.constant 3.200000e+01 : f32
    %441 = vector.broadcast %cst_177 : f32 to vector<16x1xf32>
    %442 = arith.divf %440, %441 : vector<16x1xf32>
    %443 = vector.broadcast %435 : vector<16x1xf32> to vector<16x32xf32>
    %444 = arith.subf %431, %443 : vector<16x32xf32>
    %cst_178 = arith.constant 9.99999974E-6 : f32
    %445 = vector.broadcast %cst_178 : f32 to vector<16x1xf32>
    %446 = arith.addf %442, %445 : vector<16x1xf32>
    %447 = math.rsqrt %446 : vector<16x1xf32>
    %448 = vector.broadcast %447 : vector<16x1xf32> to vector<16x32xf32>
    %449 = arith.mulf %444, %448 : vector<16x32xf32>
    %450 = vector.broadcast %427 : vector<1x32xf32> to vector<16x32xf32>
    %451 = arith.mulf %449, %450 : vector<16x32xf32>
    %452 = vector.broadcast %428 : vector<1x32xf32> to vector<16x32xf32>
    %453 = arith.addf %451, %452 : vector<16x32xf32>
    %cst_179 = arith.constant 0.000000e+00 : f32
    %454 = vector.broadcast %cst_179 : f32 to vector<16x32xf32>
    %455 = arith.cmpf oge, %453, %454 : vector<16x32xf32>
    %cst_180 = arith.constant 0.00999999977 : f32
    %456 = vector.broadcast %cst_180 : f32 to vector<16x32xf32>
    %457 = arith.mulf %456, %453 : vector<16x32xf32>
    %458 = arith.select %455, %453, %457 : vector<16x32xi1>, vector<16x32xf32>
    %c0_181 = arith.constant 0 : index
    %c0_182 = arith.constant 0 : index
    %459 = vector.load %arg35[%c0_181, %c0_182] : memref<32x64xf32, #tpu.memory_space<vmem>>, vector<32x64xf32>
    %cst_183 = arith.constant dense<0.000000e+00> : vector<16x64xf32>
    %460 = tpu.matmul %458, %459, %cst_183 {dimension_numbers = #tpu.dot_dimension_numbers<[1], [0], [0], [1], [0, 0, 1, 1], [], []>} : vector<16x32xf32>, vector<32x64xf32>, vector<16x64xf32> -> vector<16x64xf32>
    %c0_184 = arith.constant 0 : index
    %c0_185 = arith.constant 0 : index
    %461 = vector.load %arg36[%c0_184, %c0_185] : memref<1x64xf32, #tpu.memory_space<vmem>>, vector<1x64xf32>
    %462 = vector.broadcast %461 : vector<1x64xf32> to vector<16x64xf32>
    %463 = arith.addf %460, %462 : vector<16x64xf32>
    %cst_186 = arith.constant 0.000000e+00 : f32
    %464 = vector.broadcast %cst_186 : f32 to vector<16x64xf32>
    %465 = arith.minimumf %463, %464 : vector<16x64xf32>
    %466 = math.absf %463 : vector<16x64xf32>
    %cst_187 = arith.constant 0.000000e+00 : f32
    %467 = vector.broadcast %cst_187 : f32 to vector<16x64xf32>
    %468 = arith.subf %467, %466 : vector<16x64xf32>
    %469 = math.exp %468 : vector<16x64xf32>
    %cst_188 = arith.constant 1.000000e+00 : f32
    %470 = vector.broadcast %cst_188 : f32 to vector<16x64xf32>
    %471 = arith.addf %470, %469 : vector<16x64xf32>
    %472 = math.log %471 : vector<16x64xf32>
    %473 = arith.subf %465, %472 : vector<16x64xf32>
    %cst_189 = arith.constant 2.30258512 : f32
    %474 = vector.broadcast %cst_189 : f32 to vector<16x64xf32>
    %475 = arith.mulf %474, %473 : vector<16x64xf32>
    %476 = math.exp %475 : vector<16x64xf32>
    %cst_190 = arith.constant 2.000000e+00 : f32
    %477 = vector.broadcast %cst_190 : f32 to vector<16x64xf32>
    %478 = arith.mulf %477, %476 : vector<16x64xf32>
    %cst_191 = arith.constant 1.000000e-07 : f32
    %479 = vector.broadcast %cst_191 : f32 to vector<16x64xf32>
    %480 = arith.addf %478, %479 : vector<16x64xf32>
    %c0_192 = arith.constant 0 : index
    %c0_193 = arith.constant 0 : index
    %481 = vector.load %arg37[%c0_192, %c0_193] : memref<16x64xf32, #tpu.memory_space<vmem>>, vector<16x64xf32>
    tpu.vector_store %arg37[%c0_192, %c0_193], %480 {strides = array<i32>} : memref<16x64xf32, #tpu.memory_space<vmem>>, vector<16x64xf32>,
    return
  }
}

</mosaic_0001>

<llo_original>
// kernel: tpu_custom_call.1
$region0: #{tpu_custom_call.1}
  #allocation0 [shape = 'u32[]', space=smem, size = 0x4, offset = 0x4, fixed_abs, tag = 'smem constant byte address 0x4 - core index']
  #allocation1 [shape = 'u32[72,128]{1,0:T(1,128)}', space=vmem, size = 0x9000, scoped, tag = 'internal scratch']
  #allocation2 [shape = 'f32[16,32]{1,0:T(8,128)}', space=vmem, size = 0x2000, scoped, tag = 'scratch operand']
  %s0 = inlined_call_operand.smem [shape: u32[39], index: -1, kind: input, shape index: {}]
  %s1 = sld [smem:[%s0]]
  %s2 = scalar_lea.smem %s0, 1
  %s3 = sld [smem:[%s2]]
  %s4 = scalar_lea.smem %s0, 2
  %s5 = sld [smem:[%s4]]
  %s6 = scalar_lea.smem %s0, 3
  %s7 = sld [smem:[%s6]]
  %s8 = scalar_lea.smem %s0, 4
  %s9 = sld [smem:[%s8]]
  %s10 = scalar_lea.smem %s0, 5
  %s11 = sld [smem:[%s10]]
  %s12 = scalar_lea.smem %s0, 6
  %s13 = sld [smem:[%s12]]
  %s14 = scalar_lea.smem %s0, 7
  %s15 = sld [smem:[%s14]]
  %s16 = scalar_lea.smem %s0, 8
  %s17 = sld [smem:[%s16]]
  %s18 = scalar_lea.smem %s0, 9
  %s19 = sld [smem:[%s18]]
  %s20 = scalar_lea.smem %s0, 10
  %s21 = sld [smem:[%s20]]
  %s22 = scalar_lea.smem %s0, 11
  %s23 = sld [smem:[%s22]]
  %s24 = scalar_lea.smem %s0, 12
  %s25 = sld [smem:[%s24]]
  %s26 = scalar_lea.smem %s0, 13
  %s27 = sld [smem:[%s26]]
  %s28 = scalar_lea.smem %s0, 14
  %s29 = sld [smem:[%s28]]
  %s30 = scalar_lea.smem %s0, 15
  %s31 = sld [smem:[%s30]]
  %s32 = scalar_lea.smem %s0, 16
  %s33 = sld [smem:[%s32]]
  %s34 = scalar_lea.smem %s0, 17
  %s35 = sld [smem:[%s34]]
  %s36 = scalar_lea.smem %s0, 18
  %s37 = sld [smem:[%s36]]
  %s38 = scalar_lea.smem %s0, 19
  %s39 = sld [smem:[%s38]]
  %s40 = scalar_lea.smem %s0, 20
  %s41 = sld [smem:[%s40]]
  %s42 = scalar_lea.smem %s0, 21
  %s43 = sld [smem:[%s42]]
  %s44 = scalar_lea.smem %s0, 22
  %s45 = sld [smem:[%s44]]
  %s46 = scalar_lea.smem %s0, 23
  %s47 = sld [smem:[%s46]]
  %s48 = scalar_lea.smem %s0, 24
  %s49 = sld [smem:[%s48]]
  %s50 = scalar_lea.smem %s0, 25
  %s51 = sld [smem:[%s50]]
  %s52 = scalar_lea.smem %s0, 26
  %s53 = sld [smem:[%s52]]
  %s54 = scalar_lea.smem %s0, 27
  %s55 = sld [smem:[%s54]]
  %s56 = scalar_lea.smem %s0, 28
  %s57 = sld [smem:[%s56]]
  %s58 = scalar_lea.smem %s0, 29
  %s59 = sld [smem:[%s58]]
  %s60 = scalar_lea.smem %s0, 30
  %s61 = sld [smem:[%s60]]
  %s62 = scalar_lea.smem %s0, 31
  %s63 = sld [smem:[%s62]]
  %s64 = scalar_lea.smem %s0, 32
  %s65 = sld [smem:[%s64]]
  %s66 = scalar_lea.smem %s0, 33
  %s67 = sld [smem:[%s66]]
  %s68 = scalar_lea.smem %s0, 34
  %s69 = sld [smem:[%s68]]
  %s70 = scalar_lea.smem %s0, 35
  %s71 = sld [smem:[%s70]]
  %s72 = scalar_lea.smem %s0, 36
  %s73 = sld [smem:[%s72]]
  %s74 = scalar_lea.smem %s0, 37
  %s75 = sld [smem:[%s74]]
  %s76 = scalar_lea.smem %s0, 38
  %s77 = sld [smem:[%s76]]
  %78 = xla_tuple %s75, %s77
  %s79 = sld [smem:[#allocation0]]
  $region302: #{tpu_custom_call.1} parent=0
    _
  %s81 = ssub.s32 1, %s79
  %s82 = scalar_select 0, %s81, %s79
  $region1: #{tpu_custom_call.1} parent=0
    #allocation3 [shape = 'u8[8192]{0}', space=vmem, size = 0x2000, scoped, tag = 'input window, operand 0, single buffered']
    #allocation4 [shape = 's32[1]{0}', space=sflag, size = 0x4, scoped, tag = 'scoped memory for tpu_custom_call.1']
    #allocation5 [shape = 's32[1]{0}', space=sflag, size = 0x4, scoped, tag = 'scoped memory for tpu_custom_call.1']
    #allocation6 [shape = 'u8[8192]{0}', space=vmem, size = 0x2000, scoped, tag = 'input window, operand 1, single buffered']
    #allocation7 [shape = 's32[1]{0}', space=sflag, size = 0x4, scoped, tag = 'scoped memory for tpu_custom_call.1']
    #allocation8 [shape = 'u8[512]{0}', space=vmem, size = 0x400, scoped, tag = 'input window, operand 3, single buffered']
    #allocation9 [shape = 'u8[512]{0}', space=vmem, size = 0x400, scoped, tag = 'input window, operand 4, single buffered']
    #allocation10 [shape = 's32[1]{0}', space=sflag, size = 0x4, scoped, tag = 'scoped memory for tpu_custom_call.1']
    #allocation11 [shape = 'u8[16384]{0}', space=vmem, size = 0x4000, scoped, tag = 'input window, operand 5, single buffered']
    #allocation12 [shape = 'u8[512]{0}', space=vmem, size = 0x400, scoped, tag = 'input window, operand 6, single buffered']
    #allocation13 [shape = 's32[1]{0}', space=sflag, size = 0x4, scoped, tag = 'scoped memory for tpu_custom_call.1']
    #allocation14 [shape = 'u8[512]{0}', space=vmem, size = 0x400, scoped, tag = 'input window, operand 7, single buffered']
    #allocation15 [shape = 'u8[512]{0}', space=vmem, size = 0x400, scoped, tag = 'input window, operand 8, single buffered']
    #allocation16 [shape = 's32[1]{0}', space=sflag, size = 0x4, scoped, tag = 'scoped memory for tpu_custom_call.1']
    #allocation17 [shape = 'u8[16384]{0}', space=vmem, size = 0x4000, scoped, tag = 'input window, operand 9, single buffered']
    #allocation18 [shape = 'u8[512]{0}', space=vmem, size = 0x400, scoped, tag = 'input window, operand 10, single buffered']
    #allocation19 [shape = 's32[1]{0}', space=sflag, size = 0x4, scoped, tag = 'scoped memory for tpu_custom_call.1']
    #allocation20 [shape = 'u8[512]{0}', space=vmem, size = 0x400, scoped, tag = 'input window, operand 11, single buffered']
    #allocation21 [shape = 'u8[512]{0}', space=vmem, size = 0x400, scoped, tag = 'input window, operand 12, single buffered']
    #allocation22 [shape = 's32[1]{0}', space=sflag, size = 0x4, scoped, tag = 'scoped memory for tpu_custom_call.1']
    #allocation23 [shape = 'u8[16384]{0}', space=vmem, size = 0x4000, scoped, tag = 'input window, operand 13, single buffered']
    #allocation24 [shape = 'u8[16384]{0}', space=vmem, size = 0x4000, scoped, tag = 'input window, operand 14, single buffered']
    #allocation25 [shape = 's32[1]{0}', space=sflag, size = 0x4, scoped, tag = 'scoped memory for tpu_custom_call.1']
    #allocation26 [shape = 'u8[16384]{0}', space=vmem, size = 0x4000, scoped, tag = 'input window, operand 15, single buffered']
    #allocation27 [shape = 'u8[16384]{0}', space=vmem, size = 0x4000, scoped, tag = 'input window, operand 16, single buffered']
    #allocation28 [shape = 's32[1]{0}', space=sflag, size = 0x4, scoped, tag = 'scoped memory for tpu_custom_call.1']
    #allocation29 [shape = 'u8[16384]{0}', space=vmem, size = 0x4000, scoped, tag = 'input window, operand 17, single buffered']
    #allocation30 [shape = 'u8[16384]{0}', space=vmem, size = 0x4000, scoped, tag = 'input window, operand 18, single buffered']
    #allocation31 [shape = 's32[1]{0}', space=sflag, size = 0x4, scoped, tag = 'scoped memory for tpu_custom_call.1']
    #allocation32 [shape = 'u8[512]{0}', space=vmem, size = 0x400, scoped, tag = 'input window, operand 19, single buffered']
    #allocation33 [shape = 'u8[512]{0}', space=vmem, size = 0x400, scoped, tag = 'input window, operand 20, single buffered']
    #allocation34 [shape = 's32[1]{0}', space=sflag, size = 0x4, scoped, tag = 'scoped memory for tpu_custom_call.1']
    #allocation35 [shape = 'u8[512]{0}', space=vmem, size = 0x400, scoped, tag = 'input window, operand 21, single buffered']
    #allocation36 [shape = 'u8[512]{0}', space=vmem, size = 0x400, scoped, tag = 'input window, operand 22, single buffered']
    #allocation37 [shape = 's32[1]{0}', space=sflag, size = 0x4, scoped, tag = 'scoped memory for tpu_custom_call.1']
    #allocation38 [shape = 'u8[16384]{0}', space=vmem, size = 0x4000, scoped, tag = 'input window, operand 23, single buffered']
    #allocation39 [shape = 'u8[512]{0}', space=vmem, size = 0x400, scoped, tag = 'input window, operand 24, single buffered']
    #allocation40 [shape = 's32[1]{0}', space=sflag, size = 0x4, scoped, tag = 'scoped memory for tpu_custom_call.1']
    #allocation41 [shape = 'u8[512]{0}', space=vmem, size = 0x400, scoped, tag = 'input window, operand 25, single buffered']
    #allocation42 [shape = 'u8[512]{0}', space=vmem, size = 0x400, scoped, tag = 'input window, operand 26, single buffered']
    #allocation43 [shape = 's32[1]{0}', space=sflag, size = 0x4, scoped, tag = 'scoped memory for tpu_custom_call.1']
    #allocation44 [shape = 'u8[16384]{0}', space=vmem, size = 0x4000, scoped, tag = 'input window, operand 27, single buffered']
    #allocation45 [shape = 'u8[512]{0}', space=vmem, size = 0x400, scoped, tag = 'input window, operand 28, single buffered']
    #allocation46 [shape = 's32[1]{0}', space=sflag, size = 0x4, scoped, tag = 'scoped memory for tpu_custom_call.1']
    #allocation47 [shape = 'u8[512]{0}', space=vmem, size = 0x400, scoped, tag = 'input window, operand 29, single buffered']
    #allocation48 [shape = 'u8[512]{0}', space=vmem, size = 0x400, scoped, tag = 'input window, operand 30, single buffered']
    #allocation49 [shape = 's32[1]{0}', space=sflag, size = 0x4, scoped, tag = 'scoped memory for tpu_custom_call.1']
    #allocation50 [shape = 'u8[16384]{0}', space=vmem, size = 0x4000, scoped, tag = 'input window, operand 31, single buffered']
    #allocation51 [shape = 'u8[512]{0}', space=vmem, size = 0x400, scoped, tag = 'input window, operand 32, single buffered']
    #allocation52 [shape = 's32[1]{0}', space=sflag, size = 0x4, scoped, tag = 'scoped memory for tpu_custom_call.1']
    #allocation53 [shape = 'u8[512]{0}', space=vmem, size = 0x400, scoped, tag = 'input window, operand 33, single buffered']
    #allocation54 [shape = 'u8[512]{0}', space=vmem, size = 0x400, scoped, tag = 'input window, operand 34, single buffered']
    #allocation55 [shape = 's32[1]{0}', space=sflag, size = 0x4, scoped, tag = 'scoped memory for tpu_custom_call.1']
    #allocation56 [shape = 'u8[8192]{0}', space=vmem, size = 0x2000, scoped, tag = 'output window, operand 0, single buffered']
    #allocation57 [shape = 'u8[1024]{0}', space=vmem, size = 0x400, scoped, tag = 'output window, operand 1, single buffered']
    #allocation58 [shape = 's32[1]{0}', space=sflag, size = 0x4, scoped, tag = 'scoped memory for tpu_custom_call.1']
    %83 = vsyncpa [#allocation4], 0
    %84 = vsyncpa [#allocation7], 0
    %85 = vsyncpa [#allocation10], 0
    %86 = vsyncpa [#allocation13], 0
    %87 = vsyncpa [#allocation16], 0
    %88 = vsyncpa [#allocation19], 0
    %89 = vsyncpa [#allocation22], 0
    %90 = vsyncpa [#allocation25], 0
    %91 = vsyncpa [#allocation28], 0
    %92 = vsyncpa [#allocation31], 0
    %93 = vsyncpa [#allocation34], 0
    %94 = vsyncpa [#allocation37], 0
    %95 = vsyncpa [#allocation40], 0
    %96 = vsyncpa [#allocation43], 0
    %97 = vsyncpa [#allocation46], 0
    %98 = vsyncpa [#allocation49], 0
    %99 = vsyncpa [#allocation52], 0
    %100 = vsyncpa [#allocation55], 0
    %101 = vsyncpa [#allocation5], 0
    %102 = vsyncpa [#allocation58], 0
    // Predicated region
    $region2: #{tpu_custom_call.1} parent=1 // pred_check
      _
    $region3: #{tpu_custom_call.1} parent=1 // pred_check_branch
      %104 = sbr.rel (0) target = $region5
    $region4: #{tpu_custom_call.1} parent=1 // pred_region
      %106 = vsyncadd [#allocation4], 0
      %s107 = sshll.u32 %s1, 4
      %s108 = int_to_ptr.hbm [resolvable:$true] %s107
      %s109 = sshll.u32 [#allocation3], 4
      %s110 = int_to_ptr.vmem [resolvable:$true] %s109
      %115 = dma.hbm_to_vmem [thread:$0]  %s108, 256, %s110, [#allocation4], 128, 128, 8
    $region5: #{tpu_custom_call.1} parent=1 // pred_fallthru
      _
    // Predicated region
    $region6: #{tpu_custom_call.1} parent=1 // pred_check
      _
    $region7: #{tpu_custom_call.1} parent=1 // pred_check_branch
      %117 = sbr.rel (0) target = $region9
    $region8: #{tpu_custom_call.1} parent=1 // pred_region
      %119 = vsyncadd [#allocation7], 0
      %s120 = sshll.u32 %s3, 4
      %s121 = int_to_ptr.hbm [resolvable:$true] %s120
      %s122 = sshll.u32 [#allocation6], 4
      %s123 = int_to_ptr.vmem [resolvable:$true] %s122
      %128 = dma.hbm_to_vmem [thread:$0]  %s121, 256, %s123, [#allocation7], 128, 128, 8
    $region9: #{tpu_custom_call.1} parent=1 // pred_fallthru
      _
    // Predicated region
    $region10: #{tpu_custom_call.1} parent=1 // pred_check
      _
    $region11: #{tpu_custom_call.1} parent=1 // pred_check_branch
      %130 = sbr.rel (0) target = $region13
    $region12: #{tpu_custom_call.1} parent=1 // pred_region
      _
    $region13: #{tpu_custom_call.1} parent=1 // pred_fallthru
      _
    // Predicated region
    $region14: #{tpu_custom_call.1} parent=1 // pred_check
      _
    $region15: #{tpu_custom_call.1} parent=1 // pred_check_branch
      %132 = sbr.rel (0) target = $region17
    $region16: #{tpu_custom_call.1} parent=1 // pred_region
      %134 = vsyncadd [#allocation7], 0
      %s136 = sshll.u32 %s7, 4
      %s137 = int_to_ptr.hbm [resolvable:$true] %s136
      %s138 = sshll.u32 [#allocation8], 4
      %s139 = int_to_ptr.vmem [resolvable:$true] %s138
      %141 = dma.hbm_to_vmem [thread:$0]  %s137, 16, %s139, [#allocation7]
    $region17: #{tpu_custom_call.1} parent=1 // pred_fallthru
      _
    // Predicated region
    $region18: #{tpu_custom_call.1} parent=1 // pred_check
      _
    $region19: #{tpu_custom_call.1} parent=1 // pred_check_branch
      %143 = sbr.rel (0) target = $region21
    $region20: #{tpu_custom_call.1} parent=1 // pred_region
      %145 = vsyncadd [#allocation10], 0
      %s147 = sshll.u32 %s9, 4
      %s148 = int_to_ptr.hbm [resolvable:$true] %s147
      %s149 = sshll.u32 [#allocation9], 4
      %s150 = int_to_ptr.vmem [resolvable:$true] %s149
      %152 = dma.hbm_to_vmem [thread:$0]  %s148, 16, %s150, [#allocation10]
    $region21: #{tpu_custom_call.1} parent=1 // pred_fallthru
      _
    // Predicated region
    $region22: #{tpu_custom_call.1} parent=1 // pred_check
      _
    $region23: #{tpu_custom_call.1} parent=1 // pred_check_branch
      %154 = sbr.rel (0) target = $region25
    $region24: #{tpu_custom_call.1} parent=1 // pred_region
      %156 = vsyncadd [#allocation10], 0
      %s157 = sshll.u32 %s11, 4
      %s158 = int_to_ptr.hbm [resolvable:$true] %s157
      %s159 = sshll.u32 [#allocation11], 4
      %s160 = int_to_ptr.vmem [resolvable:$true] %s159
      %165 = dma.hbm_to_vmem [thread:$0]  %s158, 512, %s160, [#allocation10], 128, 128, 8
    $region25: #{tpu_custom_call.1} parent=1 // pred_fallthru
      _
    // Predicated region
    $region26: #{tpu_custom_call.1} parent=1 // pred_check
      _
    $region27: #{tpu_custom_call.1} parent=1 // pred_check_branch
      %167 = sbr.rel (0) target = $region29
    $region28: #{tpu_custom_call.1} parent=1 // pred_region
      %169 = vsyncadd [#allocation13], 0
      %s171 = sshll.u32 %s13, 4
      %s172 = int_to_ptr.hbm [resolvable:$true] %s171
      %s173 = sshll.u32 [#allocation12], 4
      %s174 = int_to_ptr.vmem [resolvable:$true] %s173
      %176 = dma.hbm_to_vmem [thread:$0]  %s172, 16, %s174, [#allocation13]
    $region29: #{tpu_custom_call.1} parent=1 // pred_fallthru
      _
    // Predicated region
    $region30: #{tpu_custom_call.1} parent=1 // pred_check
      _
    $region31: #{tpu_custom_call.1} parent=1 // pred_check_branch
      %178 = sbr.rel (0) target = $region33
    $region32: #{tpu_custom_call.1} parent=1 // pred_region
      %180 = vsyncadd [#allocation13], 0
      %s182 = sshll.u32 %s15, 4
      %s183 = int_to_ptr.hbm [resolvable:$true] %s182
      %s184 = sshll.u32 [#allocation14], 4
      %s185 = int_to_ptr.vmem [resolvable:$true] %s184
      %187 = dma.hbm_to_vmem [thread:$0]  %s183, 16, %s185, [#allocation13]
    $region33: #{tpu_custom_call.1} parent=1 // pred_fallthru
      _
    // Predicated region
    $region34: #{tpu_custom_call.1} parent=1 // pred_check
      _
    $region35: #{tpu_custom_call.1} parent=1 // pred_check_branch
      %189 = sbr.rel (0) target = $region37
    $region36: #{tpu_custom_call.1} parent=1 // pred_region
      %191 = vsyncadd [#allocation16], 0
      %s193 = sshll.u32 %s17, 4
      %s194 = int_to_ptr.hbm [resolvable:$true] %s193
      %s195 = sshll.u32 [#allocation15], 4
      %s196 = int_to_ptr.vmem [resolvable:$true] %s195
      %198 = dma.hbm_to_vmem [thread:$0]  %s194, 16, %s196, [#allocation16]
    $region37: #{tpu_custom_call.1} parent=1 // pred_fallthru
      _
    // Predicated region
    $region38: #{tpu_custom_call.1} parent=1 // pred_check
      _
    $region39: #{tpu_custom_call.1} parent=1 // pred_check_branch
      %200 = sbr.rel (0) target = $region41
    $region40: #{tpu_custom_call.1} parent=1 // pred_region
      %202 = vsyncadd [#allocation16], 0
      %s203 = sshll.u32 %s19, 4
      %s204 = int_to_ptr.hbm [resolvable:$true] %s203
      %s205 = sshll.u32 [#allocation17], 4
      %s206 = int_to_ptr.vmem [resolvable:$true] %s205
      %211 = dma.hbm_to_vmem [thread:$0]  %s204, 512, %s206, [#allocation16], 128, 128, 8
    $region41: #{tpu_custom_call.1} parent=1 // pred_fallthru
      _
    // Predicated region
    $region42: #{tpu_custom_call.1} parent=1 // pred_check
      _
    $region43: #{tpu_custom_call.1} parent=1 // pred_check_branch
      %213 = sbr.rel (0) target = $region45
    $region44: #{tpu_custom_call.1} parent=1 // pred_region
      %215 = vsyncadd [#allocation19], 0
      %s217 = sshll.u32 %s21, 4
      %s218 = int_to_ptr.hbm [resolvable:$true] %s217
      %s219 = sshll.u32 [#allocation18], 4
      %s220 = int_to_ptr.vmem [resolvable:$true] %s219
      %222 = dma.hbm_to_vmem [thread:$0]  %s218, 16, %s220, [#allocation19]
    $region45: #{tpu_custom_call.1} parent=1 // pred_fallthru
      _
    // Predicated region
    $region46: #{tpu_custom_call.1} parent=1 // pred_check
      _
    $region47: #{tpu_custom_call.1} parent=1 // pred_check_branch
      %224 = sbr.rel (0) target = $region49
    $region48: #{tpu_custom_call.1} parent=1 // pred_region
      %226 = vsyncadd [#allocation19], 0
      %s228 = sshll.u32 %s23, 4
      %s229 = int_to_ptr.hbm [resolvable:$true] %s228
      %s230 = sshll.u32 [#allocation20], 4
      %s231 = int_to_ptr.vmem [resolvable:$true] %s230
      %233 = dma.hbm_to_vmem [thread:$0]  %s229, 16, %s231, [#allocation19]
    $region49: #{tpu_custom_call.1} parent=1 // pred_fallthru
      _
    // Predicated region
    $region50: #{tpu_custom_call.1} parent=1 // pred_check
      _
    $region51: #{tpu_custom_call.1} parent=1 // pred_check_branch
      %235 = sbr.rel (0) target = $region53
    $region52: #{tpu_custom_call.1} parent=1 // pred_region
      %237 = vsyncadd [#allocation22], 0
      %s239 = sshll.u32 %s25, 4
      %s240 = int_to_ptr.hbm [resolvable:$true] %s239
      %s241 = sshll.u32 [#allocation21], 4
      %s242 = int_to_ptr.vmem [resolvable:$true] %s241
      %244 = dma.hbm_to_vmem [thread:$0]  %s240, 16, %s242, [#allocation22]
    $region53: #{tpu_custom_call.1} parent=1 // pred_fallthru
      _
    // Predicated region
    $region54: #{tpu_custom_call.1} parent=1 // pred_check
      _
    $region55: #{tpu_custom_call.1} parent=1 // pred_check_branch
      %246 = sbr.rel (0) target = $region57
    $region56: #{tpu_custom_call.1} parent=1 // pred_region
      %248 = vsyncadd [#allocation22], 0
      %s249 = sshll.u32 %s27, 4
      %s250 = int_to_ptr.hbm [resolvable:$true] %s249
      %s251 = sshll.u32 [#allocation23], 4
      %s252 = int_to_ptr.vmem [resolvable:$true] %s251
      %257 = dma.hbm_to_vmem [thread:$0]  %s250, 512, %s252, [#allocation22], 128, 128, 8
    $region57: #{tpu_custom_call.1} parent=1 // pred_fallthru
      _
    // Predicated region
    $region58: #{tpu_custom_call.1} parent=1 // pred_check
      _
    $region59: #{tpu_custom_call.1} parent=1 // pred_check_branch
      %259 = sbr.rel (0) target = $region61
    $region60: #{tpu_custom_call.1} parent=1 // pred_region
      %261 = vsyncadd [#allocation25], 0
      %s262 = sshll.u32 %s29, 4
      %s263 = int_to_ptr.hbm [resolvable:$true] %s262
      %s264 = sshll.u32 [#allocation24], 4
      %s265 = int_to_ptr.vmem [resolvable:$true] %s264
      %270 = dma.hbm_to_vmem [thread:$0]  %s263, 512, %s265, [#allocation25], 128, 128, 8
    $region61: #{tpu_custom_call.1} parent=1 // pred_fallthru
      _
    // Predicated region
    $region62: #{tpu_custom_call.1} parent=1 // pred_check
      _
    $region63: #{tpu_custom_call.1} parent=1 // pred_check_branch
      %272 = sbr.rel (0) target = $region65
    $region64: #{tpu_custom_call.1} parent=1 // pred_region
      %274 = vsyncadd [#allocation25], 0
      %s275 = sshll.u32 %s31, 4
      %s276 = int_to_ptr.hbm [resolvable:$true] %s275
      %s277 = sshll.u32 [#allocation26], 4
      %s278 = int_to_ptr.vmem [resolvable:$true] %s277
      %283 = dma.hbm_to_vmem [thread:$0]  %s276, 512, %s278, [#allocation25], 128, 128, 8
    $region65: #{tpu_custom_call.1} parent=1 // pred_fallthru
      _
    // Predicated region
    $region66: #{tpu_custom_call.1} parent=1 // pred_check
      _
    $region67: #{tpu_custom_call.1} parent=1 // pred_check_branch
      %285 = sbr.rel (0) target = $region69
    $region68: #{tpu_custom_call.1} parent=1 // pred_region
      %287 = vsyncadd [#allocation28], 0
      %s288 = sshll.u32 %s33, 4
      %s289 = int_to_ptr.hbm [resolvable:$true] %s288
      %s290 = sshll.u32 [#allocation27], 4
      %s291 = int_to_ptr.vmem [resolvable:$true] %s290
      %296 = dma.hbm_to_vmem [thread:$0]  %s289, 512, %s291, [#allocation28], 128, 128, 8
    $region69: #{tpu_custom_call.1} parent=1 // pred_fallthru
      _
    // Predicated region
    $region70: #{tpu_custom_call.1} parent=1 // pred_check
      _
    $region71: #{tpu_custom_call.1} parent=1 // pred_check_branch
      %298 = sbr.rel (0) target = $region73
    $region72: #{tpu_custom_call.1} parent=1 // pred_region
      %300 = vsyncadd [#allocation28], 0
      %s301 = sshll.u32 %s35, 4
      %s302 = int_to_ptr.hbm [resolvable:$true] %s301
      %s303 = sshll.u32 [#allocation29], 4
      %s304 = int_to_ptr.vmem [resolvable:$true] %s303
      %309 = dma.hbm_to_vmem [thread:$0]  %s302, 512, %s304, [#allocation28], 128, 128, 8
    $region73: #{tpu_custom_call.1} parent=1 // pred_fallthru
      _
    // Predicated region
    $region74: #{tpu_custom_call.1} parent=1 // pred_check
      _
    $region75: #{tpu_custom_call.1} parent=1 // pred_check_branch
      %311 = sbr.rel (0) target = $region77
    $region76: #{tpu_custom_call.1} parent=1 // pred_region
      %313 = vsyncadd [#allocation31], 0
      %s314 = sshll.u32 %s37, 4
      %s315 = int_to_ptr.hbm [resolvable:$true] %s314
      %s316 = sshll.u32 [#allocation30], 4
      %s317 = int_to_ptr.vmem [resolvable:$true] %s316
      %322 = dma.hbm_to_vmem [thread:$0]  %s315, 512, %s317, [#allocation31], 128, 128, 8
    $region77: #{tpu_custom_call.1} parent=1 // pred_fallthru
      _
    // Predicated region
    $region78: #{tpu_custom_call.1} parent=1 // pred_check
      _
    $region79: #{tpu_custom_call.1} parent=1 // pred_check_branch
      %324 = sbr.rel (0) target = $region81
    $region80: #{tpu_custom_call.1} parent=1 // pred_region
      %326 = vsyncadd [#allocation31], 0
      %s328 = sshll.u32 %s39, 4
      %s329 = int_to_ptr.hbm [resolvable:$true] %s328
      %s330 = sshll.u32 [#allocation32], 4
      %s331 = int_to_ptr.vmem [resolvable:$true] %s330
      %333 = dma.hbm_to_vmem [thread:$0]  %s329, 16, %s331, [#allocation31]
    $region81: #{tpu_custom_call.1} parent=1 // pred_fallthru
      _
    // Predicated region
    $region82: #{tpu_custom_call.1} parent=1 // pred_check
      _
    $region83: #{tpu_custom_call.1} parent=1 // pred_check_branch
      %335 = sbr.rel (0) target = $region85
    $region84: #{tpu_custom_call.1} parent=1 // pred_region
      %337 = vsyncadd [#allocation34], 0
      %s339 = sshll.u32 %s41, 4
      %s340 = int_to_ptr.hbm [resolvable:$true] %s339
      %s341 = sshll.u32 [#allocation33], 4
      %s342 = int_to_ptr.vmem [resolvable:$true] %s341
      %344 = dma.hbm_to_vmem [thread:$0]  %s340, 16, %s342, [#allocation34]
    $region85: #{tpu_custom_call.1} parent=1 // pred_fallthru
      _
    // Predicated region
    $region86: #{tpu_custom_call.1} parent=1 // pred_check
      _
    $region87: #{tpu_custom_call.1} parent=1 // pred_check_branch
      %346 = sbr.rel (0) target = $region89
    $region88: #{tpu_custom_call.1} parent=1 // pred_region
      %348 = vsyncadd [#allocation34], 0
      %s350 = sshll.u32 %s43, 4
      %s351 = int_to_ptr.hbm [resolvable:$true] %s350
      %s352 = sshll.u32 [#allocation35], 4
      %s353 = int_to_ptr.vmem [resolvable:$true] %s352
      %355 = dma.hbm_to_vmem [thread:$0]  %s351, 16, %s353, [#allocation34]
    $region89: #{tpu_custom_call.1} parent=1 // pred_fallthru
      _
    // Predicated region
    $region90: #{tpu_custom_call.1} parent=1 // pred_check
      _
    $region91: #{tpu_custom_call.1} parent=1 // pred_check_branch
      %357 = sbr.rel (0) target = $region93
    $region92: #{tpu_custom_call.1} parent=1 // pred_region
      %359 = vsyncadd [#allocation37], 0
      %s361 = sshll.u32 %s45, 4
      %s362 = int_to_ptr.hbm [resolvable:$true] %s361
      %s363 = sshll.u32 [#allocation36], 4
      %s364 = int_to_ptr.vmem [resolvable:$true] %s363
      %366 = dma.hbm_to_vmem [thread:$0]  %s362, 16, %s364, [#allocation37]
    $region93: #{tpu_custom_call.1} parent=1 // pred_fallthru
      _
    // Predicated region
    $region94: #{tpu_custom_call.1} parent=1 // pred_check
      _
    $region95: #{tpu_custom_call.1} parent=1 // pred_check_branch
      %368 = sbr.rel (0) target = $region97
    $region96: #{tpu_custom_call.1} parent=1 // pred_region
      %370 = vsyncadd [#allocation37], 0
      %s371 = sshll.u32 %s47, 4
      %s372 = int_to_ptr.hbm [resolvable:$true] %s371
      %s373 = sshll.u32 [#allocation38], 4
      %s374 = int_to_ptr.vmem [resolvable:$true] %s373
      %379 = dma.hbm_to_vmem [thread:$0]  %s372, 512, %s374, [#allocation37], 128, 128, 8
    $region97: #{tpu_custom_call.1} parent=1 // pred_fallthru
      _
    // Predicated region
    $region98: #{tpu_custom_call.1} parent=1 // pred_check
      _
    $region99: #{tpu_custom_call.1} parent=1 // pred_check_branch
      %381 = sbr.rel (0) target = $region101
    $region100: #{tpu_custom_call.1} parent=1 // pred_region
      %383 = vsyncadd [#allocation40], 0
      %s385 = sshll.u32 %s49, 4
      %s386 = int_to_ptr.hbm [resolvable:$true] %s385
      %s387 = sshll.u32 [#allocation39], 4
      %s388 = int_to_ptr.vmem [resolvable:$true] %s387
      %390 = dma.hbm_to_vmem [thread:$0]  %s386, 16, %s388, [#allocation40]
    $region101: #{tpu_custom_call.1} parent=1 // pred_fallthru
      _
    // Predicated region
    $region102: #{tpu_custom_call.1} parent=1 // pred_check
      _
    $region103: #{tpu_custom_call.1} parent=1 // pred_check_branch
      %392 = sbr.rel (0) target = $region105
    $region104: #{tpu_custom_call.1} parent=1 // pred_region
      %394 = vsyncadd [#allocation40], 0
      %s396 = sshll.u32 %s51, 4
      %s397 = int_to_ptr.hbm [resolvable:$true] %s396
      %s398 = sshll.u32 [#allocation41], 4
      %s399 = int_to_ptr.vmem [resolvable:$true] %s398
      %401 = dma.hbm_to_vmem [thread:$0]  %s397, 16, %s399, [#allocation40]
    $region105: #{tpu_custom_call.1} parent=1 // pred_fallthru
      _
    // Predicated region
    $region106: #{tpu_custom_call.1} parent=1 // pred_check
      _
    $region107: #{tpu_custom_call.1} parent=1 // pred_check_branch
      %403 = sbr.rel (0) target = $region109
    $region108: #{tpu_custom_call.1} parent=1 // pred_region
      %405 = vsyncadd [#allocation43], 0
      %s407 = sshll.u32 %s53, 4
      %s408 = int_to_ptr.hbm [resolvable:$true] %s407
      %s409 = sshll.u32 [#allocation42], 4
      %s410 = int_to_ptr.vmem [resolvable:$true] %s409
      %412 = dma.hbm_to_vmem [thread:$0]  %s408, 16, %s410, [#allocation43]
    $region109: #{tpu_custom_call.1} parent=1 // pred_fallthru
      _
    // Predicated region
    $region110: #{tpu_custom_call.1} parent=1 // pred_check
      _
    $region111: #{tpu_custom_call.1} parent=1 // pred_check_branch
      %414 = sbr.rel (0) target = $region113
    $region112: #{tpu_custom_call.1} parent=1 // pred_region
      %416 = vsyncadd [#allocation43], 0
      %s417 = sshll.u32 %s55, 4
      %s418 = int_to_ptr.hbm [resolvable:$true] %s417
      %s419 = sshll.u32 [#allocation44], 4
      %s420 = int_to_ptr.vmem [resolvable:$true] %s419
      %425 = dma.hbm_to_vmem [thread:$0]  %s418, 512, %s420, [#allocation43], 128, 128, 8
    $region113: #{tpu_custom_call.1} parent=1 // pred_fallthru
      _
    // Predicated region
    $region114: #{tpu_custom_call.1} parent=1 // pred_check
      _
    $region115: #{tpu_custom_call.1} parent=1 // pred_check_branch
      %427 = sbr.rel (0) target = $region117
    $region116: #{tpu_custom_call.1} parent=1 // pred_region
      %429 = vsyncadd [#allocation46], 0
      %s431 = sshll.u32 %s57, 4
      %s432 = int_to_ptr.hbm [resolvable:$true] %s431
      %s433 = sshll.u32 [#allocation45], 4
      %s434 = int_to_ptr.vmem [resolvable:$true] %s433
      %436 = dma.hbm_to_vmem [thread:$0]  %s432, 16, %s434, [#allocation46]
    $region117: #{tpu_custom_call.1} parent=1 // pred_fallthru
      _
    // Predicated region
    $region118: #{tpu_custom_call.1} parent=1 // pred_check
      _
    $region119: #{tpu_custom_call.1} parent=1 // pred_check_branch
      %438 = sbr.rel (0) target = $region121
    $region120: #{tpu_custom_call.1} parent=1 // pred_region
      %440 = vsyncadd [#allocation46], 0
      %s442 = sshll.u32 %s59, 4
      %s443 = int_to_ptr.hbm [resolvable:$true] %s442
      %s444 = sshll.u32 [#allocation47], 4
      %s445 = int_to_ptr.vmem [resolvable:$true] %s444
      %447 = dma.hbm_to_vmem [thread:$0]  %s443, 16, %s445, [#allocation46]
    $region121: #{tpu_custom_call.1} parent=1 // pred_fallthru
      _
    // Predicated region
    $region122: #{tpu_custom_call.1} parent=1 // pred_check
      _
    $region123: #{tpu_custom_call.1} parent=1 // pred_check_branch
      %449 = sbr.rel (0) target = $region125
    $region124: #{tpu_custom_call.1} parent=1 // pred_region
      %451 = vsyncadd [#allocation49], 0
      %s453 = sshll.u32 %s61, 4
      %s454 = int_to_ptr.hbm [resolvable:$true] %s453
      %s455 = sshll.u32 [#allocation48], 4
      %s456 = int_to_ptr.vmem [resolvable:$true] %s455
      %458 = dma.hbm_to_vmem [thread:$0]  %s454, 16, %s456, [#allocation49]
    $region125: #{tpu_custom_call.1} parent=1 // pred_fallthru
      _
    // Predicated region
    $region126: #{tpu_custom_call.1} parent=1 // pred_check
      _
    $region127: #{tpu_custom_call.1} parent=1 // pred_check_branch
      %460 = sbr.rel (0) target = $region129
    $region128: #{tpu_custom_call.1} parent=1 // pred_region
      %462 = vsyncadd [#allocation49], 0
      %s463 = sshll.u32 %s63, 4
      %s464 = int_to_ptr.hbm [resolvable:$true] %s463
      %s465 = sshll.u32 [#allocation50], 4
      %s466 = int_to_ptr.vmem [resolvable:$true] %s465
      %471 = dma.hbm_to_vmem [thread:$0]  %s464, 512, %s466, [#allocation49], 128, 128, 8
    $region129: #{tpu_custom_call.1} parent=1 // pred_fallthru
      _
    // Predicated region
    $region130: #{tpu_custom_call.1} parent=1 // pred_check
      _
    $region131: #{tpu_custom_call.1} parent=1 // pred_check_branch
      %473 = sbr.rel (0) target = $region133
    $region132: #{tpu_custom_call.1} parent=1 // pred_region
      %475 = vsyncadd [#allocation52], 0
      %s477 = sshll.u32 %s65, 4
      %s478 = int_to_ptr.hbm [resolvable:$true] %s477
      %s479 = sshll.u32 [#allocation51], 4
      %s480 = int_to_ptr.vmem [resolvable:$true] %s479
      %482 = dma.hbm_to_vmem [thread:$0]  %s478, 16, %s480, [#allocation52]
    $region133: #{tpu_custom_call.1} parent=1 // pred_fallthru
      _
    // Predicated region
    $region134: #{tpu_custom_call.1} parent=1 // pred_check
      _
    $region135: #{tpu_custom_call.1} parent=1 // pred_check_branch
      %484 = sbr.rel (0) target = $region137
    $region136: #{tpu_custom_call.1} parent=1 // pred_region
      %486 = vsyncadd [#allocation52], 0
      %s488 = sshll.u32 %s67, 4
      %s489 = int_to_ptr.hbm [resolvable:$true] %s488
      %s490 = sshll.u32 [#allocation53], 4
      %s491 = int_to_ptr.vmem [resolvable:$true] %s490
      %493 = dma.hbm_to_vmem [thread:$0]  %s489, 16, %s491, [#allocation52]
    $region137: #{tpu_custom_call.1} parent=1 // pred_fallthru
      _
    // Predicated region
    $region138: #{tpu_custom_call.1} parent=1 // pred_check
      _
    $region139: #{tpu_custom_call.1} parent=1 // pred_check_branch
      %495 = sbr.rel (0) target = $region141
    $region140: #{tpu_custom_call.1} parent=1 // pred_region
      %497 = vsyncadd [#allocation55], 0
      %s499 = sshll.u32 %s69, 4
      %s500 = int_to_ptr.hbm [resolvable:$true] %s499
      %s501 = sshll.u32 [#allocation54], 4
      %s502 = int_to_ptr.vmem [resolvable:$true] %s501
      %504 = dma.hbm_to_vmem [thread:$0]  %s500, 16, %s502, [#allocation55]
    $region141: #{tpu_custom_call.1} parent=1 // pred_fallthru
      _
    // Predicated region
    $region142: #{tpu_custom_call.1} parent=1 // pred_check
      _
    $region143: #{tpu_custom_call.1} parent=1 // pred_check_branch
      %506 = sbr.rel (0) target = $region145
    $region144: #{tpu_custom_call.1} parent=1 // pred_region
      _
    $region145: #{tpu_custom_call.1} parent=1 // pred_fallthru
      _
    // Predicated region
    $region146: #{tpu_custom_call.1} parent=1 // pred_check
      _
    $region147: #{tpu_custom_call.1} parent=1 // pred_check_branch
      %508 = sbr.rel (0) target = $region149
    $region148: #{tpu_custom_call.1} parent=1 // pred_region
      _
    $region149: #{tpu_custom_call.1} parent=1 // pred_fallthru
      _
    // Predicated region
    $region150: #{tpu_custom_call.1} parent=1 // pred_check
      _
    $region151: #{tpu_custom_call.1} parent=1 // pred_check_branch
      %510 = sbr.rel (0) target = $region153
    $region152: #{tpu_custom_call.1} parent=1 // pred_region
      %512 = dma.done [#allocation4], 256
    $region153: #{tpu_custom_call.1} parent=1 // pred_fallthru
      _
    // Predicated region
    $region154: #{tpu_custom_call.1} parent=1 // pred_check
      _
    $region155: #{tpu_custom_call.1} parent=1 // pred_check_branch
      %514 = sbr.rel (0) target = $region157
    $region156: #{tpu_custom_call.1} parent=1 // pred_region
      %516 = dma.done [#allocation7], 256
    $region157: #{tpu_custom_call.1} parent=1 // pred_fallthru
      _
    // Predicated region
    $region158: #{tpu_custom_call.1} parent=1 // pred_check
      _
    $region159: #{tpu_custom_call.1} parent=1 // pred_check_branch
      %518 = sbr.rel (0) target = $region161
    $region160: #{tpu_custom_call.1} parent=1 // pred_region
      %520 = dma.done [#allocation7], 16
    $region161: #{tpu_custom_call.1} parent=1 // pred_fallthru
      _
    // Predicated region
    $region162: #{tpu_custom_call.1} parent=1 // pred_check
      _
    $region163: #{tpu_custom_call.1} parent=1 // pred_check_branch
      %522 = sbr.rel (0) target = $region165
    $region164: #{tpu_custom_call.1} parent=1 // pred_region
      %524 = dma.done [#allocation10], 16
    $region165: #{tpu_custom_call.1} parent=1 // pred_fallthru
      _
    // Predicated region
    $region166: #{tpu_custom_call.1} parent=1 // pred_check
      _
    $region167: #{tpu_custom_call.1} parent=1 // pred_check_branch
      %526 = sbr.rel (0) target = $region169
    $region168: #{tpu_custom_call.1} parent=1 // pred_region
      %528 = dma.done [#allocation10], 512
    $region169: #{tpu_custom_call.1} parent=1 // pred_fallthru
      _
    // Predicated region
    $region170: #{tpu_custom_call.1} parent=1 // pred_check
      _
    $region171: #{tpu_custom_call.1} parent=1 // pred_check_branch
      %530 = sbr.rel (0) target = $region173
    $region172: #{tpu_custom_call.1} parent=1 // pred_region
      %532 = dma.done [#allocation13], 16
    $region173: #{tpu_custom_call.1} parent=1 // pred_fallthru
      _
    // Predicated region
    $region174: #{tpu_custom_call.1} parent=1 // pred_check
      _
    $region175: #{tpu_custom_call.1} parent=1 // pred_check_branch
      %534 = sbr.rel (0) target = $region177
    $region176: #{tpu_custom_call.1} parent=1 // pred_region
      %536 = dma.done [#allocation13], 16
    $region177: #{tpu_custom_call.1} parent=1 // pred_fallthru
      _
    // Predicated region
    $region178: #{tpu_custom_call.1} parent=1 // pred_check
      _
    $region179: #{tpu_custom_call.1} parent=1 // pred_check_branch
      %538 = sbr.rel (0) target = $region181
    $region180: #{tpu_custom_call.1} parent=1 // pred_region
      %540 = dma.done [#allocation16], 16
    $region181: #{tpu_custom_call.1} parent=1 // pred_fallthru
      _
    // Predicated region
    $region182: #{tpu_custom_call.1} parent=1 // pred_check
      _
    $region183: #{tpu_custom_call.1} parent=1 // pred_check_branch
      %542 = sbr.rel (0) target = $region185
    $region184: #{tpu_custom_call.1} parent=1 // pred_region
      %544 = dma.done [#allocation16], 512
    $region185: #{tpu_custom_call.1} parent=1 // pred_fallthru
      _
    // Predicated region
    $region186: #{tpu_custom_call.1} parent=1 // pred_check
      _
    $region187: #{tpu_custom_call.1} parent=1 // pred_check_branch
      %546 = sbr.rel (0) target = $region189
    $region188: #{tpu_custom_call.1} parent=1 // pred_region
      %548 = dma.done [#allocation19], 16
    $region189: #{tpu_custom_call.1} parent=1 // pred_fallthru
      _
    // Predicated region
    $region190: #{tpu_custom_call.1} parent=1 // pred_check
      _
    $region191: #{tpu_custom_call.1} parent=1 // pred_check_branch
      %550 = sbr.rel (0) target = $region193
    $region192: #{tpu_custom_call.1} parent=1 // pred_region
      %552 = dma.done [#allocation19], 16
    $region193: #{tpu_custom_call.1} parent=1 // pred_fallthru
      _
    // Predicated region
    $region194: #{tpu_custom_call.1} parent=1 // pred_check
      _
    $region195: #{tpu_custom_call.1} parent=1 // pred_check_branch
      %554 = sbr.rel (0) target = $region197
    $region196: #{tpu_custom_call.1} parent=1 // pred_region
      %556 = dma.done [#allocation22], 16
    $region197: #{tpu_custom_call.1} parent=1 // pred_fallthru
      _
    // Predicated region
    $region198: #{tpu_custom_call.1} parent=1 // pred_check
      _
    $region199: #{tpu_custom_call.1} parent=1 // pred_check_branch
      %558 = sbr.rel (0) target = $region201
    $region200: #{tpu_custom_call.1} parent=1 // pred_region
      %560 = dma.done [#allocation22], 512
    $region201: #{tpu_custom_call.1} parent=1 // pred_fallthru
      _
    // Predicated region
    $region202: #{tpu_custom_call.1} parent=1 // pred_check
      _
    $region203: #{tpu_custom_call.1} parent=1 // pred_check_branch
      %562 = sbr.rel (0) target = $region205
    $region204: #{tpu_custom_call.1} parent=1 // pred_region
      %564 = dma.done [#allocation25], 512
    $region205: #{tpu_custom_call.1} parent=1 // pred_fallthru
      _
    // Predicated region
    $region206: #{tpu_custom_call.1} parent=1 // pred_check
      _
    $region207: #{tpu_custom_call.1} parent=1 // pred_check_branch
      %566 = sbr.rel (0) target = $region209
    $region208: #{tpu_custom_call.1} parent=1 // pred_region
      %568 = dma.done [#allocation25], 512
    $region209: #{tpu_custom_call.1} parent=1 // pred_fallthru
      _
    // Predicated region
    $region210: #{tpu_custom_call.1} parent=1 // pred_check
      _
    $region211: #{tpu_custom_call.1} parent=1 // pred_check_branch
      %570 = sbr.rel (0) target = $region213
    $region212: #{tpu_custom_call.1} parent=1 // pred_region
      %572 = dma.done [#allocation28], 512
    $region213: #{tpu_custom_call.1} parent=1 // pred_fallthru
      _
    // Predicated region
    $region214: #{tpu_custom_call.1} parent=1 // pred_check
      _
    $region215: #{tpu_custom_call.1} parent=1 // pred_check_branch
      %574 = sbr.rel (0) target = $region217
    $region216: #{tpu_custom_call.1} parent=1 // pred_region
      %576 = dma.done [#allocation28], 512
    $region217: #{tpu_custom_call.1} parent=1 // pred_fallthru
      _
    // Predicated region
    $region218: #{tpu_custom_call.1} parent=1 // pred_check
      _
    $region219: #{tpu_custom_call.1} parent=1 // pred_check_branch
      %578 = sbr.rel (0) target = $region221
    $region220: #{tpu_custom_call.1} parent=1 // pred_region
      %580 = dma.done [#allocation31], 512
    $region221: #{tpu_custom_call.1} parent=1 // pred_fallthru
      _
    // Predicated region
    $region222: #{tpu_custom_call.1} parent=1 // pred_check
      _
    $region223: #{tpu_custom_call.1} parent=1 // pred_check_branch
      %582 = sbr.rel (0) target = $region225
    $region224: #{tpu_custom_call.1} parent=1 // pred_region
      %584 = dma.done [#allocation31], 16
    $region225: #{tpu_custom_call.1} parent=1 // pred_fallthru
      _
    // Predicated region
    $region226: #{tpu_custom_call.1} parent=1 // pred_check
      _
    $region227: #{tpu_custom_call.1} parent=1 // pred_check_branch
      %586 = sbr.rel (0) target = $region229
    $region228: #{tpu_custom_call.1} parent=1 // pred_region
      %588 = dma.done [#allocation34], 16
    $region229: #{tpu_custom_call.1} parent=1 // pred_fallthru
      _
    // Predicated region
    $region230: #{tpu_custom_call.1} parent=1 // pred_check
      _
    $region231: #{tpu_custom_call.1} parent=1 // pred_check_branch
      %590 = sbr.rel (0) target = $region233
    $region232: #{tpu_custom_call.1} parent=1 // pred_region
      %592 = dma.done [#allocation34], 16
    $region233: #{tpu_custom_call.1} parent=1 // pred_fallthru
      _
    // Predicated region
    $region234: #{tpu_custom_call.1} parent=1 // pred_check
      _
    $region235: #{tpu_custom_call.1} parent=1 // pred_check_branch
      %594 = sbr.rel (0) target = $region237
    $region236: #{tpu_custom_call.1} parent=1 // pred_region
      %596 = dma.done [#allocation37], 16
    $region237: #{tpu_custom_call.1} parent=1 // pred_fallthru
      _
    // Predicated region
    $region238: #{tpu_custom_call.1} parent=1 // pred_check
      _
    $region239: #{tpu_custom_call.1} parent=1 // pred_check_branch
      %598 = sbr.rel (0) target = $region241
    $region240: #{tpu_custom_call.1} parent=1 // pred_region
      %600 = dma.done [#allocation37], 512
    $region241: #{tpu_custom_call.1} parent=1 // pred_fallthru
      _
    // Predicated region
    $region242: #{tpu_custom_call.1} parent=1 // pred_check
      _
    $region243: #{tpu_custom_call.1} parent=1 // pred_check_branch
      %602 = sbr.rel (0) target = $region245
    $region244: #{tpu_custom_call.1} parent=1 // pred_region
      %604 = dma.done [#allocation40], 16
    $region245: #{tpu_custom_call.1} parent=1 // pred_fallthru
      _
    // Predicated region
    $region246: #{tpu_custom_call.1} parent=1 // pred_check
      _
    $region247: #{tpu_custom_call.1} parent=1 // pred_check_branch
      %606 = sbr.rel (0) target = $region249
    $region248: #{tpu_custom_call.1} parent=1 // pred_region
      %608 = dma.done [#allocation40], 16
    $region249: #{tpu_custom_call.1} parent=1 // pred_fallthru
      _
    // Predicated region
    $region250: #{tpu_custom_call.1} parent=1 // pred_check
      _
    $region251: #{tpu_custom_call.1} parent=1 // pred_check_branch
      %610 = sbr.rel (0) target = $region253
    $region252: #{tpu_custom_call.1} parent=1 // pred_region
      %612 = dma.done [#allocation43], 16
    $region253: #{tpu_custom_call.1} parent=1 // pred_fallthru
      _
    // Predicated region
    $region254: #{tpu_custom_call.1} parent=1 // pred_check
      _
    $region255: #{tpu_custom_call.1} parent=1 // pred_check_branch
      %614 = sbr.rel (0) target = $region257
    $region256: #{tpu_custom_call.1} parent=1 // pred_region
      %616 = dma.done [#allocation43], 512
    $region257: #{tpu_custom_call.1} parent=1 // pred_fallthru
      _
    // Predicated region
    $region258: #{tpu_custom_call.1} parent=1 // pred_check
      _
    $region259: #{tpu_custom_call.1} parent=1 // pred_check_branch
      %618 = sbr.rel (0) target = $region261
    $region260: #{tpu_custom_call.1} parent=1 // pred_region
      %620 = dma.done [#allocation46], 16
    $region261: #{tpu_custom_call.1} parent=1 // pred_fallthru
      _
    // Predicated region
    $region262: #{tpu_custom_call.1} parent=1 // pred_check
      _
    $region263: #{tpu_custom_call.1} parent=1 // pred_check_branch
      %622 = sbr.rel (0) target = $region265
    $region264: #{tpu_custom_call.1} parent=1 // pred_region
      %624 = dma.done [#allocation46], 16
    $region265: #{tpu_custom_call.1} parent=1 // pred_fallthru
      _
    // Predicated region
    $region266: #{tpu_custom_call.1} parent=1 // pred_check
      _
    $region267: #{tpu_custom_call.1} parent=1 // pred_check_branch
      %626 = sbr.rel (0) target = $region269
    $region268: #{tpu_custom_call.1} parent=1 // pred_region
      %628 = dma.done [#allocation49], 16
    $region269: #{tpu_custom_call.1} parent=1 // pred_fallthru
      _
    // Predicated region
    $region270: #{tpu_custom_call.1} parent=1 // pred_check
      _
    $region271: #{tpu_custom_call.1} parent=1 // pred_check_branch
      %630 = sbr.rel (0) target = $region273
    $region272: #{tpu_custom_call.1} parent=1 // pred_region
      %632 = dma.done [#allocation49], 512
    $region273: #{tpu_custom_call.1} parent=1 // pred_fallthru
      _
    // Predicated region
    $region274: #{tpu_custom_call.1} parent=1 // pred_check
      _
    $region275: #{tpu_custom_call.1} parent=1 // pred_check_branch
      %634 = sbr.rel (0) target = $region277
    $region276: #{tpu_custom_call.1} parent=1 // pred_region
      %636 = dma.done [#allocation52], 16
    $region277: #{tpu_custom_call.1} parent=1 // pred_fallthru
      _
    // Predicated region
    $region278: #{tpu_custom_call.1} parent=1 // pred_check
      _
    $region279: #{tpu_custom_call.1} parent=1 // pred_check_branch
      %638 = sbr.rel (0) target = $region281
    $region280: #{tpu_custom_call.1} parent=1 // pred_region
      %640 = dma.done [#allocation52], 16
    $region281: #{tpu_custom_call.1} parent=1 // pred_fallthru
      _
    // Predicated region
    $region282: #{tpu_custom_call.1} parent=1 // pred_check
      _
    $region283: #{tpu_custom_call.1} parent=1 // pred_check_branch
      %642 = sbr.rel (0) target = $region285
    $region284: #{tpu_custom_call.1} parent=1 // pred_region
      %644 = dma.done [#allocation55], 16
    $region285: #{tpu_custom_call.1} parent=1 // pred_fallthru
      _
    %v645 = vld [vmem:[#allocation3] sm:$0xff]
    %v646 = vld [vmem:[#allocation3 + $0x8] sm:$0xff]
    %v647 = vld [vmem:[#allocation6] sm:$0xff]
    %v648 = vld [vmem:[#allocation6 + $0x8] sm:$0xff]
    %v649 = vld [vmem:[%s5] sm:$0x1]
    %v650 = vld [vmem:[#allocation8] sm:$0x1]
    %v651 = vld [vmem:[#allocation9] sm:$0x1]
    %v653 = vperm.slane %v649, 0
    %vm655 = vcmask 130048
    %v657 = vsel %vm655, %v645, 0
    %v660 = vsel %vm655, %v646, 0
    %662 = vmatpush.msra.mxu0 0.0
    %663 = vmatpush.msra.mxu0 0.0
    %664 = vmatpush.msra.mxu0 0.0
    %665 = vmatpush.msra.mxu0 0.0
    %666 = vmatpush.msra.mxu0 0.0
    %667 = vmatpush.msra.mxu0 0.0
    %668 = vmatpush.msra.mxu0 0.0
    %669 = vmatpush.msra.mxu0 0.0
    %670 = vmatpush.msra.mxu0 0.0
    %671 = vmatpush.msra.mxu0 0.0
    %672 = vmatpush.msra.mxu0 0.0
    %673 = vmatpush.msra.mxu0 0.0
    %674 = vmatpush.msra.mxu0 0.0
    %675 = vmatpush.msra.mxu0 0.0
    %676 = vmatpush.msra.mxu0 %v648
    %677 = vmatpush.msra.mxu0 %v647
    %678 = vmatmul.f32.gmra.mxu0 %v657
    %v679 = vpop.f32.mrf.mxu0
    %v680 = vadd.f32 %v653, %v679
    %681 = vmatmul.f32.gmra.mxu0 %v660
    %v682 = vpop.f32.mrf.mxu0
    %v683 = vadd.f32 %v653, %v682
    %684 = vdwg.mxu0
    %vm685 = vcmask 261120
    %v686 = vsel %vm685, %v680, 0.0
    %687 = vadd.xlane.f32.xlu0 %v686
    %v688 = vpop.xlane.xlu0 %687
    %v689 = vsel %vm685, %v683, 0.0
    %690 = vadd.xlane.f32.xlu0 %v689
    %v691 = vpop.xlane.xlu0 %690
    %v692 = vrcp.pop 32.0
    %v693 = vmul.f32 32.0, %v692
    %v694 = vsub.f32 1.0, %v693
    %v695 = vmul.f32 %v692, %v694
    %v696 = vadd.f32 %v692, %v695
    %vm697 = vweird.f32 %v692
    %v698 = vsel %vm697, %v692, %v696
    %v699 = vmul.f32 %v688, %v698
    %v700 = vmul.f32 %v691, %v698
    %v701 = vsub.f32 %v680, %v699
    %v702 = vsub.f32 %v683, %v700
    %v703 = vmul.f32 %v701, %v701
    %v704 = vmul.f32 %v702, %v702
    %v705 = vsel %vm685, %v703, 0.0
    %706 = vadd.xlane.f32.xlu0 %v705
    %v707 = vpop.xlane.xlu0 %706
    %v708 = vsel %vm685, %v704, 0.0
    %709 = vadd.xlane.f32.xlu0 %v708
    %v710 = vpop.xlane.xlu0 %709
    %v711 = vmul.f32 %v707, %v698
    %v712 = vmul.f32 %v710, %v698
    %v713 = vadd.f32 %v711, 1e-05
    %v714 = vadd.f32 %v712, 1e-05
    %v715 = vrsqrt.pop %v713
    %v716 = vmul.f32 %v715, %v713
    %v717 = vmul.f32 %v716, %v715
    %v718 = vmul.f32 0.5, %v717
    %v719 = vsub.f32 1.5, %v718
    %v720 = vmul.f32 %v715, %v719
    %vm721 = vweird.f32 %v713
    %vm722 = vweird.f32 %v715
    %vm723 = vmor %vm721, %vm722
    %v724 = vsel %vm723, %v715, %v720
    %v725 = vrsqrt.pop %v714
    %v726 = vmul.f32 %v725, %v714
    %v727 = vmul.f32 %v726, %v725
    %v728 = vmul.f32 0.5, %v727
    %v729 = vsub.f32 1.5, %v728
    %v730 = vmul.f32 %v725, %v729
    %vm731 = vweird.f32 %v714
    %vm732 = vweird.f32 %v725
    %vm733 = vmor %vm731, %vm732
    %v734 = vsel %vm733, %v725, %v730
    %v735 = vmul.f32 %v701, %v724
    %v736 = vmul.f32 %v702, %v734
    %v738 = vperm.slane %v650, 0
    %v740 = vmul.f32 %v735, %v738
    %v741 = vmul.f32 %v736, %v738
    %v743 = vperm.slane %v651, 0
    %v745 = vadd.f32 %v740, %v743
    %v746 = vadd.f32 %v741, %v743
    %vm747 = vcmp.ge.f32.partialorder %v745, 0.0
    %vm748 = vcmp.ge.f32.partialorder %v746, 0.0
    %v749 = vmul.f32 %v745, 0.01
    %v750 = vmul.f32 %v746, 0.01
    %v751 = vsel %vm747, %v745, %v749
    %v752 = vsel %vm748, %v746, %v750
    %v753 = vld [vmem:[#allocation11] sm:$0xff]
    %v754 = vld [vmem:[#allocation11 + $0x8] sm:$0xff]
    %v755 = vld [vmem:[#allocation11 + $0x10] sm:$0xff]
    %v756 = vld [vmem:[#allocation11 + $0x18] sm:$0xff]
    %v757 = vld [vmem:[#allocation12] sm:$0x1]
    %v758 = vld [vmem:[#allocation14] sm:$0x1]
    %v759 = vld [vmem:[#allocation15] sm:$0x1]
    %v761 = vperm.slane %v757, 0
    %v764 = vsel %vm685, %v751, 0
    %v767 = vsel %vm685, %v752, 0
    %769 = vmatpush.msra.mxu0 0.0
    %770 = vmatpush.msra.mxu0 0.0
    %771 = vmatpush.msra.mxu0 0.0
    %772 = vmatpush.msra.mxu0 0.0
    %773 = vmatpush.msra.mxu0 0.0
    %774 = vmatpush.msra.mxu0 0.0
    %775 = vmatpush.msra.mxu0 0.0
    %776 = vmatpush.msra.mxu0 0.0
    %777 = vmatpush.msra.mxu0 0.0
    %778 = vmatpush.msra.mxu0 0.0
    %779 = vmatpush.msra.mxu0 0.0
    %780 = vmatpush.msra.mxu0 0.0
    %781 = vmatpush.msra.mxu0 %v756
    %782 = vmatpush.msra.mxu0 %v755
    %783 = vmatpush.msra.mxu0 %v754
    %784 = vmatpush.msra.mxu0 %v753
    %785 = vmatmul.f32.gmra.mxu0 %v764
    %v786 = vpop.f32.mrf.mxu0
    %v787 = vadd.f32 %v761, %v786
    %788 = vmatmul.f32.gmra.mxu0 %v767
    %v789 = vpop.f32.mrf.mxu0
    %v790 = vadd.f32 %v761, %v789
    %791 = vdwg.mxu0
    %v792 = vsel %vm685, %v787, 0.0
    %793 = vadd.xlane.f32.xlu0 %v792
    %v794 = vpop.xlane.xlu0 %793
    %v795 = vsel %vm685, %v790, 0.0
    %796 = vadd.xlane.f32.xlu0 %v795
    %v797 = vpop.xlane.xlu0 %796
    %v798 = vmul.f32 %v794, %v698
    %v799 = vmul.f32 %v797, %v698
    %v800 = vsub.f32 %v787, %v798
    %v801 = vsub.f32 %v790, %v799
    %v802 = vmul.f32 %v800, %v800
    %v803 = vmul.f32 %v801, %v801
    %v804 = vsel %vm685, %v802, 0.0
    %805 = vadd.xlane.f32.xlu0 %v804
    %v806 = vpop.xlane.xlu0 %805
    %v807 = vsel %vm685, %v803, 0.0
    %808 = vadd.xlane.f32.xlu0 %v807
    %v809 = vpop.xlane.xlu0 %808
    %v810 = vmul.f32 %v806, %v698
    %v811 = vmul.f32 %v809, %v698
    %v812 = vadd.f32 %v810, 1e-05
    %v813 = vadd.f32 %v811, 1e-05
    %v814 = vrsqrt.pop %v812
    %v815 = vmul.f32 %v814, %v812
    %v816 = vmul.f32 %v815, %v814
    %v817 = vmul.f32 0.5, %v816
    %v818 = vsub.f32 1.5, %v817
    %v819 = vmul.f32 %v814, %v818
    %vm820 = vweird.f32 %v812
    %vm821 = vweird.f32 %v814
    %vm822 = vmor %vm820, %vm821
    %v823 = vsel %vm822, %v814, %v819
    %v824 = vrsqrt.pop %v813
    %v825 = vmul.f32 %v824, %v813
    %v826 = vmul.f32 %v825, %v824
    %v827 = vmul.f32 0.5, %v826
    %v828 = vsub.f32 1.5, %v827
    %v829 = vmul.f32 %v824, %v828
    %vm830 = vweird.f32 %v813
    %vm831 = vweird.f32 %v824
    %vm832 = vmor %vm830, %vm831
    %v833 = vsel %vm832, %v824, %v829
    %v834 = vmul.f32 %v800, %v823
    %v835 = vmul.f32 %v801, %v833
    %v837 = vperm.slane %v758, 0
    %v839 = vmul.f32 %v834, %v837
    %v840 = vmul.f32 %v835, %v837
    %v842 = vperm.slane %v759, 0
    %v844 = vadd.f32 %v839, %v842
    %v845 = vadd.f32 %v840, %v842
    %vm846 = vcmp.ge.f32.partialorder %v844, 0.0
    %vm847 = vcmp.ge.f32.partialorder %v845, 0.0
    %v848 = vmul.f32 %v844, 0.01
    %v849 = vmul.f32 %v845, 0.01
    %v850 = vsel %vm846, %v844, %v848
    %v851 = vsel %vm847, %v845, %v849
    %v852 = vld [vmem:[#allocation17] sm:$0xff]
    %v853 = vld [vmem:[#allocation17 + $0x8] sm:$0xff]
    %v854 = vld [vmem:[#allocation17 + $0x10] sm:$0xff]
    %v855 = vld [vmem:[#allocation17 + $0x18] sm:$0xff]
    %v856 = vld [vmem:[#allocation18] sm:$0x1]
    %v857 = vld [vmem:[#allocation20] sm:$0x1]
    %v858 = vld [vmem:[#allocation21] sm:$0x1]
    %v860 = vperm.slane %v856, 0
    %v863 = vsel %vm685, %v850, 0
    %v866 = vsel %vm685, %v851, 0
    %868 = vmatpush.msra.mxu0 0.0
    %869 = vmatpush.msra.mxu0 0.0
    %870 = vmatpush.msra.mxu0 0.0
    %871 = vmatpush.msra.mxu0 0.0
    %872 = vmatpush.msra.mxu0 0.0
    %873 = vmatpush.msra.mxu0 0.0
    %874 = vmatpush.msra.mxu0 0.0
    %875 = vmatpush.msra.mxu0 0.0
    %876 = vmatpush.msra.mxu0 0.0
    %877 = vmatpush.msra.mxu0 0.0
    %878 = vmatpush.msra.mxu0 0.0
    %879 = vmatpush.msra.mxu0 0.0
    %880 = vmatpush.msra.mxu0 %v855
    %881 = vmatpush.msra.mxu0 %v854
    %882 = vmatpush.msra.mxu0 %v853
    %883 = vmatpush.msra.mxu0 %v852
    %884 = vmatmul.f32.gmra.mxu0 %v863
    %v885 = vpop.f32.mrf.mxu0
    %v886 = vadd.f32 %v860, %v885
    %887 = vmatmul.f32.gmra.mxu0 %v866
    %v888 = vpop.f32.mrf.mxu0
    %v889 = vadd.f32 %v860, %v888
    %890 = vdwg.mxu0
    %v891 = vsel %vm685, %v886, 0.0
    %892 = vadd.xlane.f32.xlu0 %v891
    %v893 = vpop.xlane.xlu0 %892
    %v894 = vsel %vm685, %v889, 0.0
    %895 = vadd.xlane.f32.xlu0 %v894
    %v896 = vpop.xlane.xlu0 %895
    %v897 = vmul.f32 %v893, %v698
    %v898 = vmul.f32 %v896, %v698
    %v899 = vsub.f32 %v886, %v897
    %v900 = vsub.f32 %v889, %v898
    %v901 = vmul.f32 %v899, %v899
    %v902 = vmul.f32 %v900, %v900
    %v903 = vsel %vm685, %v901, 0.0
    %904 = vadd.xlane.f32.xlu0 %v903
    %v905 = vpop.xlane.xlu0 %904
    %v906 = vsel %vm685, %v902, 0.0
    %907 = vadd.xlane.f32.xlu0 %v906
    %v908 = vpop.xlane.xlu0 %907
    %v909 = vmul.f32 %v905, %v698
    %v910 = vmul.f32 %v908, %v698
    %v911 = vadd.f32 %v909, 1e-05
    %v912 = vadd.f32 %v910, 1e-05
    %v913 = vrsqrt.pop %v911
    %v914 = vmul.f32 %v913, %v911
    %v915 = vmul.f32 %v914, %v913
    %v916 = vmul.f32 0.5, %v915
    %v917 = vsub.f32 1.5, %v916
    %v918 = vmul.f32 %v913, %v917
    %vm919 = vweird.f32 %v911
    %vm920 = vweird.f32 %v913
    %vm921 = vmor %vm919, %vm920
    %v922 = vsel %vm921, %v913, %v918
    %v923 = vrsqrt.pop %v912
    %v924 = vmul.f32 %v923, %v912
    %v925 = vmul.f32 %v924, %v923
    %v926 = vmul.f32 0.5, %v925
    %v927 = vsub.f32 1.5, %v926
    %v928 = vmul.f32 %v923, %v927
    %vm929 = vweird.f32 %v912
    %vm930 = vweird.f32 %v923
    %vm931 = vmor %vm929, %vm930
    %v932 = vsel %vm931, %v923, %v928
    %v933 = vmul.f32 %v899, %v922
    %v934 = vmul.f32 %v900, %v932
    %v936 = vperm.slane %v857, 0
    %v938 = vmul.f32 %v933, %v936
    %v939 = vmul.f32 %v934, %v936
    %v941 = vperm.slane %v858, 0
    %v943 = vadd.f32 %v938, %v941
    %v944 = vadd.f32 %v939, %v941
    %vm945 = vcmp.ge.f32.partialorder %v943, 0.0
    %vm946 = vcmp.ge.f32.partialorder %v944, 0.0
    %v947 = vmul.f32 %v943, 0.01
    %v948 = vmul.f32 %v944, 0.01
    %v949 = vsel %vm945, %v943, %v947
    %v950 = vsel %vm946, %v944, %v948
    %v951 = vld [vmem:[#allocation23] sm:$0xff]
    %v952 = vld [vmem:[#allocation23 + $0x8] sm:$0xff]
    %v953 = vld [vmem:[#allocation23 + $0x10] sm:$0xff]
    %v954 = vld [vmem:[#allocation23 + $0x18] sm:$0xff]
    %v955 = vld [vmem:[#allocation32] sm:$0x1]
    %v957 = vperm.slane %v955, 0
    %v960 = vsel %vm685, %v949, 0
    %v963 = vsel %vm685, %v950, 0
    %965 = vmatpush.msra.mxu0 0.0
    %966 = vmatpush.msra.mxu0 0.0
    %967 = vmatpush.msra.mxu0 0.0
    %968 = vmatpush.msra.mxu0 0.0
    %969 = vmatpush.msra.mxu0 0.0
    %970 = vmatpush.msra.mxu0 0.0
    %971 = vmatpush.msra.mxu0 0.0
    %972 = vmatpush.msra.mxu0 0.0
    %973 = vmatpush.msra.mxu0 0.0
    %974 = vmatpush.msra.mxu0 0.0
    %975 = vmatpush.msra.mxu0 0.0
    %976 = vmatpush.msra.mxu0 0.0
    %977 = vmatpush.msra.mxu0 %v954
    %978 = vmatpush.msra.mxu0 %v953
    %979 = vmatpush.msra.mxu0 %v952
    %980 = vmatpush.msra.mxu0 %v951
    %981 = vmatmul.f32.gmra.mxu0 %v960
    %v982 = vpop.f32.mrf.mxu0
    %v983 = vadd.f32 %v957, %v982
    %984 = vmatmul.f32.gmra.mxu0 %v963
    %v985 = vpop.f32.mrf.mxu0
    %v986 = vadd.f32 %v957, %v985
    %987 = vdwg.mxu0
    %v988 = vld [vmem:[#allocation24] sm:$0xff]
    %v989 = vld [vmem:[#allocation24 + $0x8] sm:$0xff]
    %v990 = vld [vmem:[#allocation24 + $0x10] sm:$0xff]
    %v991 = vld [vmem:[#allocation24 + $0x18] sm:$0xff]
    %v992 = vld [vmem:[#allocation33] sm:$0x1]
    %v994 = vperm.slane %v992, 0
    %996 = vmatpush.msra.mxu0 0.0
    %997 = vmatpush.msra.mxu0 0.0
    %998 = vmatpush.msra.mxu0 0.0
    %999 = vmatpush.msra.mxu0 0.0
    %1000 = vmatpush.msra.mxu0 0.0
    %1001 = vmatpush.msra.mxu0 0.0
    %1002 = vmatpush.msra.mxu0 0.0
    %1003 = vmatpush.msra.mxu0 0.0
    %1004 = vmatpush.msra.mxu0 0.0
    %1005 = vmatpush.msra.mxu0 0.0
    %1006 = vmatpush.msra.mxu0 0.0
    %1007 = vmatpush.msra.mxu0 0.0
    %1008 = vmatpush.msra.mxu0 %v991
    %1009 = vmatpush.msra.mxu0 %v990
    %1010 = vmatpush.msra.mxu0 %v989
    %1011 = vmatpush.msra.mxu0 %v988
    %1012 = vmatmul.f32.gmra.mxu0 %v960
    %v1013 = vpop.f32.mrf.mxu0
    %v1014 = vadd.f32 %v994, %v1013
    %1015 = vmatmul.f32.gmra.mxu0 %v963
    %v1016 = vpop.f32.mrf.mxu0
    %v1017 = vadd.f32 %v994, %v1016
    %1018 = vdwg.mxu0
    %v1019 = vld [vmem:[#allocation26] sm:$0xff]
    %v1020 = vld [vmem:[#allocation26 + $0x8] sm:$0xff]
    %v1021 = vld [vmem:[#allocation26 + $0x10] sm:$0xff]
    %v1022 = vld [vmem:[#allocation26 + $0x18] sm:$0xff]
    %v1023 = vld [vmem:[#allocation35] sm:$0x1]
    %v1025 = vperm.slane %v1023, 0
    %1027 = vmatpush.msra.mxu0 0.0
    %1028 = vmatpush.msra.mxu0 0.0
    %1029 = vmatpush.msra.mxu0 0.0
    %1030 = vmatpush.msra.mxu0 0.0
    %1031 = vmatpush.msra.mxu0 0.0
    %1032 = vmatpush.msra.mxu0 0.0
    %1033 = vmatpush.msra.mxu0 0.0
    %1034 = vmatpush.msra.mxu0 0.0
    %1035 = vmatpush.msra.mxu0 0.0
    %1036 = vmatpush.msra.mxu0 0.0
    %1037 = vmatpush.msra.mxu0 0.0
    %1038 = vmatpush.msra.mxu0 0.0
    %1039 = vmatpush.msra.mxu0 %v1022
    %1040 = vmatpush.msra.mxu0 %v1021
    %1041 = vmatpush.msra.mxu0 %v1020
    %1042 = vmatpush.msra.mxu0 %v1019
    %1043 = vmatmul.f32.gmra.mxu0 %v960
    %v1044 = vpop.f32.mrf.mxu0
    %v1045 = vadd.f32 %v1025, %v1044
    %1046 = vmatmul.f32.gmra.mxu0 %v963
    %v1047 = vpop.f32.mrf.mxu0
    %v1048 = vadd.f32 %v1025, %v1047
    %1049 = vdwg.mxu0
    %v1050 = vld [vmem:[#allocation27] sm:$0xff]
    %v1051 = vld [vmem:[#allocation27 + $0x8] sm:$0xff]
    %v1052 = vld [vmem:[#allocation27 + $0x10] sm:$0xff]
    %v1053 = vld [vmem:[#allocation27 + $0x18] sm:$0xff]
    %v1054 = vld [vmem:[#allocation29] sm:$0xff]
    %v1055 = vld [vmem:[#allocation29 + $0x8] sm:$0xff]
    %v1056 = vld [vmem:[#allocation29 + $0x10] sm:$0xff]
    %v1057 = vld [vmem:[#allocation29 + $0x18] sm:$0xff]
    %v1058 = vld [vmem:[#allocation30] sm:$0xff]
    %v1059 = vld [vmem:[#allocation30 + $0x8] sm:$0xff]
    %v1060 = vld [vmem:[#allocation30 + $0x10] sm:$0xff]
    %v1061 = vld [vmem:[#allocation30 + $0x18] sm:$0xff]
    %v1062 = vld [vmem:[#allocation36] sm:$0x1]
    %v1064 = vsel %vm685, 0.0, 0
    %1066 = vmatpush.msra.mxu0 0.0
    %1067 = vmatpush.msra.mxu0 0.0
    %1068 = vmatpush.msra.mxu0 0.0
    %1069 = vmatpush.msra.mxu0 0.0
    %1070 = vmatpush.msra.mxu0 0.0
    %1071 = vmatpush.msra.mxu0 0.0
    %1072 = vmatpush.msra.mxu0 0.0
    %1073 = vmatpush.msra.mxu0 0.0
    %1074 = vmatpush.msra.mxu0 0.0
    %1075 = vmatpush.msra.mxu0 0.0
    %1076 = vmatpush.msra.mxu0 0.0
    %1077 = vmatpush.msra.mxu0 0.0
    %1078 = vmatpush.msra.mxu0 %v1053
    %1079 = vmatpush.msra.mxu0 %v1052
    %1080 = vmatpush.msra.mxu0 %v1051
    %1081 = vmatpush.msra.mxu0 %v1050
    %1082 = vmatmul.f32.gmra.mxu0 %v1064
    %v1083 = vpop.f32.mrf.mxu0
    %v1084 = vadd.f32 0.0, %v1083
    %1085 = vdwg.mxu0
    %v1086 = vadd.f32 %v983, %v1084
    %v1087 = vxor.u32 %v1086, 2147483648
    %v1088 = vmul.f32 %v1087, 1.442695
    %v1089 = vpow.pop %v1088
    %v1090 = vadd.f32 %v1089, 1.0
    %v1091 = vrcp.pop %v1090
    %v1092 = vmul.f32 %v1090, %v1091
    %v1093 = vsub.f32 1.0, %v1092
    %v1094 = vmul.f32 %v1091, %v1093
    %v1095 = vadd.f32 %v1091, %v1094
    %vm1096 = vweird.f32 %v1090
    %vm1097 = vweird.f32 %v1091
    %vm1098 = vmor %vm1096, %vm1097
    %v1099 = vsel %vm1098, %v1091, %v1095
    %v1100 = vand.u32 2147483647, %v1090
    %vm1101 = vcmp.eq.f32.partialorder %v1100, 8.507059e+37
    %v1102 = vand.u32 %v1090, 2147483648
    %v1103 = vor.u32 1.1754944e-38, %v1102
    %v1104 = vsel %vm1101, %v1103, %v1099
    %v1105 = vmul.f32 1.0, %v1104
    %1106 = vmatpush.msra.mxu0 0.0
    %1107 = vmatpush.msra.mxu0 0.0
    %1108 = vmatpush.msra.mxu0 0.0
    %1109 = vmatpush.msra.mxu0 0.0
    %1110 = vmatpush.msra.mxu0 0.0
    %1111 = vmatpush.msra.mxu0 0.0
    %1112 = vmatpush.msra.mxu0 0.0
    %1113 = vmatpush.msra.mxu0 0.0
    %1114 = vmatpush.msra.mxu0 0.0
    %1115 = vmatpush.msra.mxu0 0.0
    %1116 = vmatpush.msra.mxu0 0.0
    %1117 = vmatpush.msra.mxu0 0.0
    %1118 = vmatpush.msra.mxu0 %v1057
    %1119 = vmatpush.msra.mxu0 %v1056
    %1120 = vmatpush.msra.mxu0 %v1055
    %1121 = vmatpush.msra.mxu0 %v1054
    %1122 = vmatmul.f32.gmra.mxu0 %v1064
    %v1123 = vpop.f32.mrf.mxu0
    %v1124 = vadd.f32 0.0, %v1123
    %1125 = vdwg.mxu0
    %v1126 = vadd.f32 %v1014, %v1124
    %v1127 = vxor.u32 %v1126, 2147483648
    %v1128 = vmul.f32 %v1127, 1.442695
    %v1129 = vpow.pop %v1128
    %v1130 = vadd.f32 %v1129, 1.0
    %v1131 = vrcp.pop %v1130
    %v1132 = vmul.f32 %v1130, %v1131
    %v1133 = vsub.f32 1.0, %v1132
    %v1134 = vmul.f32 %v1131, %v1133
    %v1135 = vadd.f32 %v1131, %v1134
    %vm1136 = vweird.f32 %v1130
    %vm1137 = vweird.f32 %v1131
    %vm1138 = vmor %vm1136, %vm1137
    %v1139 = vsel %vm1138, %v1131, %v1135
    %v1140 = vand.u32 2147483647, %v1130
    %vm1141 = vcmp.eq.f32.partialorder %v1140, 8.507059e+37
    %v1142 = vand.u32 %v1130, 2147483648
    %v1143 = vor.u32 1.1754944e-38, %v1142
    %v1144 = vsel %vm1141, %v1143, %v1139
    %v1145 = vmul.f32 1.0, %v1144
    %v1147 = vperm.slane %v1062, 0
    %1149 = vmatpush.msra.mxu0 0.0
    %1150 = vmatpush.msra.mxu0 0.0
    %1151 = vmatpush.msra.mxu0 0.0
    %1152 = vmatpush.msra.mxu0 0.0
    %1153 = vmatpush.msra.mxu0 0.0
    %1154 = vmatpush.msra.mxu0 0.0
    %1155 = vmatpush.msra.mxu0 0.0
    %1156 = vmatpush.msra.mxu0 0.0
    %1157 = vmatpush.msra.mxu0 0.0
    %1158 = vmatpush.msra.mxu0 0.0
    %1159 = vmatpush.msra.mxu0 0.0
    %1160 = vmatpush.msra.mxu0 0.0
    %1161 = vmatpush.msra.mxu0 %v1061
    %1162 = vmatpush.msra.mxu0 %v1060
    %1163 = vmatpush.msra.mxu0 %v1059
    %1164 = vmatpush.msra.mxu0 %v1058
    %1165 = vmatmul.f32.gmra.mxu0 %v1064
    %v1166 = vpop.f32.mrf.mxu0
    %v1167 = vadd.f32 %v1147, %v1166
    %1168 = vdwg.mxu0
    %v1169 = vmul.f32 %v1105, %v1167
    %v1170 = vadd.f32 %v1045, %v1169
    %v1171 = vtanh.pop %v1170
    %v1172 = vsub.f32 1.0, %v1145
    %v1173 = vmul.f32 %v1172, %v1171
    %v1174 = vmul.f32 %v1145, 0.0
    %v1175 = vadd.f32 %v1173, %v1174
    %vm1176 = vcmask 254976
    %1177 = vst.msk [vmem:[#allocation2] sm:$0x3] %vm1176, %v1175
    %v1179 = vsel %vm685, %v1175, 0
    %1181 = vmatpush.msra.mxu0 0.0
    %1182 = vmatpush.msra.mxu0 0.0
    %1183 = vmatpush.msra.mxu0 0.0
    %1184 = vmatpush.msra.mxu0 0.0
    %1185 = vmatpush.msra.mxu0 0.0
    %1186 = vmatpush.msra.mxu0 0.0
    %1187 = vmatpush.msra.mxu0 0.0
    %1188 = vmatpush.msra.mxu0 0.0
    %1189 = vmatpush.msra.mxu0 0.0
    %1190 = vmatpush.msra.mxu0 0.0
    %1191 = vmatpush.msra.mxu0 0.0
    %1192 = vmatpush.msra.mxu0 0.0
    %1193 = vmatpush.msra.mxu0 %v1053
    %1194 = vmatpush.msra.mxu0 %v1052
    %1195 = vmatpush.msra.mxu0 %v1051
    %1196 = vmatpush.msra.mxu0 %v1050
    %1197 = vmatmul.f32.gmra.mxu0 %v1179
    %v1198 = vpop.f32.mrf.mxu0
    %v1199 = vadd.f32 0.0, %v1198
    %1200 = vdwg.mxu0
    %v1202 = vrot.slane %v1199, 6
    %v1204 = vadd.f32 %v983, %v1202
    %v1205 = vxor.u32 %v1204, 2147483648
    %v1206 = vmul.f32 %v1205, 1.442695
    %v1207 = vpow.pop %v1206
    %v1208 = vadd.f32 %v1207, 1.0
    %v1209 = vrcp.pop %v1208
    %v1210 = vmul.f32 %v1208, %v1209
    %v1211 = vsub.f32 1.0, %v1210
    %v1212 = vmul.f32 %v1209, %v1211
    %v1213 = vadd.f32 %v1209, %v1212
    %vm1214 = vweird.f32 %v1208
    %vm1215 = vweird.f32 %v1209
    %vm1216 = vmor %vm1214, %vm1215
    %v1217 = vsel %vm1216, %v1209, %v1213
    %v1218 = vand.u32 2147483647, %v1208
    %vm1219 = vcmp.eq.f32.partialorder %v1218, 8.507059e+37
    %v1220 = vand.u32 %v1208, 2147483648
    %v1221 = vor.u32 1.1754944e-38, %v1220
    %v1222 = vsel %vm1219, %v1221, %v1217
    %v1223 = vmul.f32 1.0, %v1222
    %1224 = vmatpush.msra.mxu0 0.0
    %1225 = vmatpush.msra.mxu0 0.0
    %1226 = vmatpush.msra.mxu0 0.0
    %1227 = vmatpush.msra.mxu0 0.0
    %1228 = vmatpush.msra.mxu0 0.0
    %1229 = vmatpush.msra.mxu0 0.0
    %1230 = vmatpush.msra.mxu0 0.0
    %1231 = vmatpush.msra.mxu0 0.0
    %1232 = vmatpush.msra.mxu0 0.0
    %1233 = vmatpush.msra.mxu0 0.0
    %1234 = vmatpush.msra.mxu0 0.0
    %1235 = vmatpush.msra.mxu0 0.0
    %1236 = vmatpush.msra.mxu0 %v1057
    %1237 = vmatpush.msra.mxu0 %v1056
    %1238 = vmatpush.msra.mxu0 %v1055
    %1239 = vmatpush.msra.mxu0 %v1054
    %1240 = vmatmul.f32.gmra.mxu0 %v1179
    %v1241 = vpop.f32.mrf.mxu0
    %v1242 = vadd.f32 0.0, %v1241
    %1243 = vdwg.mxu0
    %v1245 = vrot.slane %v1242, 6
    %v1247 = vadd.f32 %v1014, %v1245
    %v1248 = vxor.u32 %v1247, 2147483648
    %v1249 = vmul.f32 %v1248, 1.442695
    %v1250 = vpow.pop %v1249
    %v1251 = vadd.f32 %v1250, 1.0
    %v1252 = vrcp.pop %v1251
    %v1253 = vmul.f32 %v1251, %v1252
    %v1254 = vsub.f32 1.0, %v1253
    %v1255 = vmul.f32 %v1252, %v1254
    %v1256 = vadd.f32 %v1252, %v1255
    %vm1257 = vweird.f32 %v1251
    %vm1258 = vweird.f32 %v1252
    %vm1259 = vmor %vm1257, %vm1258
    %v1260 = vsel %vm1259, %v1252, %v1256
    %v1261 = vand.u32 2147483647, %v1251
    %vm1262 = vcmp.eq.f32.partialorder %v1261, 8.507059e+37
    %v1263 = vand.u32 %v1251, 2147483648
    %v1264 = vor.u32 1.1754944e-38, %v1263
    %v1265 = vsel %vm1262, %v1264, %v1260
    %v1266 = vmul.f32 1.0, %v1265
    %1267 = vmatpush.msra.mxu0 0.0
    %1268 = vmatpush.msra.mxu0 0.0
    %1269 = vmatpush.msra.mxu0 0.0
    %1270 = vmatpush.msra.mxu0 0.0
    %1271 = vmatpush.msra.mxu0 0.0
    %1272 = vmatpush.msra.mxu0 0.0
    %1273 = vmatpush.msra.mxu0 0.0
    %1274 = vmatpush.msra.mxu0 0.0
    %1275 = vmatpush.msra.mxu0 0.0
    %1276 = vmatpush.msra.mxu0 0.0
    %1277 = vmatpush.msra.mxu0 0.0
    %1278 = vmatpush.msra.mxu0 0.0
    %1279 = vmatpush.msra.mxu0 %v1061
    %1280 = vmatpush.msra.mxu0 %v1060
    %1281 = vmatpush.msra.mxu0 %v1059
    %1282 = vmatpush.msra.mxu0 %v1058
    %1283 = vmatmul.f32.gmra.mxu0 %v1179
    %v1284 = vpop.f32.mrf.mxu0
    %v1285 = vadd.f32 %v1147, %v1284
    %1286 = vdwg.mxu0
    %v1288 = vrot.slane %v1285, 6
    %v1290 = vmul.f32 %v1223, %v1288
    %v1291 = vadd.f32 %v1045, %v1290
    %v1292 = vtanh.pop %v1291
    %v1293 = vsub.f32 1.0, %v1266
    %v1294 = vmul.f32 %v1293, %v1292
    %v1295 = vrot.slane %v1175, 6
    %v1297 = vmul.f32 %v1266, %v1295
    %v1298 = vadd.f32 %v1294, %v1297
    %vm1299 = vcmask 257026
    %1300 = vst.msk [vmem:[#allocation2] sm:$0xc] %vm1299, %v1298
    %v1302 = vrot.slane %v1298, 2
    %v1303 = vsel %vm685, %v1302, 0
    %1305 = vmatpush.msra.mxu0 0.0
    %1306 = vmatpush.msra.mxu0 0.0
    %1307 = vmatpush.msra.mxu0 0.0
    %1308 = vmatpush.msra.mxu0 0.0
    %1309 = vmatpush.msra.mxu0 0.0
    %1310 = vmatpush.msra.mxu0 0.0
    %1311 = vmatpush.msra.mxu0 0.0
    %1312 = vmatpush.msra.mxu0 0.0
    %1313 = vmatpush.msra.mxu0 0.0
    %1314 = vmatpush.msra.mxu0 0.0
    %1315 = vmatpush.msra.mxu0 0.0
    %1316 = vmatpush.msra.mxu0 0.0
    %1317 = vmatpush.msra.mxu0 %v1053
    %1318 = vmatpush.msra.mxu0 %v1052
    %1319 = vmatpush.msra.mxu0 %v1051
    %1320 = vmatpush.msra.mxu0 %v1050
    %1321 = vmatmul.f32.gmra.mxu0 %v1303
    %v1322 = vpop.f32.mrf.mxu0
    %v1323 = vadd.f32 0.0, %v1322
    %1324 = vdwg.mxu0
    %v1326 = vrot.slane %v1323, 4
    %v1328 = vadd.f32 %v983, %v1326
    %v1329 = vxor.u32 %v1328, 2147483648
    %v1330 = vmul.f32 %v1329, 1.442695
    %v1331 = vpow.pop %v1330
    %v1332 = vadd.f32 %v1331, 1.0
    %v1333 = vrcp.pop %v1332
    %v1334 = vmul.f32 %v1332, %v1333
    %v1335 = vsub.f32 1.0, %v1334
    %v1336 = vmul.f32 %v1333, %v1335
    %v1337 = vadd.f32 %v1333, %v1336
    %vm1338 = vweird.f32 %v1332
    %vm1339 = vweird.f32 %v1333
    %vm1340 = vmor %vm1338, %vm1339
    %v1341 = vsel %vm1340, %v1333, %v1337
    %v1342 = vand.u32 2147483647, %v1332
    %vm1343 = vcmp.eq.f32.partialorder %v1342, 8.507059e+37
    %v1344 = vand.u32 %v1332, 2147483648
    %v1345 = vor.u32 1.1754944e-38, %v1344
    %v1346 = vsel %vm1343, %v1345, %v1341
    %v1347 = vmul.f32 1.0, %v1346
    %1348 = vmatpush.msra.mxu0 0.0
    %1349 = vmatpush.msra.mxu0 0.0
    %1350 = vmatpush.msra.mxu0 0.0
    %1351 = vmatpush.msra.mxu0 0.0
    %1352 = vmatpush.msra.mxu0 0.0
    %1353 = vmatpush.msra.mxu0 0.0
    %1354 = vmatpush.msra.mxu0 0.0
    %1355 = vmatpush.msra.mxu0 0.0
    %1356 = vmatpush.msra.mxu0 0.0
    %1357 = vmatpush.msra.mxu0 0.0
    %1358 = vmatpush.msra.mxu0 0.0
    %1359 = vmatpush.msra.mxu0 0.0
    %1360 = vmatpush.msra.mxu0 %v1057
    %1361 = vmatpush.msra.mxu0 %v1056
    %1362 = vmatpush.msra.mxu0 %v1055
    %1363 = vmatpush.msra.mxu0 %v1054
    %1364 = vmatmul.f32.gmra.mxu0 %v1303
    %v1365 = vpop.f32.mrf.mxu0
    %v1366 = vadd.f32 0.0, %v1365
    %1367 = vdwg.mxu0
    %v1369 = vrot.slane %v1366, 4
    %v1371 = vadd.f32 %v1014, %v1369
    %v1372 = vxor.u32 %v1371, 2147483648
    %v1373 = vmul.f32 %v1372, 1.442695
    %v1374 = vpow.pop %v1373
    %v1375 = vadd.f32 %v1374, 1.0
    %v1376 = vrcp.pop %v1375
    %v1377 = vmul.f32 %v1375, %v1376
    %v1378 = vsub.f32 1.0, %v1377
    %v1379 = vmul.f32 %v1376, %v1378
    %v1380 = vadd.f32 %v1376, %v1379
    %vm1381 = vweird.f32 %v1375
    %vm1382 = vweird.f32 %v1376
    %vm1383 = vmor %vm1381, %vm1382
    %v1384 = vsel %vm1383, %v1376, %v1380
    %v1385 = vand.u32 2147483647, %v1375
    %vm1386 = vcmp.eq.f32.partialorder %v1385, 8.507059e+37
    %v1387 = vand.u32 %v1375, 2147483648
    %v1388 = vor.u32 1.1754944e-38, %v1387
    %v1389 = vsel %vm1386, %v1388, %v1384
    %v1390 = vmul.f32 1.0, %v1389
    %1391 = vmatpush.msra.mxu0 0.0
    %1392 = vmatpush.msra.mxu0 0.0
    %1393 = vmatpush.msra.mxu0 0.0
    %1394 = vmatpush.msra.mxu0 0.0
    %1395 = vmatpush.msra.mxu0 0.0
    %1396 = vmatpush.msra.mxu0 0.0
    %1397 = vmatpush.msra.mxu0 0.0
    %1398 = vmatpush.msra.mxu0 0.0
    %1399 = vmatpush.msra.mxu0 0.0
    %1400 = vmatpush.msra.mxu0 0.0
    %1401 = vmatpush.msra.mxu0 0.0
    %1402 = vmatpush.msra.mxu0 0.0
    %1403 = vmatpush.msra.mxu0 %v1061
    %1404 = vmatpush.msra.mxu0 %v1060
    %1405 = vmatpush.msra.mxu0 %v1059
    %1406 = vmatpush.msra.mxu0 %v1058
    %1407 = vmatmul.f32.gmra.mxu0 %v1303
    %v1408 = vpop.f32.mrf.mxu0
    %v1409 = vadd.f32 %v1147, %v1408
    %1410 = vdwg.mxu0
    %v1412 = vrot.slane %v1409, 4
    %v1414 = vmul.f32 %v1347, %v1412
    %v1415 = vadd.f32 %v1045, %v1414
    %v1416 = vtanh.pop %v1415
    %v1417 = vsub.f32 1.0, %v1390
    %v1418 = vmul.f32 %v1417, %v1416
    %v1419 = vrot.slane %v1298, 6
    %v1421 = vmul.f32 %v1390, %v1419
    %v1422 = vadd.f32 %v1418, %v1421
    %vm1423 = vcmask 259076
    %1424 = vst.msk [vmem:[#allocation2] sm:$0x30] %vm1423, %v1422
    %v1426 = vrot.slane %v1422, 4
    %v1427 = vsel %vm685, %v1426, 0
    %1429 = vmatpush.msra.mxu0 0.0
    %1430 = vmatpush.msra.mxu0 0.0
    %1431 = vmatpush.msra.mxu0 0.0
    %1432 = vmatpush.msra.mxu0 0.0
    %1433 = vmatpush.msra.mxu0 0.0
    %1434 = vmatpush.msra.mxu0 0.0
    %1435 = vmatpush.msra.mxu0 0.0
    %1436 = vmatpush.msra.mxu0 0.0
    %1437 = vmatpush.msra.mxu0 0.0
    %1438 = vmatpush.msra.mxu0 0.0
    %1439 = vmatpush.msra.mxu0 0.0
    %1440 = vmatpush.msra.mxu0 0.0
    %1441 = vmatpush.msra.mxu0 %v1053
    %1442 = vmatpush.msra.mxu0 %v1052
    %1443 = vmatpush.msra.mxu0 %v1051
    %1444 = vmatpush.msra.mxu0 %v1050
    %1445 = vmatmul.f32.gmra.mxu0 %v1427
    %v1446 = vpop.f32.mrf.mxu0
    %v1447 = vadd.f32 0.0, %v1446
    %1448 = vdwg.mxu0
    %v1450 = vrot.slane %v1447, 2
    %v1452 = vadd.f32 %v983, %v1450
    %v1453 = vxor.u32 %v1452, 2147483648
    %v1454 = vmul.f32 %v1453, 1.442695
    %v1455 = vpow.pop %v1454
    %v1456 = vadd.f32 %v1455, 1.0
    %v1457 = vrcp.pop %v1456
    %v1458 = vmul.f32 %v1456, %v1457
    %v1459 = vsub.f32 1.0, %v1458
    %v1460 = vmul.f32 %v1457, %v1459
    %v1461 = vadd.f32 %v1457, %v1460
    %vm1462 = vweird.f32 %v1456
    %vm1463 = vweird.f32 %v1457
    %vm1464 = vmor %vm1462, %vm1463
    %v1465 = vsel %vm1464, %v1457, %v1461
    %v1466 = vand.u32 2147483647, %v1456
    %vm1467 = vcmp.eq.f32.partialorder %v1466, 8.507059e+37
    %v1468 = vand.u32 %v1456, 2147483648
    %v1469 = vor.u32 1.1754944e-38, %v1468
    %v1470 = vsel %vm1467, %v1469, %v1465
    %v1471 = vmul.f32 1.0, %v1470
    %1472 = vmatpush.msra.mxu0 0.0
    %1473 = vmatpush.msra.mxu0 0.0
    %1474 = vmatpush.msra.mxu0 0.0
    %1475 = vmatpush.msra.mxu0 0.0
    %1476 = vmatpush.msra.mxu0 0.0
    %1477 = vmatpush.msra.mxu0 0.0
    %1478 = vmatpush.msra.mxu0 0.0
    %1479 = vmatpush.msra.mxu0 0.0
    %1480 = vmatpush.msra.mxu0 0.0
    %1481 = vmatpush.msra.mxu0 0.0
    %1482 = vmatpush.msra.mxu0 0.0
    %1483 = vmatpush.msra.mxu0 0.0
    %1484 = vmatpush.msra.mxu0 %v1057
    %1485 = vmatpush.msra.mxu0 %v1056
    %1486 = vmatpush.msra.mxu0 %v1055
    %1487 = vmatpush.msra.mxu0 %v1054
    %1488 = vmatmul.f32.gmra.mxu0 %v1427
    %v1489 = vpop.f32.mrf.mxu0
    %v1490 = vadd.f32 0.0, %v1489
    %1491 = vdwg.mxu0
    %v1493 = vrot.slane %v1490, 2
    %v1495 = vadd.f32 %v1014, %v1493
    %v1496 = vxor.u32 %v1495, 2147483648
    %v1497 = vmul.f32 %v1496, 1.442695
    %v1498 = vpow.pop %v1497
    %v1499 = vadd.f32 %v1498, 1.0
    %v1500 = vrcp.pop %v1499
    %v1501 = vmul.f32 %v1499, %v1500
    %v1502 = vsub.f32 1.0, %v1501
    %v1503 = vmul.f32 %v1500, %v1502
    %v1504 = vadd.f32 %v1500, %v1503
    %vm1505 = vweird.f32 %v1499
    %vm1506 = vweird.f32 %v1500
    %vm1507 = vmor %vm1505, %vm1506
    %v1508 = vsel %vm1507, %v1500, %v1504
    %v1509 = vand.u32 2147483647, %v1499
    %vm1510 = vcmp.eq.f32.partialorder %v1509, 8.507059e+37
    %v1511 = vand.u32 %v1499, 2147483648
    %v1512 = vor.u32 1.1754944e-38, %v1511
    %v1513 = vsel %vm1510, %v1512, %v1508
    %v1514 = vmul.f32 1.0, %v1513
    %1515 = vmatpush.msra.mxu0 0.0
    %1516 = vmatpush.msra.mxu0 0.0
    %1517 = vmatpush.msra.mxu0 0.0
    %1518 = vmatpush.msra.mxu0 0.0
    %1519 = vmatpush.msra.mxu0 0.0
    %1520 = vmatpush.msra.mxu0 0.0
    %1521 = vmatpush.msra.mxu0 0.0
    %1522 = vmatpush.msra.mxu0 0.0
    %1523 = vmatpush.msra.mxu0 0.0
    %1524 = vmatpush.msra.mxu0 0.0
    %1525 = vmatpush.msra.mxu0 0.0
    %1526 = vmatpush.msra.mxu0 0.0
    %1527 = vmatpush.msra.mxu0 %v1061
    %1528 = vmatpush.msra.mxu0 %v1060
    %1529 = vmatpush.msra.mxu0 %v1059
    %1530 = vmatpush.msra.mxu0 %v1058
    %1531 = vmatmul.f32.gmra.mxu0 %v1427
    %v1532 = vpop.f32.mrf.mxu0
    %v1533 = vadd.f32 %v1147, %v1532
    %1534 = vdwg.mxu0
    %v1536 = vrot.slane %v1533, 2
    %v1538 = vmul.f32 %v1471, %v1536
    %v1539 = vadd.f32 %v1045, %v1538
    %v1540 = vtanh.pop %v1539
    %v1541 = vsub.f32 1.0, %v1514
    %v1542 = vmul.f32 %v1541, %v1540
    %v1543 = vrot.slane %v1422, 6
    %v1545 = vmul.f32 %v1514, %v1543
    %v1546 = vadd.f32 %v1542, %v1545
    %vm1547 = vcmask 261126
    %1548 = vst.msk [vmem:[#allocation2] sm:$0xc0] %vm1547, %v1546
    %v1550 = vrot.slane %v1546, 6
    %v1551 = vsel %vm685, %v1550, 0
    %1553 = vmatpush.msra.mxu0 0.0
    %1554 = vmatpush.msra.mxu0 0.0
    %1555 = vmatpush.msra.mxu0 0.0
    %1556 = vmatpush.msra.mxu0 0.0
    %1557 = vmatpush.msra.mxu0 0.0
    %1558 = vmatpush.msra.mxu0 0.0
    %1559 = vmatpush.msra.mxu0 0.0
    %1560 = vmatpush.msra.mxu0 0.0
    %1561 = vmatpush.msra.mxu0 0.0
    %1562 = vmatpush.msra.mxu0 0.0
    %1563 = vmatpush.msra.mxu0 0.0
    %1564 = vmatpush.msra.mxu0 0.0
    %1565 = vmatpush.msra.mxu0 %v1053
    %1566 = vmatpush.msra.mxu0 %v1052
    %1567 = vmatpush.msra.mxu0 %v1051
    %1568 = vmatpush.msra.mxu0 %v1050
    %1569 = vmatmul.f32.gmra.mxu0 %v1551
    %v1570 = vpop.f32.mrf.mxu0
    %v1571 = vadd.f32 0.0, %v1570
    %1572 = vdwg.mxu0
    %v1573 = vadd.f32 %v986, %v1571
    %v1574 = vxor.u32 %v1573, 2147483648
    %v1575 = vmul.f32 %v1574, 1.442695
    %v1576 = vpow.pop %v1575
    %v1577 = vadd.f32 %v1576, 1.0
    %v1578 = vrcp.pop %v1577
    %v1579 = vmul.f32 %v1577, %v1578
    %v1580 = vsub.f32 1.0, %v1579
    %v1581 = vmul.f32 %v1578, %v1580
    %v1582 = vadd.f32 %v1578, %v1581
    %vm1583 = vweird.f32 %v1577
    %vm1584 = vweird.f32 %v1578
    %vm1585 = vmor %vm1583, %vm1584
    %v1586 = vsel %vm1585, %v1578, %v1582
    %v1587 = vand.u32 2147483647, %v1577
    %vm1588 = vcmp.eq.f32.partialorder %v1587, 8.507059e+37
    %v1589 = vand.u32 %v1577, 2147483648
    %v1590 = vor.u32 1.1754944e-38, %v1589
    %v1591 = vsel %vm1588, %v1590, %v1586
    %v1592 = vmul.f32 1.0, %v1591
    %1593 = vmatpush.msra.mxu0 0.0
    %1594 = vmatpush.msra.mxu0 0.0
    %1595 = vmatpush.msra.mxu0 0.0
    %1596 = vmatpush.msra.mxu0 0.0
    %1597 = vmatpush.msra.mxu0 0.0
    %1598 = vmatpush.msra.mxu0 0.0
    %1599 = vmatpush.msra.mxu0 0.0
    %1600 = vmatpush.msra.mxu0 0.0
    %1601 = vmatpush.msra.mxu0 0.0
    %1602 = vmatpush.msra.mxu0 0.0
    %1603 = vmatpush.msra.mxu0 0.0
    %1604 = vmatpush.msra.mxu0 0.0
    %1605 = vmatpush.msra.mxu0 %v1057
    %1606 = vmatpush.msra.mxu0 %v1056
    %1607 = vmatpush.msra.mxu0 %v1055
    %1608 = vmatpush.msra.mxu0 %v1054
    %1609 = vmatmul.f32.gmra.mxu0 %v1551
    %v1610 = vpop.f32.mrf.mxu0
    %v1611 = vadd.f32 0.0, %v1610
    %1612 = vdwg.mxu0
    %v1613 = vadd.f32 %v1017, %v1611
    %v1614 = vxor.u32 %v1613, 2147483648
    %v1615 = vmul.f32 %v1614, 1.442695
    %v1616 = vpow.pop %v1615
    %v1617 = vadd.f32 %v1616, 1.0
    %v1618 = vrcp.pop %v1617
    %v1619 = vmul.f32 %v1617, %v1618
    %v1620 = vsub.f32 1.0, %v1619
    %v1621 = vmul.f32 %v1618, %v1620
    %v1622 = vadd.f32 %v1618, %v1621
    %vm1623 = vweird.f32 %v1617
    %vm1624 = vweird.f32 %v1618
    %vm1625 = vmor %vm1623, %vm1624
    %v1626 = vsel %vm1625, %v1618, %v1622
    %v1627 = vand.u32 2147483647, %v1617
    %vm1628 = vcmp.eq.f32.partialorder %v1627, 8.507059e+37
    %v1629 = vand.u32 %v1617, 2147483648
    %v1630 = vor.u32 1.1754944e-38, %v1629
    %v1631 = vsel %vm1628, %v1630, %v1626
    %v1632 = vmul.f32 1.0, %v1631
    %1633 = vmatpush.msra.mxu0 0.0
    %1634 = vmatpush.msra.mxu0 0.0
    %1635 = vmatpush.msra.mxu0 0.0
    %1636 = vmatpush.msra.mxu0 0.0
    %1637 = vmatpush.msra.mxu0 0.0
    %1638 = vmatpush.msra.mxu0 0.0
    %1639 = vmatpush.msra.mxu0 0.0
    %1640 = vmatpush.msra.mxu0 0.0
    %1641 = vmatpush.msra.mxu0 0.0
    %1642 = vmatpush.msra.mxu0 0.0
    %1643 = vmatpush.msra.mxu0 0.0
    %1644 = vmatpush.msra.mxu0 0.0
    %1645 = vmatpush.msra.mxu0 %v1061
    %1646 = vmatpush.msra.mxu0 %v1060
    %1647 = vmatpush.msra.mxu0 %v1059
    %1648 = vmatpush.msra.mxu0 %v1058
    %1649 = vmatmul.f32.gmra.mxu0 %v1551
    %v1650 = vpop.f32.mrf.mxu0
    %v1651 = vadd.f32 %v1147, %v1650
    %1652 = vdwg.mxu0
    %v1653 = vmul.f32 %v1592, %v1651
    %v1654 = vadd.f32 %v1048, %v1653
    %v1655 = vtanh.pop %v1654
    %v1656 = vsub.f32 1.0, %v1632
    %v1657 = vmul.f32 %v1656, %v1655
    %v1659 = vmul.f32 %v1632, %v1550
    %v1660 = vadd.f32 %v1657, %v1659
    %1661 = vst.msk [vmem:[#allocation2 + $0x8] sm:$0x3] %vm1176, %v1660
    %v1663 = vsel %vm685, %v1660, 0
    %1665 = vmatpush.msra.mxu0 0.0
    %1666 = vmatpush.msra.mxu0 0.0
    %1667 = vmatpush.msra.mxu0 0.0
    %1668 = vmatpush.msra.mxu0 0.0
    %1669 = vmatpush.msra.mxu0 0.0
    %1670 = vmatpush.msra.mxu0 0.0
    %1671 = vmatpush.msra.mxu0 0.0
    %1672 = vmatpush.msra.mxu0 0.0
    %1673 = vmatpush.msra.mxu0 0.0
    %1674 = vmatpush.msra.mxu0 0.0
    %1675 = vmatpush.msra.mxu0 0.0
    %1676 = vmatpush.msra.mxu0 0.0
    %1677 = vmatpush.msra.mxu0 %v1053
    %1678 = vmatpush.msra.mxu0 %v1052
    %1679 = vmatpush.msra.mxu0 %v1051
    %1680 = vmatpush.msra.mxu0 %v1050
    %1681 = vmatmul.f32.gmra.mxu0 %v1663
    %v1682 = vpop.f32.mrf.mxu0
    %v1683 = vadd.f32 0.0, %v1682
    %1684 = vdwg.mxu0
    %v1686 = vrot.slane %v1683, 6
    %v1688 = vadd.f32 %v986, %v1686
    %v1689 = vxor.u32 %v1688, 2147483648
    %v1690 = vmul.f32 %v1689, 1.442695
    %v1691 = vpow.pop %v1690
    %v1692 = vadd.f32 %v1691, 1.0
    %v1693 = vrcp.pop %v1692
    %v1694 = vmul.f32 %v1692, %v1693
    %v1695 = vsub.f32 1.0, %v1694
    %v1696 = vmul.f32 %v1693, %v1695
    %v1697 = vadd.f32 %v1693, %v1696
    %vm1698 = vweird.f32 %v1692
    %vm1699 = vweird.f32 %v1693
    %vm1700 = vmor %vm1698, %vm1699
    %v1701 = vsel %vm1700, %v1693, %v1697
    %v1702 = vand.u32 2147483647, %v1692
    %vm1703 = vcmp.eq.f32.partialorder %v1702, 8.507059e+37
    %v1704 = vand.u32 %v1692, 2147483648
    %v1705 = vor.u32 1.1754944e-38, %v1704
    %v1706 = vsel %vm1703, %v1705, %v1701
    %v1707 = vmul.f32 1.0, %v1706
    %1708 = vmatpush.msra.mxu0 0.0
    %1709 = vmatpush.msra.mxu0 0.0
    %1710 = vmatpush.msra.mxu0 0.0
    %1711 = vmatpush.msra.mxu0 0.0
    %1712 = vmatpush.msra.mxu0 0.0
    %1713 = vmatpush.msra.mxu0 0.0
    %1714 = vmatpush.msra.mxu0 0.0
    %1715 = vmatpush.msra.mxu0 0.0
    %1716 = vmatpush.msra.mxu0 0.0
    %1717 = vmatpush.msra.mxu0 0.0
    %1718 = vmatpush.msra.mxu0 0.0
    %1719 = vmatpush.msra.mxu0 0.0
    %1720 = vmatpush.msra.mxu0 %v1057
    %1721 = vmatpush.msra.mxu0 %v1056
    %1722 = vmatpush.msra.mxu0 %v1055
    %1723 = vmatpush.msra.mxu0 %v1054
    %1724 = vmatmul.f32.gmra.mxu0 %v1663
    %v1725 = vpop.f32.mrf.mxu0
    %v1726 = vadd.f32 0.0, %v1725
    %1727 = vdwg.mxu0
    %v1729 = vrot.slane %v1726, 6
    %v1731 = vadd.f32 %v1017, %v1729
    %v1732 = vxor.u32 %v1731, 2147483648
    %v1733 = vmul.f32 %v1732, 1.442695
    %v1734 = vpow.pop %v1733
    %v1735 = vadd.f32 %v1734, 1.0
    %v1736 = vrcp.pop %v1735
    %v1737 = vmul.f32 %v1735, %v1736
    %v1738 = vsub.f32 1.0, %v1737
    %v1739 = vmul.f32 %v1736, %v1738
    %v1740 = vadd.f32 %v1736, %v1739
    %vm1741 = vweird.f32 %v1735
    %vm1742 = vweird.f32 %v1736
    %vm1743 = vmor %vm1741, %vm1742
    %v1744 = vsel %vm1743, %v1736, %v1740
    %v1745 = vand.u32 2147483647, %v1735
    %vm1746 = vcmp.eq.f32.partialorder %v1745, 8.507059e+37
    %v1747 = vand.u32 %v1735, 2147483648
    %v1748 = vor.u32 1.1754944e-38, %v1747
    %v1749 = vsel %vm1746, %v1748, %v1744
    %v1750 = vmul.f32 1.0, %v1749
    %1751 = vmatpush.msra.mxu0 0.0
    %1752 = vmatpush.msra.mxu0 0.0
    %1753 = vmatpush.msra.mxu0 0.0
    %1754 = vmatpush.msra.mxu0 0.0
    %1755 = vmatpush.msra.mxu0 0.0
    %1756 = vmatpush.msra.mxu0 0.0
    %1757 = vmatpush.msra.mxu0 0.0
    %1758 = vmatpush.msra.mxu0 0.0
    %1759 = vmatpush.msra.mxu0 0.0
    %1760 = vmatpush.msra.mxu0 0.0
    %1761 = vmatpush.msra.mxu0 0.0
    %1762 = vmatpush.msra.mxu0 0.0
    %1763 = vmatpush.msra.mxu0 %v1061
    %1764 = vmatpush.msra.mxu0 %v1060
    %1765 = vmatpush.msra.mxu0 %v1059
    %1766 = vmatpush.msra.mxu0 %v1058
    %1767 = vmatmul.f32.gmra.mxu0 %v1663
    %v1768 = vpop.f32.mrf.mxu0
    %v1769 = vadd.f32 %v1147, %v1768
    %1770 = vdwg.mxu0
    %v1772 = vrot.slane %v1769, 6
    %v1774 = vmul.f32 %v1707, %v1772
    %v1775 = vadd.f32 %v1048, %v1774
    %v1776 = vtanh.pop %v1775
    %v1777 = vsub.f32 1.0, %v1750
    %v1778 = vmul.f32 %v1777, %v1776
    %v1779 = vrot.slane %v1660, 6
    %v1781 = vmul.f32 %v1750, %v1779
    %v1782 = vadd.f32 %v1778, %v1781
    %1783 = vst.msk [vmem:[#allocation2 + $0x8] sm:$0xc] %vm1299, %v1782
    %v1785 = vrot.slane %v1782, 2
    %v1786 = vsel %vm685, %v1785, 0
    %1788 = vmatpush.msra.mxu0 0.0
    %1789 = vmatpush.msra.mxu0 0.0
    %1790 = vmatpush.msra.mxu0 0.0
    %1791 = vmatpush.msra.mxu0 0.0
    %1792 = vmatpush.msra.mxu0 0.0
    %1793 = vmatpush.msra.mxu0 0.0
    %1794 = vmatpush.msra.mxu0 0.0
    %1795 = vmatpush.msra.mxu0 0.0
    %1796 = vmatpush.msra.mxu0 0.0
    %1797 = vmatpush.msra.mxu0 0.0
    %1798 = vmatpush.msra.mxu0 0.0
    %1799 = vmatpush.msra.mxu0 0.0
    %1800 = vmatpush.msra.mxu0 %v1053
    %1801 = vmatpush.msra.mxu0 %v1052
    %1802 = vmatpush.msra.mxu0 %v1051
    %1803 = vmatpush.msra.mxu0 %v1050
    %1804 = vmatmul.f32.gmra.mxu0 %v1786
    %v1805 = vpop.f32.mrf.mxu0
    %v1806 = vadd.f32 0.0, %v1805
    %1807 = vdwg.mxu0
    %v1809 = vrot.slane %v1806, 4
    %v1811 = vadd.f32 %v986, %v1809
    %v1812 = vxor.u32 %v1811, 2147483648
    %v1813 = vmul.f32 %v1812, 1.442695
    %v1814 = vpow.pop %v1813
    %v1815 = vadd.f32 %v1814, 1.0
    %v1816 = vrcp.pop %v1815
    %v1817 = vmul.f32 %v1815, %v1816
    %v1818 = vsub.f32 1.0, %v1817
    %v1819 = vmul.f32 %v1816, %v1818
    %v1820 = vadd.f32 %v1816, %v1819
    %vm1821 = vweird.f32 %v1815
    %vm1822 = vweird.f32 %v1816
    %vm1823 = vmor %vm1821, %vm1822
    %v1824 = vsel %vm1823, %v1816, %v1820
    %v1825 = vand.u32 2147483647, %v1815
    %vm1826 = vcmp.eq.f32.partialorder %v1825, 8.507059e+37
    %v1827 = vand.u32 %v1815, 2147483648
    %v1828 = vor.u32 1.1754944e-38, %v1827
    %v1829 = vsel %vm1826, %v1828, %v1824
    %v1830 = vmul.f32 1.0, %v1829
    %1831 = vmatpush.msra.mxu0 0.0
    %1832 = vmatpush.msra.mxu0 0.0
    %1833 = vmatpush.msra.mxu0 0.0
    %1834 = vmatpush.msra.mxu0 0.0
    %1835 = vmatpush.msra.mxu0 0.0
    %1836 = vmatpush.msra.mxu0 0.0
    %1837 = vmatpush.msra.mxu0 0.0
    %1838 = vmatpush.msra.mxu0 0.0
    %1839 = vmatpush.msra.mxu0 0.0
    %1840 = vmatpush.msra.mxu0 0.0
    %1841 = vmatpush.msra.mxu0 0.0
    %1842 = vmatpush.msra.mxu0 0.0
    %1843 = vmatpush.msra.mxu0 %v1057
    %1844 = vmatpush.msra.mxu0 %v1056
    %1845 = vmatpush.msra.mxu0 %v1055
    %1846 = vmatpush.msra.mxu0 %v1054
    %1847 = vmatmul.f32.gmra.mxu0 %v1786
    %v1848 = vpop.f32.mrf.mxu0
    %v1849 = vadd.f32 0.0, %v1848
    %1850 = vdwg.mxu0
    %v1852 = vrot.slane %v1849, 4
    %v1854 = vadd.f32 %v1017, %v1852
    %v1855 = vxor.u32 %v1854, 2147483648
    %v1856 = vmul.f32 %v1855, 1.442695
    %v1857 = vpow.pop %v1856
    %v1858 = vadd.f32 %v1857, 1.0
    %v1859 = vrcp.pop %v1858
    %v1860 = vmul.f32 %v1858, %v1859
    %v1861 = vsub.f32 1.0, %v1860
    %v1862 = vmul.f32 %v1859, %v1861
    %v1863 = vadd.f32 %v1859, %v1862
    %vm1864 = vweird.f32 %v1858
    %vm1865 = vweird.f32 %v1859
    %vm1866 = vmor %vm1864, %vm1865
    %v1867 = vsel %vm1866, %v1859, %v1863
    %v1868 = vand.u32 2147483647, %v1858
    %vm1869 = vcmp.eq.f32.partialorder %v1868, 8.507059e+37
    %v1870 = vand.u32 %v1858, 2147483648
    %v1871 = vor.u32 1.1754944e-38, %v1870
    %v1872 = vsel %vm1869, %v1871, %v1867
    %v1873 = vmul.f32 1.0, %v1872
    %1874 = vmatpush.msra.mxu0 0.0
    %1875 = vmatpush.msra.mxu0 0.0
    %1876 = vmatpush.msra.mxu0 0.0
    %1877 = vmatpush.msra.mxu0 0.0
    %1878 = vmatpush.msra.mxu0 0.0
    %1879 = vmatpush.msra.mxu0 0.0
    %1880 = vmatpush.msra.mxu0 0.0
    %1881 = vmatpush.msra.mxu0 0.0
    %1882 = vmatpush.msra.mxu0 0.0
    %1883 = vmatpush.msra.mxu0 0.0
    %1884 = vmatpush.msra.mxu0 0.0
    %1885 = vmatpush.msra.mxu0 0.0
    %1886 = vmatpush.msra.mxu0 %v1061
    %1887 = vmatpush.msra.mxu0 %v1060
    %1888 = vmatpush.msra.mxu0 %v1059
    %1889 = vmatpush.msra.mxu0 %v1058
    %1890 = vmatmul.f32.gmra.mxu0 %v1786
    %v1891 = vpop.f32.mrf.mxu0
    %v1892 = vadd.f32 %v1147, %v1891
    %1893 = vdwg.mxu0
    %v1895 = vrot.slane %v1892, 4
    %v1897 = vmul.f32 %v1830, %v1895
    %v1898 = vadd.f32 %v1048, %v1897
    %v1899 = vtanh.pop %v1898
    %v1900 = vsub.f32 1.0, %v1873
    %v1901 = vmul.f32 %v1900, %v1899
    %v1902 = vrot.slane %v1782, 6
    %v1904 = vmul.f32 %v1873, %v1902
    %v1905 = vadd.f32 %v1901, %v1904
    %1906 = vst.msk [vmem:[#allocation2 + $0x8] sm:$0x30] %vm1423, %v1905
    %v1908 = vrot.slane %v1905, 4
    %v1909 = vsel %vm685, %v1908, 0
    %1911 = vmatpush.msra.mxu0 0.0
    %1912 = vmatpush.msra.mxu0 0.0
    %1913 = vmatpush.msra.mxu0 0.0
    %1914 = vmatpush.msra.mxu0 0.0
    %1915 = vmatpush.msra.mxu0 0.0
    %1916 = vmatpush.msra.mxu0 0.0
    %1917 = vmatpush.msra.mxu0 0.0
    %1918 = vmatpush.msra.mxu0 0.0
    %1919 = vmatpush.msra.mxu0 0.0
    %1920 = vmatpush.msra.mxu0 0.0
    %1921 = vmatpush.msra.mxu0 0.0
    %1922 = vmatpush.msra.mxu0 0.0
    %1923 = vmatpush.msra.mxu0 %v1053
    %1924 = vmatpush.msra.mxu0 %v1052
    %1925 = vmatpush.msra.mxu0 %v1051
    %1926 = vmatpush.msra.mxu0 %v1050
    %1927 = vmatmul.f32.gmra.mxu0 %v1909
    %v1928 = vpop.f32.mrf.mxu0
    %v1929 = vadd.f32 0.0, %v1928
    %1930 = vdwg.mxu0
    %v1932 = vrot.slane %v1929, 2
    %v1934 = vadd.f32 %v986, %v1932
    %v1935 = vxor.u32 %v1934, 2147483648
    %v1936 = vmul.f32 %v1935, 1.442695
    %v1937 = vpow.pop %v1936
    %v1938 = vadd.f32 %v1937, 1.0
    %v1939 = vrcp.pop %v1938
    %v1940 = vmul.f32 %v1938, %v1939
    %v1941 = vsub.f32 1.0, %v1940
    %v1942 = vmul.f32 %v1939, %v1941
    %v1943 = vadd.f32 %v1939, %v1942
    %vm1944 = vweird.f32 %v1938
    %vm1945 = vweird.f32 %v1939
    %vm1946 = vmor %vm1944, %vm1945
    %v1947 = vsel %vm1946, %v1939, %v1943
    %v1948 = vand.u32 2147483647, %v1938
    %vm1949 = vcmp.eq.f32.partialorder %v1948, 8.507059e+37
    %v1950 = vand.u32 %v1938, 2147483648
    %v1951 = vor.u32 1.1754944e-38, %v1950
    %v1952 = vsel %vm1949, %v1951, %v1947
    %v1953 = vmul.f32 1.0, %v1952
    %1954 = vmatpush.msra.mxu0 0.0
    %1955 = vmatpush.msra.mxu0 0.0
    %1956 = vmatpush.msra.mxu0 0.0
    %1957 = vmatpush.msra.mxu0 0.0
    %1958 = vmatpush.msra.mxu0 0.0
    %1959 = vmatpush.msra.mxu0 0.0
    %1960 = vmatpush.msra.mxu0 0.0
    %1961 = vmatpush.msra.mxu0 0.0
    %1962 = vmatpush.msra.mxu0 0.0
    %1963 = vmatpush.msra.mxu0 0.0
    %1964 = vmatpush.msra.mxu0 0.0
    %1965 = vmatpush.msra.mxu0 0.0
    %1966 = vmatpush.msra.mxu0 %v1057
    %1967 = vmatpush.msra.mxu0 %v1056
    %1968 = vmatpush.msra.mxu0 %v1055
    %1969 = vmatpush.msra.mxu0 %v1054
    %1970 = vmatmul.f32.gmra.mxu0 %v1909
    %v1971 = vpop.f32.mrf.mxu0
    %v1972 = vadd.f32 0.0, %v1971
    %1973 = vdwg.mxu0
    %v1975 = vrot.slane %v1972, 2
    %v1977 = vadd.f32 %v1017, %v1975
    %v1978 = vxor.u32 %v1977, 2147483648
    %v1979 = vmul.f32 %v1978, 1.442695
    %v1980 = vpow.pop %v1979
    %v1981 = vadd.f32 %v1980, 1.0
    %v1982 = vrcp.pop %v1981
    %v1983 = vmul.f32 %v1981, %v1982
    %v1984 = vsub.f32 1.0, %v1983
    %v1985 = vmul.f32 %v1982, %v1984
    %v1986 = vadd.f32 %v1982, %v1985
    %vm1987 = vweird.f32 %v1981
    %vm1988 = vweird.f32 %v1982
    %vm1989 = vmor %vm1987, %vm1988
    %v1990 = vsel %vm1989, %v1982, %v1986
    %v1991 = vand.u32 2147483647, %v1981
    %vm1992 = vcmp.eq.f32.partialorder %v1991, 8.507059e+37
    %v1993 = vand.u32 %v1981, 2147483648
    %v1994 = vor.u32 1.1754944e-38, %v1993
    %v1995 = vsel %vm1992, %v1994, %v1990
    %v1996 = vmul.f32 1.0, %v1995
    %1997 = vmatpush.msra.mxu0 0.0
    %1998 = vmatpush.msra.mxu0 0.0
    %1999 = vmatpush.msra.mxu0 0.0
    %2000 = vmatpush.msra.mxu0 0.0
    %2001 = vmatpush.msra.mxu0 0.0
    %2002 = vmatpush.msra.mxu0 0.0
    %2003 = vmatpush.msra.mxu0 0.0
    %2004 = vmatpush.msra.mxu0 0.0
    %2005 = vmatpush.msra.mxu0 0.0
    %2006 = vmatpush.msra.mxu0 0.0
    %2007 = vmatpush.msra.mxu0 0.0
    %2008 = vmatpush.msra.mxu0 0.0
    %2009 = vmatpush.msra.mxu0 %v1061
    %2010 = vmatpush.msra.mxu0 %v1060
    %2011 = vmatpush.msra.mxu0 %v1059
    %2012 = vmatpush.msra.mxu0 %v1058
    %2013 = vmatmul.f32.gmra.mxu0 %v1909
    %v2014 = vpop.f32.mrf.mxu0
    %v2015 = vadd.f32 %v1147, %v2014
    %2016 = vdwg.mxu0
    %v2018 = vrot.slane %v2015, 2
    %v2020 = vmul.f32 %v1953, %v2018
    %v2021 = vadd.f32 %v1048, %v2020
    %v2022 = vtanh.pop %v2021
    %v2023 = vsub.f32 1.0, %v1996
    %v2024 = vmul.f32 %v2023, %v2022
    %v2025 = vrot.slane %v1905, 6
    %v2027 = vmul.f32 %v1996, %v2025
    %v2028 = vadd.f32 %v2024, %v2027
    %2029 = vst.msk [vmem:[#allocation2 + $0x8] sm:$0xc0] %vm1547, %v2028
    %2030 = vst.msk [vmem:[#allocation57 - $0x6] sm:$0xc0] %vm1547, %v2028
    %v2031 = vld [vmem:[#allocation2] sm:$0xff]
    %v2032 = vld [vmem:[#allocation2 + $0x8] sm:$0xff]
    %v2033 = vld [vmem:[#allocation38] sm:$0xff]
    %v2034 = vld [vmem:[#allocation38 + $0x8] sm:$0xff]
    %v2035 = vld [vmem:[#allocation38 + $0x10] sm:$0xff]
    %v2036 = vld [vmem:[#allocation38 + $0x18] sm:$0xff]
    %v2037 = vld [vmem:[#allocation39] sm:$0x1]
    %v2038 = vld [vmem:[#allocation41] sm:$0x1]
    %v2039 = vld [vmem:[#allocation42] sm:$0x1]
    %v2041 = vperm.slane %v2037, 0
    %v2044 = vsel %vm685, %v2031, 0
    %v2047 = vsel %vm685, %v2032, 0
    %2049 = vmatpush.msra.mxu0 0.0
    %2050 = vmatpush.msra.mxu0 0.0
    %2051 = vmatpush.msra.mxu0 0.0
    %2052 = vmatpush.msra.mxu0 0.0
    %2053 = vmatpush.msra.mxu0 0.0
    %2054 = vmatpush.msra.mxu0 0.0
    %2055 = vmatpush.msra.mxu0 0.0
    %2056 = vmatpush.msra.mxu0 0.0
    %2057 = vmatpush.msra.mxu0 0.0
    %2058 = vmatpush.msra.mxu0 0.0
    %2059 = vmatpush.msra.mxu0 0.0
    %2060 = vmatpush.msra.mxu0 0.0
    %2061 = vmatpush.msra.mxu0 %v2036
    %2062 = vmatpush.msra.mxu0 %v2035
    %2063 = vmatpush.msra.mxu0 %v2034
    %2064 = vmatpush.msra.mxu0 %v2033
    %2065 = vmatmul.f32.gmra.mxu0 %v2044
    %v2066 = vpop.f32.mrf.mxu0
    %v2067 = vadd.f32 %v2041, %v2066
    %2068 = vmatmul.f32.gmra.mxu0 %v2047
    %v2069 = vpop.f32.mrf.mxu0
    %v2070 = vadd.f32 %v2041, %v2069
    %2071 = vdwg.mxu0
    %v2072 = vsel %vm685, %v2067, 0.0
    %2073 = vadd.xlane.f32.xlu0 %v2072
    %v2074 = vpop.xlane.xlu0 %2073
    %v2075 = vsel %vm685, %v2070, 0.0
    %2076 = vadd.xlane.f32.xlu0 %v2075
    %v2077 = vpop.xlane.xlu0 %2076
    %v2078 = vmul.f32 %v2074, %v698
    %v2079 = vmul.f32 %v2077, %v698
    %v2080 = vsub.f32 %v2067, %v2078
    %v2081 = vsub.f32 %v2070, %v2079
    %v2082 = vmul.f32 %v2080, %v2080
    %v2083 = vmul.f32 %v2081, %v2081
    %v2084 = vsel %vm685, %v2082, 0.0
    %2085 = vadd.xlane.f32.xlu0 %v2084
    %v2086 = vpop.xlane.xlu0 %2085
    %v2087 = vsel %vm685, %v2083, 0.0
    %2088 = vadd.xlane.f32.xlu0 %v2087
    %v2089 = vpop.xlane.xlu0 %2088
    %v2090 = vmul.f32 %v2086, %v698
    %v2091 = vmul.f32 %v2089, %v698
    %v2092 = vadd.f32 %v2090, 1e-05
    %v2093 = vadd.f32 %v2091, 1e-05
    %v2094 = vrsqrt.pop %v2092
    %v2095 = vmul.f32 %v2094, %v2092
    %v2096 = vmul.f32 %v2095, %v2094
    %v2097 = vmul.f32 0.5, %v2096
    %v2098 = vsub.f32 1.5, %v2097
    %v2099 = vmul.f32 %v2094, %v2098
    %vm2100 = vweird.f32 %v2092
    %vm2101 = vweird.f32 %v2094
    %vm2102 = vmor %vm2100, %vm2101
    %v2103 = vsel %vm2102, %v2094, %v2099
    %v2104 = vrsqrt.pop %v2093
    %v2105 = vmul.f32 %v2104, %v2093
    %v2106 = vmul.f32 %v2105, %v2104
    %v2107 = vmul.f32 0.5, %v2106
    %v2108 = vsub.f32 1.5, %v2107
    %v2109 = vmul.f32 %v2104, %v2108
    %vm2110 = vweird.f32 %v2093
    %vm2111 = vweird.f32 %v2104
    %vm2112 = vmor %vm2110, %vm2111
    %v2113 = vsel %vm2112, %v2104, %v2109
    %v2114 = vmul.f32 %v2080, %v2103
    %v2115 = vmul.f32 %v2081, %v2113
    %v2117 = vperm.slane %v2038, 0
    %v2119 = vmul.f32 %v2114, %v2117
    %v2120 = vmul.f32 %v2115, %v2117
    %v2122 = vperm.slane %v2039, 0
    %v2124 = vadd.f32 %v2119, %v2122
    %v2125 = vadd.f32 %v2120, %v2122
    %vm2126 = vcmp.ge.f32.partialorder %v2124, 0.0
    %vm2127 = vcmp.ge.f32.partialorder %v2125, 0.0
    %v2128 = vmul.f32 %v2124, 0.01
    %v2129 = vmul.f32 %v2125, 0.01
    %v2130 = vsel %vm2126, %v2124, %v2128
    %v2131 = vsel %vm2127, %v2125, %v2129
    %v2132 = vld [vmem:[#allocation44] sm:$0xff]
    %v2133 = vld [vmem:[#allocation44 + $0x8] sm:$0xff]
    %v2134 = vld [vmem:[#allocation44 + $0x10] sm:$0xff]
    %v2135 = vld [vmem:[#allocation44 + $0x18] sm:$0xff]
    %v2136 = vld [vmem:[#allocation45] sm:$0x1]
    %v2137 = vld [vmem:[#allocation47] sm:$0x1]
    %v2138 = vld [vmem:[#allocation48] sm:$0x1]
    %v2140 = vperm.slane %v2136, 0
    %v2143 = vsel %vm685, %v2130, 0
    %v2146 = vsel %vm685, %v2131, 0
    %2148 = vmatpush.msra.mxu0 0.0
    %2149 = vmatpush.msra.mxu0 0.0
    %2150 = vmatpush.msra.mxu0 0.0
    %2151 = vmatpush.msra.mxu0 0.0
    %2152 = vmatpush.msra.mxu0 0.0
    %2153 = vmatpush.msra.mxu0 0.0
    %2154 = vmatpush.msra.mxu0 0.0
    %2155 = vmatpush.msra.mxu0 0.0
    %2156 = vmatpush.msra.mxu0 0.0
    %2157 = vmatpush.msra.mxu0 0.0
    %2158 = vmatpush.msra.mxu0 0.0
    %2159 = vmatpush.msra.mxu0 0.0
    %2160 = vmatpush.msra.mxu0 %v2135
    %2161 = vmatpush.msra.mxu0 %v2134
    %2162 = vmatpush.msra.mxu0 %v2133
    %2163 = vmatpush.msra.mxu0 %v2132
    %2164 = vmatmul.f32.gmra.mxu0 %v2143
    %v2165 = vpop.f32.mrf.mxu0
    %v2166 = vadd.f32 %v2140, %v2165
    %2167 = vmatmul.f32.gmra.mxu0 %v2146
    %v2168 = vpop.f32.mrf.mxu0
    %v2169 = vadd.f32 %v2140, %v2168
    %2170 = vdwg.mxu0
    %v2171 = vsel %vm685, %v2166, 0.0
    %2172 = vadd.xlane.f32.xlu0 %v2171
    %v2173 = vpop.xlane.xlu0 %2172
    %v2174 = vsel %vm685, %v2169, 0.0
    %2175 = vadd.xlane.f32.xlu0 %v2174
    %v2176 = vpop.xlane.xlu0 %2175
    %v2177 = vmul.f32 %v2173, %v698
    %v2178 = vmul.f32 %v2176, %v698
    %v2179 = vsub.f32 %v2166, %v2177
    %v2180 = vsub.f32 %v2169, %v2178
    %v2181 = vmul.f32 %v2179, %v2179
    %v2182 = vmul.f32 %v2180, %v2180
    %v2183 = vsel %vm685, %v2181, 0.0
    %2184 = vadd.xlane.f32.xlu0 %v2183
    %v2185 = vpop.xlane.xlu0 %2184
    %v2186 = vsel %vm685, %v2182, 0.0
    %2187 = vadd.xlane.f32.xlu0 %v2186
    %v2188 = vpop.xlane.xlu0 %2187
    %v2189 = vmul.f32 %v2185, %v698
    %v2190 = vmul.f32 %v2188, %v698
    %v2191 = vadd.f32 %v2189, 1e-05
    %v2192 = vadd.f32 %v2190, 1e-05
    %v2193 = vrsqrt.pop %v2191
    %v2194 = vmul.f32 %v2193, %v2191
    %v2195 = vmul.f32 %v2194, %v2193
    %v2196 = vmul.f32 0.5, %v2195
    %v2197 = vsub.f32 1.5, %v2196
    %v2198 = vmul.f32 %v2193, %v2197
    %vm2199 = vweird.f32 %v2191
    %vm2200 = vweird.f32 %v2193
    %vm2201 = vmor %vm2199, %vm2200
    %v2202 = vsel %vm2201, %v2193, %v2198
    %v2203 = vrsqrt.pop %v2192
    %v2204 = vmul.f32 %v2203, %v2192
    %v2205 = vmul.f32 %v2204, %v2203
    %v2206 = vmul.f32 0.5, %v2205
    %v2207 = vsub.f32 1.5, %v2206
    %v2208 = vmul.f32 %v2203, %v2207
    %vm2209 = vweird.f32 %v2192
    %vm2210 = vweird.f32 %v2203
    %vm2211 = vmor %vm2209, %vm2210
    %v2212 = vsel %vm2211, %v2203, %v2208
    %v2213 = vmul.f32 %v2179, %v2202
    %v2214 = vmul.f32 %v2180, %v2212
    %v2216 = vperm.slane %v2137, 0
    %v2218 = vmul.f32 %v2213, %v2216
    %v2219 = vmul.f32 %v2214, %v2216
    %v2221 = vperm.slane %v2138, 0
    %v2223 = vadd.f32 %v2218, %v2221
    %v2224 = vadd.f32 %v2219, %v2221
    %vm2225 = vcmp.ge.f32.partialorder %v2223, 0.0
    %vm2226 = vcmp.ge.f32.partialorder %v2224, 0.0
    %v2227 = vmul.f32 %v2223, 0.01
    %v2228 = vmul.f32 %v2224, 0.01
    %v2229 = vsel %vm2225, %v2223, %v2227
    %v2230 = vsel %vm2226, %v2224, %v2228
    %v2231 = vld [vmem:[#allocation50] sm:$0xff]
    %v2232 = vld [vmem:[#allocation50 + $0x8] sm:$0xff]
    %v2233 = vld [vmem:[#allocation50 + $0x10] sm:$0xff]
    %v2234 = vld [vmem:[#allocation50 + $0x18] sm:$0xff]
    %v2235 = vld [vmem:[#allocation51] sm:$0x1]
    %v2236 = vld [vmem:[#allocation53] sm:$0x1]
    %v2237 = vld [vmem:[#allocation54] sm:$0x1]
    %v2239 = vperm.slane %v2235, 0
    %v2242 = vsel %vm685, %v2229, 0
    %v2245 = vsel %vm685, %v2230, 0
    %2247 = vmatpush.msra.mxu0 0.0
    %2248 = vmatpush.msra.mxu0 0.0
    %2249 = vmatpush.msra.mxu0 0.0
    %2250 = vmatpush.msra.mxu0 0.0
    %2251 = vmatpush.msra.mxu0 0.0
    %2252 = vmatpush.msra.mxu0 0.0
    %2253 = vmatpush.msra.mxu0 0.0
    %2254 = vmatpush.msra.mxu0 0.0
    %2255 = vmatpush.msra.mxu0 0.0
    %2256 = vmatpush.msra.mxu0 0.0
    %2257 = vmatpush.msra.mxu0 0.0
    %2258 = vmatpush.msra.mxu0 0.0
    %2259 = vmatpush.msra.mxu0 %v2234
    %2260 = vmatpush.msra.mxu0 %v2233
    %2261 = vmatpush.msra.mxu0 %v2232
    %2262 = vmatpush.msra.mxu0 %v2231
    %2263 = vmatmul.f32.gmra.mxu0 %v2242
    %v2264 = vpop.f32.mrf.mxu0
    %v2265 = vadd.f32 %v2239, %v2264
    %2266 = vmatmul.f32.gmra.mxu0 %v2245
    %v2267 = vpop.f32.mrf.mxu0
    %v2268 = vadd.f32 %v2239, %v2267
    %2269 = vdwg.mxu0
    %v2270 = vsel %vm685, %v2265, 0.0
    %2271 = vadd.xlane.f32.xlu0 %v2270
    %v2272 = vpop.xlane.xlu0 %2271
    %v2273 = vsel %vm685, %v2268, 0.0
    %2274 = vadd.xlane.f32.xlu0 %v2273
    %v2275 = vpop.xlane.xlu0 %2274
    %v2276 = vmul.f32 %v2272, %v698
    %v2277 = vmul.f32 %v2275, %v698
    %v2278 = vsub.f32 %v2265, %v2276
    %v2279 = vsub.f32 %v2268, %v2277
    %v2280 = vmul.f32 %v2278, %v2278
    %v2281 = vmul.f32 %v2279, %v2279
    %v2282 = vsel %vm685, %v2280, 0.0
    %2283 = vadd.xlane.f32.xlu0 %v2282
    %v2284 = vpop.xlane.xlu0 %2283
    %v2285 = vsel %vm685, %v2281, 0.0
    %2286 = vadd.xlane.f32.xlu0 %v2285
    %v2287 = vpop.xlane.xlu0 %2286
    %v2288 = vmul.f32 %v2284, %v698
    %v2289 = vmul.f32 %v2287, %v698
    %v2290 = vadd.f32 %v2288, 1e-05
    %v2291 = vadd.f32 %v2289, 1e-05
    %v2292 = vrsqrt.pop %v2290
    %v2293 = vmul.f32 %v2292, %v2290
    %v2294 = vmul.f32 %v2293, %v2292
    %v2295 = vmul.f32 0.5, %v2294
    %v2296 = vsub.f32 1.5, %v2295
    %v2297 = vmul.f32 %v2292, %v2296
    %vm2298 = vweird.f32 %v2290
    %vm2299 = vweird.f32 %v2292
    %vm2300 = vmor %vm2298, %vm2299
    %v2301 = vsel %vm2300, %v2292, %v2297
    %v2302 = vrsqrt.pop %v2291
    %v2303 = vmul.f32 %v2302, %v2291
    %v2304 = vmul.f32 %v2303, %v2302
    %v2305 = vmul.f32 0.5, %v2304
    %v2306 = vsub.f32 1.5, %v2305
    %v2307 = vmul.f32 %v2302, %v2306
    %vm2308 = vweird.f32 %v2291
    %vm2309 = vweird.f32 %v2302
    %vm2310 = vmor %vm2308, %vm2309
    %v2311 = vsel %vm2310, %v2302, %v2307
    %v2312 = vmul.f32 %v2278, %v2301
    %v2313 = vmul.f32 %v2279, %v2311
    %v2315 = vperm.slane %v2236, 0
    %v2317 = vmul.f32 %v2312, %v2315
    %v2318 = vmul.f32 %v2313, %v2315
    %v2320 = vperm.slane %v2237, 0
    %v2322 = vadd.f32 %v2317, %v2320
    %v2323 = vadd.f32 %v2318, %v2320
    %vm2324 = vcmp.ge.f32.partialorder %v2322, 0.0
    %vm2325 = vcmp.ge.f32.partialorder %v2323, 0.0
    %v2326 = vmul.f32 %v2322, 0.01
    %v2327 = vmul.f32 %v2323, 0.01
    %v2328 = vsel %vm2324, %v2322, %v2326
    %v2329 = vsel %vm2325, %v2323, %v2327
    %v2330 = vld [vmem:[%s71] sm:$0xff]
    %v2331 = vld [vmem:[%s71 + $0x8] sm:$0xff]
    %v2332 = vld [vmem:[%s71 + $0x10] sm:$0xff]
    %v2333 = vld [vmem:[%s71 + $0x18] sm:$0xff]
    %v2334 = vld [vmem:[%s73] sm:$0x1]
    %v2336 = vperm.slane %v2334, 0
    %v2339 = vsel %vm685, %v2328, 0
    %v2342 = vsel %vm685, %v2329, 0
    %2344 = vmatpush.msra.mxu0 0.0
    %2345 = vmatpush.msra.mxu0 0.0
    %2346 = vmatpush.msra.mxu0 0.0
    %2347 = vmatpush.msra.mxu0 0.0
    %2348 = vmatpush.msra.mxu0 0.0
    %2349 = vmatpush.msra.mxu0 0.0
    %2350 = vmatpush.msra.mxu0 0.0
    %2351 = vmatpush.msra.mxu0 0.0
    %2352 = vmatpush.msra.mxu0 0.0
    %2353 = vmatpush.msra.mxu0 0.0
    %2354 = vmatpush.msra.mxu0 0.0
    %2355 = vmatpush.msra.mxu0 0.0
    %2356 = vmatpush.msra.mxu0 %v2333
    %2357 = vmatpush.msra.mxu0 %v2332
    %2358 = vmatpush.msra.mxu0 %v2331
    %2359 = vmatpush.msra.mxu0 %v2330
    %2360 = vmatmul.f32.gmra.mxu0 %v2339
    %v2361 = vpop.f32.mrf.mxu0
    %v2362 = vadd.f32 %v2336, %v2361
    %2363 = vmatmul.f32.gmra.mxu0 %v2342
    %v2364 = vpop.f32.mrf.mxu0
    %v2365 = vadd.f32 %v2336, %v2364
    %2366 = vdwg.mxu0
    %v2367 = vmin.f32 %v2362, 0.0
    %v2368 = vmin.f32 %v2365, 0.0
    %v2369 = vand.u32 2147483647, %v2362
    %v2370 = vand.u32 2147483647, %v2365
    %v2371 = vsub.f32 0.0, %v2369
    %v2372 = vsub.f32 0.0, %v2370
    %v2373 = vmul.f32 %v2371, 1.442695
    %v2374 = vpow.pop %v2373
    %v2375 = vmul.f32 %v2372, 1.442695
    %v2376 = vpow.pop %v2375
    %v2377 = vadd.f32 %v2374, 1.0
    %v2378 = vadd.f32 %v2376, 1.0
    %v2379 = vlog2.pop %v2377
    %v2380 = vmul.f32 %v2379, 0.6931472
    %v2381 = vlog2.pop %v2378
    %v2382 = vmul.f32 %v2381, 0.6931472
    %v2383 = vsub.f32 %v2367, %v2380
    %v2384 = vsub.f32 %v2368, %v2382
    %v2385 = vmul.f32 %v2383, 2.3025851
    %v2386 = vmul.f32 %v2384, 2.3025851
    %v2387 = vmul.f32 %v2385, 1.442695
    %v2388 = vpow.pop %v2387
    %v2389 = vmul.f32 %v2386, 1.442695
    %v2390 = vpow.pop %v2389
    %v2391 = vmul.f32 %v2388, 2.0
    %v2392 = vmul.f32 %v2390, 2.0
    %v2393 = vadd.f32 %v2391, 1e-07
    %v2394 = vadd.f32 %v2392, 1e-07
    %vm2395 = vcmask 523264
    %2396 = vst.msk [vmem:[#allocation56] sm:$0xff] %vm2395, %v2393
    %2397 = vst.msk [vmem:[#allocation56 + $0x8] sm:$0xff] %vm2395, %v2394
    // Predicated region
    $region286: #{tpu_custom_call.1} parent=1 // pred_check
      _
    $region287: #{tpu_custom_call.1} parent=1 // pred_check_branch
      %2399 = sbr.rel (0) target = $region289
    $region288: #{tpu_custom_call.1} parent=1 // pred_region
      %2401 = vsyncadd [#allocation5], 0
      %s2402 = sshll.u32 [#allocation56], 4
      %s2403 = int_to_ptr.vmem [resolvable:$true] %s2402
      %s2404 = sshll.u32 %s75, 4
      %s2405 = int_to_ptr.hbm [resolvable:$true] %s2404
      %2410 = dma.vmem_to_hbm [thread:$0]  %s2403, 256, %s2405, [#allocation5], 128, 128, 8
    $region289: #{tpu_custom_call.1} parent=1 // pred_fallthru
      _
    // Predicated region
    $region290: #{tpu_custom_call.1} parent=1 // pred_check
      _
    $region291: #{tpu_custom_call.1} parent=1 // pred_check_branch
      %2412 = sbr.rel (0) target = $region293
    $region292: #{tpu_custom_call.1} parent=1 // pred_region
      %2414 = vsyncadd [#allocation58], 0
      %s2416 = sshll.u32 [#allocation57], 4
      %s2417 = int_to_ptr.vmem [resolvable:$true] %s2416
      %s2418 = sshll.u32 %s77, 4
      %s2419 = int_to_ptr.hbm [resolvable:$true] %s2418
      %2421 = dma.vmem_to_hbm [thread:$0]  %s2417, 32, %s2419, [#allocation58]
    $region293: #{tpu_custom_call.1} parent=1 // pred_fallthru
      _
    // Predicated region
    $region294: #{tpu_custom_call.1} parent=1 // pred_check
      _
    $region295: #{tpu_custom_call.1} parent=1 // pred_check_branch
      %2423 = sbr.rel (0) target = $region297
    $region296: #{tpu_custom_call.1} parent=1 // pred_region
      %2425 = dma.done [#allocation5], 256
    $region297: #{tpu_custom_call.1} parent=1 // pred_fallthru
      _
    // Predicated region
    $region298: #{tpu_custom_call.1} parent=1 // pred_check
      _
    $region299: #{tpu_custom_call.1} parent=1 // pred_check_branch
      %2427 = sbr.rel (0) target = $region301
    $region300: #{tpu_custom_call.1} parent=1 // pred_region
      %2429 = dma.done [#allocation58], 32
    $region301: #{tpu_custom_call.1} parent=1 // pred_fallthru
      _
    %2430 = vsyncpa [#allocation4], 1
    %2431 = vsyncpa [#allocation7], 1
    %2432 = vsyncpa [#allocation10], 1
    %2433 = vsyncpa [#allocation13], 1
    %2434 = vsyncpa [#allocation16], 1
    %2435 = vsyncpa [#allocation19], 1
    %2436 = vsyncpa [#allocation22], 1
    %2437 = vsyncpa [#allocation25], 1
    %2438 = vsyncpa [#allocation28], 1
    %2439 = vsyncpa [#allocation31], 1
    %2440 = vsyncpa [#allocation34], 1
    %2441 = vsyncpa [#allocation37], 1
    %2442 = vsyncpa [#allocation40], 1
    %2443 = vsyncpa [#allocation43], 1
    %2444 = vsyncpa [#allocation46], 1
    %2445 = vsyncpa [#allocation49], 1
    %2446 = vsyncpa [#allocation52], 1
    %2447 = vsyncpa [#allocation55], 1
    %2448 = vsyncpa [#allocation5], 1
    %2449 = vsyncpa [#allocation58], 1

</llo_original>
